<compile_context>
chip_gen: v5e
topology: v5e:2x2
jax: 0.10.0
libtpu: 0.0.40
codegen_flags: <defaults>
</compile_context>

<pallas_src>
import functools

import jax
import jax.numpy as jnp
from jax.experimental import pallas as pl
from jax.experimental.pallas import tpu as pltpu


# ---------------------------------------------------------------------------
# In-kernel recurrence helper (traced twice, once per layer).
# time_diff is identically zero in the decoder, so c_adj = c - c_st.
# xproj_ref holds, per step, [x@W_all + (W_all_b + U_all_b)  |  W_d_b] (bp, 5H).
# u_comb is the block-diagonal [[U_all, 0], [0, W_d]] of shape (2H, 5H).
# ---------------------------------------------------------------------------
def _recurrence(xproj_ref, u_comb, h0, c0, hs_ref, *, seq, bp, H):
    h, c = h0, c0
    for s in range(seq):                             # static unroll (seq small)
        xp = xproj_ref[s * bp:(s + 1) * bp, :]       # (bp, 5H) static ref view
        hc = jnp.concatenate([h, c], axis=-1)        # (bp, 2H)
        pre = xp + jnp.dot(hc, u_comb, preferred_element_type=jnp.float32)
        c_st = jax.nn.sigmoid(pre[:, 4 * H:5 * H])   # c@W_d + b_d baked in xp
        c_adj = c - c_st                             # (+ c_st * t with t == 0)
        f = jax.nn.sigmoid(pre[:, 0 * H:1 * H])
        i = jax.nn.sigmoid(pre[:, 1 * H:2 * H])
        o = jax.nn.sigmoid(pre[:, 2 * H:3 * H])
        g = jnp.tanh(pre[:, 3 * H:4 * H])
        c = f * c_adj + i * g
        h = o * jnp.tanh(c)
        hs_ref[s * bp:(s + 1) * bp, :] = h           # off the latency chain


# ---------------------------------------------------------------------------
# Fused decoder kernel: layer-1 x-proj -> layer-1 recurrence -> fused
# (out1 @ in2)-proj -> layer-2 recurrence -> lane-dense out-proj.
# All intermediates stay in VMEM.
# ---------------------------------------------------------------------------
def _decoder_kernel(x_ref, hc0_ref, slab_ref, out_ref,
                    xp1_sc, hs1_sc, xp2_sc, hs2_sc,
                    *, seq, bp, D, H1, H2, offs):
    f32 = jnp.float32
    (oW1, obx1, oU1, obd1, oWf, obf, oU2, obd2, oWo2, obo2) = offs
    n = seq * bp

    # ----- Layer 1: batched input projection for all steps at once -----
    W_all1 = slab_ref[oW1:oW1 + D, 0:4 * H1]
    b_x1 = slab_ref[obx1:obx1 + 1, 0:4 * H1]        # W_all_b + U_all_b
    b_d1 = slab_ref[obd1:obd1 + 1, 0:H1]
    xp1_sc[:, 0:4 * H1] = (jnp.dot(x_ref[...], W_all1,
                                   preferred_element_type=f32) + b_x1)
    xp1_sc[:, 4 * H1:5 * H1] = jnp.broadcast_to(b_d1, (n, H1))

    U_comb1 = slab_ref[oU1:oU1 + 2 * H1, 0:5 * H1]
    h0 = hc0_ref[:, 0:H1]
    c0 = hc0_ref[:, H1:2 * H1]
    _recurrence(xp1_sc, U_comb1, h0, c0, hs1_sc, seq=seq, bp=bp, H=H1)

    # ----- Layer 2: layer-1 out-proj fused into layer-2 input-proj -----
    W_fused = slab_ref[oWf:oWf + H1, 0:4 * H2]       # out_w1 @ W_all_w2
    b_fused = slab_ref[obf:obf + 1, 0:4 * H2]
    b_d2 = slab_ref[obd2:obd2 + 1, 0:H2]
    xp2_sc[:, 0:4 * H2] = (jnp.dot(hs1_sc[...], W_fused,
                                   preferred_element_type=f32) + b_fused)
    xp2_sc[:, 4 * H2:5 * H2] = jnp.broadcast_to(b_d2, (n, H2))

    U_comb2 = slab_ref[oU2:oU2 + 2 * H2, 0:5 * H2]
    zeros_h = jnp.zeros((bp, H2), f32)
    _recurrence(xp2_sc, U_comb2, zeros_h, zeros_h, hs2_sc, seq=seq, bp=bp, H=H2)

    # ----- Final output projection: lane-dense (128-padded cols) store -----
    OP = out_ref.shape[1]
    W_out2 = slab_ref[oWo2:oWo2 + H2, 0:OP]
    b_out2 = slab_ref[obo2:obo2 + 1, 0:OP]
    out_ref[...] = (jnp.dot(hs2_sc[...], W_out2,
                            preferred_element_type=f32) + b_out2)
    # TODO(synk): at production sizes cast the batched matmul operands to
    # bfloat16 (keep preferred_element_type=f32 and the recurrence math f32).


# ---------------------------------------------------------------------------
# TLSTM_Decoder wrapper
# ---------------------------------------------------------------------------
def _round_up(a, m):
    return -(-a // m) * m


def tlstm_decoder(x, time_diffs, seq_lens, encoded_h, encoded_c, params1, params2):
    # seq_lens is unused in the PyTorch forward; the PyTorch decoder forward
    # zeroes time_diffs unconditionally, so the kernel is exactly specialized
    # for t == 0 and the t input is dropped.
    del seq_lens, time_diffs
    b, seq, D = x.shape
    H1 = params1["U_all_w"].shape[0]
    H2 = params2["U_all_w"].shape[0]
    O2 = params2["out_w"].shape[1]

    bp = _round_up(max(b, 8), 8)          # sublane-aligned batch
    OP = _round_up(O2, 128)               # lane-dense output width
    f32 = jnp.float32

    # flip time (torch.flip(x, [1])), time-major, pad batch to bp, flatten 2D.
    xt = jnp.transpose(jnp.flip(x, axis=1), (1, 0, 2)).astype(f32)  # (seq,b,D)
    xt = jnp.pad(xt, ((0, 0), (0, bp - b), (0, 0)))
    x2d = xt.reshape(seq * bp, D)

    hc0 = jnp.concatenate([encoded_h, encoded_c], axis=1).astype(f32)
    hc0 = jnp.pad(hc0, ((0, bp - b), (0, 0)))                        # (bp, 2H1)

    # ---- host-side algebraic weight fusion ----
    def blkdiag(u_all, w_d, H):
        top = jnp.concatenate([u_all, jnp.zeros((H, H), f32)], axis=1)
        bot = jnp.concatenate([jnp.zeros((H, 4 * H), f32), w_d], axis=1)
        return jnp.concatenate([top, bot], axis=0)                   # (2H, 5H)

    W_all1 = params1["W_all_w"].astype(f32)
    b_x1 = (params1["W_all_b"] + params1["U_all_b"]).astype(f32)
    U_comb1 = blkdiag(params1["U_all_w"].astype(f32),
                      params1["W_d_w"].astype(f32), H1)
    b_d1 = params1["W_d_b"].astype(f32)

    W_fused = (params1["out_w"] @ params2["W_all_w"]).astype(f32)    # (H1,4H2)
    b_fused = (params1["out_b"] @ params2["W_all_w"]
               + params2["W_all_b"] + params2["U_all_b"]).astype(f32)
    U_comb2 = blkdiag(params2["U_all_w"].astype(f32),
                      params2["W_d_w"].astype(f32), H2)
    b_d2 = params2["W_d_b"].astype(f32)

    W_out2 = jnp.zeros((H2, OP), f32).at[:, :O2].set(params2["out_w"].astype(f32))
    b_out2 = jnp.zeros((1, OP), f32).at[:, :O2].set(params2["out_b"].astype(f32))

    # ---- pack everything into ONE 128-lane-padded, 8-row-aligned slab ----
    mats = [W_all1, b_x1, U_comb1, b_d1, W_fused, b_fused,
            U_comb2, b_d2, W_out2, b_out2]
    lane_w = _round_up(max(m.shape[1] for m in mats), 128)
    offs, row = [], 0
    for m in mats:
        offs.append(row)
        row += _round_up(m.shape[0], 8)
    slab = jnp.zeros((row, lane_w), f32)
    for m, off in zip(mats, offs):
        slab = slab.at[off:off + m.shape[0], :m.shape[1]].set(m)

    kernel = functools.partial(_decoder_kernel, seq=seq, bp=bp, D=D,
                               H1=H1, H2=H2, offs=tuple(offs))

    out2d = pl.pallas_call(
        kernel,
        out_shape=jax.ShapeDtypeStruct((seq * bp, OP), f32),
        scratch_shapes=[pltpu.VMEM((seq * bp, 5 * H1), f32),   # xproj1 (+b_d1)
                        pltpu.VMEM((seq * bp, H1), f32),       # hs1
                        pltpu.VMEM((seq * bp, 5 * H2), f32),   # xproj2 (+b_d2)
                        pltpu.VMEM((seq * bp, H2), f32)],      # hs2
        compiler_params=pltpu.CompilerParams(
            vmem_limit_bytes=32 * 1024 * 1024),
    )(x2d, hc0, slab)

    # (seq*bp, OP) -> (b, seq, O2): drop padded batch rows and padded lanes.
    out = out2d.reshape(seq, bp, OP)[:, :b, :O2]
    return jnp.transpose(out, (1, 0, 2))
    # TODO(synk): for production batch sizes add a "parallel" batch grid axis
    # (dimension_semantics=("parallel",)) so v7x's second TensorCore is used
    # and re-derive VMEM budget / seq*b chunking; at b=2 there is nothing to
    # split.


# ---------------------------------------------------------------------------
# Deterministic parameter construction (mimics nn.Linear shapes)
# ---------------------------------------------------------------------------
def _linear_params(key, in_dim, out_dim):
    kw, kb = jax.random.split(key)
    bound = 1.0 / jnp.sqrt(jnp.float32(in_dim))
    w = jax.random.uniform(kw, (in_dim, out_dim), jnp.float32, -bound, bound)
    b = jax.random.uniform(kb, (1, out_dim), jnp.float32, -bound, bound)
    return w, b


def make_tlstm_params(key, input_dim, hidden_dim, output_dim):
    k1, k2, k3, k4 = jax.random.split(key, 4)
    W_all_w, W_all_b = _linear_params(k1, input_dim, 4 * hidden_dim)
    U_all_w, U_all_b = _linear_params(k2, hidden_dim, 4 * hidden_dim)
    W_d_w, W_d_b = _linear_params(k3, hidden_dim, hidden_dim)
    out_w, out_b = _linear_params(k4, hidden_dim, output_dim)
    return dict(W_all_w=W_all_w, W_all_b=W_all_b,
                U_all_w=U_all_w, U_all_b=U_all_b,
                W_d_w=W_d_w, W_d_b=W_d_b,
                out_w=out_w, out_b=out_b)


# ---------------------------------------------------------------------------
# Pure-JAX reference (for correctness check)
# ---------------------------------------------------------------------------
def _tlstm_layer_ref(x, time_diffs, p, h, c):
    b, seq, _ = x.shape
    H = p["U_all_w"].shape[0]
    outs_all = []
    for s in range(seq):
        xs = x[:, s, :]
        t = time_diffs[:, s][:, None]
        c_st = jax.nn.sigmoid(c @ p["W_d_w"] + p["W_d_b"])
        c_adj = c - c_st + c_st * t
        outs = xs @ p["W_all_w"] + p["W_all_b"] + h @ p["U_all_w"] + p["U_all_b"]
        f = jax.nn.sigmoid(outs[:, :H])
        i = jax.nn.sigmoid(outs[:, H:2 * H])
        o = jax.nn.sigmoid(outs[:, 2 * H:3 * H])
        g = jnp.tanh(outs[:, 3 * H:])
        c = f * c_adj + i * g
        h = o * jnp.tanh(c)
        outs_all.append(h @ p["out_w"] + p["out_b"])
    return jnp.stack(outs_all, axis=1)


def _decoder_ref(x, time_diffs, encoded_h, encoded_c, p1, p2):
    time_diffs = jnp.zeros_like(time_diffs)
    inputs1 = jnp.flip(x, axis=1)
    o1 = _tlstm_layer_ref(inputs1, time_diffs, p1, encoded_h, encoded_c)
    b = x.shape[0]
    H2 = p2["U_all_w"].shape[0]
    o2 = _tlstm_layer_ref(o1, time_diffs, p2,
                          jnp.zeros((b, H2), jnp.float32),
                          jnp.zeros((b, H2), jnp.float32))
    return o2


# ---------------------------------------------------------------------------
if __name__ == "__main__":
    b, seq = 2, 8
    in_channels = 4
    hidden_dim1 = 32
    hidden_dim2 = 32
    output_dim1 = 16
    decoded_dim = 4

    key = jax.random.PRNGKey(0)
    k_x, k_t, k_h, k_c, k_p1, k_p2 = jax.random.split(key, 6)

    x = jax.random.normal(k_x, (b, seq, in_channels), jnp.float32)
    time_diffs = jax.random.uniform(k_t, (b, seq), jnp.float32)
    seq_lens = jnp.full((b,), seq, jnp.int32)
    encoded_h = jax.random.normal(k_h, (b, hidden_dim1), jnp.float32)
    encoded_c = jax.random.normal(k_c, (b, hidden_dim1), jnp.float32)

    params1 = make_tlstm_params(k_p1, in_channels, hidden_dim1, output_dim1)
    params2 = make_tlstm_params(k_p2, output_dim1, hidden_dim2, decoded_dim)

    out = tlstm_decoder(x, time_diffs, seq_lens, encoded_h, encoded_c,
                        params1, params2)
    out = jax.block_until_ready(out)

    ref = _decoder_ref(x, time_diffs, encoded_h, encoded_c, params1, params2)
    assert out.shape == (b, seq, decoded_dim), out.shape
    assert jnp.allclose(out, ref, atol=3e-5, rtol=1e-5), \
        float(jnp.max(jnp.abs(out - ref)))

    print("KERNEL_OK")
</pallas_src>

<mosaic_0001>
module attributes {stable_mosaic.version = 11 : i64} {
  func.func @_decoder_kernel(%arg0: memref<64x4xf32, #tpu.memory_space<vmem>>, %arg1: memref<8x64xf32, #tpu.memory_space<vmem>>, %arg2: memref<240x256xf32, #tpu.memory_space<vmem>>, %arg3: memref<64x128xf32, #tpu.memory_space<vmem>>, %arg4: memref<64x160xf32, #tpu.memory_space<vmem>>, %arg5: memref<64x32xf32, #tpu.memory_space<vmem>>, %arg6: memref<64x160xf32, #tpu.memory_space<vmem>>, %arg7: memref<64x32xf32, #tpu.memory_space<vmem>>) attributes {dimension_semantics = [], scalar_prefetch = 0 : i64, scratch_operands = 4 : i64, tpu.core_type = #tpu.core_type<tc>} {
    %c0 = arith.constant 0 : index
    %c0_0 = arith.constant 0 : index
    %0 = vector.load %arg2[%c0, %c0_0] : memref<240x256xf32, #tpu.memory_space<vmem>>, vector<4x128xf32>
    %c8 = arith.constant 8 : index
    %c0_1 = arith.constant 0 : index
    %1 = vector.load %arg2[%c8, %c0_1] : memref<240x256xf32, #tpu.memory_space<vmem>>, vector<1x128xf32>
    %c80 = arith.constant 80 : index
    %c0_2 = arith.constant 0 : index
    %2 = vector.load %arg2[%c80, %c0_2] : memref<240x256xf32, #tpu.memory_space<vmem>>, vector<1x32xf32>
    %c0_3 = arith.constant 0 : index
    %c0_4 = arith.constant 0 : index
    %3 = vector.load %arg0[%c0_3, %c0_4] : memref<64x4xf32, #tpu.memory_space<vmem>>, vector<64x4xf32>
    %cst = arith.constant dense<0.000000e+00> : vector<64x128xf32>
    %4 = tpu.matmul %3, %0, %cst {dimension_numbers = #tpu.dot_dimension_numbers<[1], [0], [0], [1], [0, 0, 1, 1], [], []>} : vector<64x4xf32>, vector<4x128xf32>, vector<64x128xf32> -> vector<64x128xf32>
    %5 = vector.broadcast %1 : vector<1x128xf32> to vector<64x128xf32>
    %6 = arith.addf %4, %5 : vector<64x128xf32>
    %c0_5 = arith.constant 0 : index
    %c0_6 = arith.constant 0 : index
    %7 = vector.load %arg4[%c0_5, %c0_6] : memref<64x160xf32, #tpu.memory_space<vmem>>, vector<64x128xf32>
    tpu.vector_store %arg4[%c0_5, %c0_6], %6 {strides = array<i32>} : memref<64x160xf32, #tpu.memory_space<vmem>>, vector<64x128xf32>,
    %8 = vector.shape_cast %2 : vector<1x32xf32> to vector<1x32xf32>
    %9 = vector.broadcast %8 : vector<1x32xf32> to vector<64x32xf32>
    %c0_7 = arith.constant 0 : index
    %c128 = arith.constant 128 : index
    %10 = vector.load %arg4[%c0_7, %c128] : memref<64x160xf32, #tpu.memory_space<vmem>>, vector<64x32xf32>
    tpu.vector_store %arg4[%c0_7, %c128], %9 {strides = array<i32>} : memref<64x160xf32, #tpu.memory_space<vmem>>, vector<64x32xf32>,
    %c16 = arith.constant 16 : index
    %c0_8 = arith.constant 0 : index
    %11 = vector.load %arg2[%c16, %c0_8] : memref<240x256xf32, #tpu.memory_space<vmem>>, vector<64x160xf32>
    %c0_9 = arith.constant 0 : index
    %c0_10 = arith.constant 0 : index
    %12 = vector.load %arg1[%c0_9, %c0_10] : memref<8x64xf32, #tpu.memory_space<vmem>>, vector<8x32xf32>
    %c0_11 = arith.constant 0 : index
    %c32 = arith.constant 32 : index
    %13 = vector.load %arg1[%c0_11, %c32] : memref<8x64xf32, #tpu.memory_space<vmem>>, vector<8x32xf32>
    %c0_12 = arith.constant 0 : index
    %c0_13 = arith.constant 0 : index
    %14 = vector.load %arg4[%c0_12, %c0_13] : memref<64x160xf32, #tpu.memory_space<vmem>>, vector<8x160xf32>
    %15 = tpu.concatenate %12, %13 in 1 : vector<8x32xf32>, vector<8x32xf32> -> vector<8x64xf32>
    %cst_14 = arith.constant dense<0.000000e+00> : vector<8x160xf32>
    %16 = tpu.matmul %15, %11, %cst_14 {dimension_numbers = #tpu.dot_dimension_numbers<[1], [0], [0], [1], [0, 0, 1, 1], [], []>} : vector<8x64xf32>, vector<64x160xf32>, vector<8x160xf32> -> vector<8x160xf32>
    %17 = arith.addf %14, %16 : vector<8x160xf32>
    %18 = vector.extract_strided_slice %17 {offsets = [0, 128], sizes = [8, 32], strides = [1, 1]} : vector<8x160xf32> to vector<8x32xf32>
    %19 = arith.negf %18 : vector<8x32xf32>
    %20 = math.exp %19 : vector<8x32xf32>
    %cst_15 = arith.constant 1.000000e+00 : f32
    %21 = vector.broadcast %cst_15 : f32 to vector<8x32xf32>
    %22 = arith.addf %21, %20 : vector<8x32xf32>
    %23 = arith.divf %21, %22 : vector<8x32xf32>
    %24 = arith.subf %13, %23 : vector<8x32xf32>
    %25 = vector.extract_strided_slice %17 {offsets = [0, 0], sizes = [8, 32], strides = [1, 1]} : vector<8x160xf32> to vector<8x32xf32>
    %26 = arith.negf %25 : vector<8x32xf32>
    %27 = math.exp %26 : vector<8x32xf32>
    %cst_16 = arith.constant 1.000000e+00 : f32
    %28 = vector.broadcast %cst_16 : f32 to vector<8x32xf32>
    %29 = arith.addf %28, %27 : vector<8x32xf32>
    %30 = arith.divf %28, %29 : vector<8x32xf32>
    %31 = vector.extract_strided_slice %17 {offsets = [0, 32], sizes = [8, 32], strides = [1, 1]} : vector<8x160xf32> to vector<8x32xf32>
    %32 = arith.negf %31 : vector<8x32xf32>
    %33 = math.exp %32 : vector<8x32xf32>
    %cst_17 = arith.constant 1.000000e+00 : f32
    %34 = vector.broadcast %cst_17 : f32 to vector<8x32xf32>
    %35 = arith.addf %34, %33 : vector<8x32xf32>
    %36 = arith.divf %34, %35 : vector<8x32xf32>
    %37 = vector.extract_strided_slice %17 {offsets = [0, 64], sizes = [8, 32], strides = [1, 1]} : vector<8x160xf32> to vector<8x32xf32>
    %38 = arith.negf %37 : vector<8x32xf32>
    %39 = math.exp %38 : vector<8x32xf32>
    %cst_18 = arith.constant 1.000000e+00 : f32
    %40 = vector.broadcast %cst_18 : f32 to vector<8x32xf32>
    %41 = arith.addf %40, %39 : vector<8x32xf32>
    %42 = arith.divf %40, %41 : vector<8x32xf32>
    %43 = vector.extract_strided_slice %17 {offsets = [0, 96], sizes = [8, 32], strides = [1, 1]} : vector<8x160xf32> to vector<8x32xf32>
    %44 = math.tanh %43 : vector<8x32xf32>
    %45 = arith.mulf %30, %24 : vector<8x32xf32>
    %46 = arith.mulf %36, %44 : vector<8x32xf32>
    %47 = arith.addf %45, %46 : vector<8x32xf32>
    %48 = math.tanh %47 : vector<8x32xf32>
    %49 = arith.mulf %42, %48 : vector<8x32xf32>
    %c0_19 = arith.constant 0 : index
    %c0_20 = arith.constant 0 : index
    %50 = vector.load %arg5[%c0_19, %c0_20] : memref<64x32xf32, #tpu.memory_space<vmem>>, vector<8x32xf32>
    tpu.vector_store %arg5[%c0_19, %c0_20], %49 {strides = array<i32>} : memref<64x32xf32, #tpu.memory_space<vmem>>, vector<8x32xf32>,
    %c8_21 = arith.constant 8 : index
    %c0_22 = arith.constant 0 : index
    %51 = vector.load %arg4[%c8_21, %c0_22] : memref<64x160xf32, #tpu.memory_space<vmem>>, vector<8x160xf32>
    %52 = tpu.concatenate %49, %47 in 1 : vector<8x32xf32>, vector<8x32xf32> -> vector<8x64xf32>
    %cst_23 = arith.constant dense<0.000000e+00> : vector<8x160xf32>
    %53 = tpu.matmul %52, %11, %cst_23 {dimension_numbers = #tpu.dot_dimension_numbers<[1], [0], [0], [1], [0, 0, 1, 1], [], []>} : vector<8x64xf32>, vector<64x160xf32>, vector<8x160xf32> -> vector<8x160xf32>
    %54 = arith.addf %51, %53 : vector<8x160xf32>
    %55 = vector.extract_strided_slice %54 {offsets = [0, 128], sizes = [8, 32], strides = [1, 1]} : vector<8x160xf32> to vector<8x32xf32>
    %56 = arith.negf %55 : vector<8x32xf32>
    %57 = math.exp %56 : vector<8x32xf32>
    %cst_24 = arith.constant 1.000000e+00 : f32
    %58 = vector.broadcast %cst_24 : f32 to vector<8x32xf32>
    %59 = arith.addf %58, %57 : vector<8x32xf32>
    %60 = arith.divf %58, %59 : vector<8x32xf32>
    %61 = arith.subf %47, %60 : vector<8x32xf32>
    %62 = vector.extract_strided_slice %54 {offsets = [0, 0], sizes = [8, 32], strides = [1, 1]} : vector<8x160xf32> to vector<8x32xf32>
    %63 = arith.negf %62 : vector<8x32xf32>
    %64 = math.exp %63 : vector<8x32xf32>
    %cst_25 = arith.constant 1.000000e+00 : f32
    %65 = vector.broadcast %cst_25 : f32 to vector<8x32xf32>
    %66 = arith.addf %65, %64 : vector<8x32xf32>
    %67 = arith.divf %65, %66 : vector<8x32xf32>
    %68 = vector.extract_strided_slice %54 {offsets = [0, 32], sizes = [8, 32], strides = [1, 1]} : vector<8x160xf32> to vector<8x32xf32>
    %69 = arith.negf %68 : vector<8x32xf32>
    %70 = math.exp %69 : vector<8x32xf32>
    %cst_26 = arith.constant 1.000000e+00 : f32
    %71 = vector.broadcast %cst_26 : f32 to vector<8x32xf32>
    %72 = arith.addf %71, %70 : vector<8x32xf32>
    %73 = arith.divf %71, %72 : vector<8x32xf32>
    %74 = vector.extract_strided_slice %54 {offsets = [0, 64], sizes = [8, 32], strides = [1, 1]} : vector<8x160xf32> to vector<8x32xf32>
    %75 = arith.negf %74 : vector<8x32xf32>
    %76 = math.exp %75 : vector<8x32xf32>
    %cst_27 = arith.constant 1.000000e+00 : f32
    %77 = vector.broadcast %cst_27 : f32 to vector<8x32xf32>
    %78 = arith.addf %77, %76 : vector<8x32xf32>
    %79 = arith.divf %77, %78 : vector<8x32xf32>
    %80 = vector.extract_strided_slice %54 {offsets = [0, 96], sizes = [8, 32], strides = [1, 1]} : vector<8x160xf32> to vector<8x32xf32>
    %81 = math.tanh %80 : vector<8x32xf32>
    %82 = arith.mulf %67, %61 : vector<8x32xf32>
    %83 = arith.mulf %73, %81 : vector<8x32xf32>
    %84 = arith.addf %82, %83 : vector<8x32xf32>
    %85 = math.tanh %84 : vector<8x32xf32>
    %86 = arith.mulf %79, %85 : vector<8x32xf32>
    %c8_28 = arith.constant 8 : index
    %c0_29 = arith.constant 0 : index
    %87 = vector.load %arg5[%c8_28, %c0_29] : memref<64x32xf32, #tpu.memory_space<vmem>>, vector<8x32xf32>
    tpu.vector_store %arg5[%c8_28, %c0_29], %86 {strides = array<i32>} : memref<64x32xf32, #tpu.memory_space<vmem>>, vector<8x32xf32>,
    %c16_30 = arith.constant 16 : index
    %c0_31 = arith.constant 0 : index
    %88 = vector.load %arg4[%c16_30, %c0_31] : memref<64x160xf32, #tpu.memory_space<vmem>>, vector<8x160xf32>
    %89 = tpu.concatenate %86, %84 in 1 : vector<8x32xf32>, vector<8x32xf32> -> vector<8x64xf32>
    %cst_32 = arith.constant dense<0.000000e+00> : vector<8x160xf32>
    %90 = tpu.matmul %89, %11, %cst_32 {dimension_numbers = #tpu.dot_dimension_numbers<[1], [0], [0], [1], [0, 0, 1, 1], [], []>} : vector<8x64xf32>, vector<64x160xf32>, vector<8x160xf32> -> vector<8x160xf32>
    %91 = arith.addf %88, %90 : vector<8x160xf32>
    %92 = vector.extract_strided_slice %91 {offsets = [0, 128], sizes = [8, 32], strides = [1, 1]} : vector<8x160xf32> to vector<8x32xf32>
    %93 = arith.negf %92 : vector<8x32xf32>
    %94 = math.exp %93 : vector<8x32xf32>
    %cst_33 = arith.constant 1.000000e+00 : f32
    %95 = vector.broadcast %cst_33 : f32 to vector<8x32xf32>
    %96 = arith.addf %95, %94 : vector<8x32xf32>
    %97 = arith.divf %95, %96 : vector<8x32xf32>
    %98 = arith.subf %84, %97 : vector<8x32xf32>
    %99 = vector.extract_strided_slice %91 {offsets = [0, 0], sizes = [8, 32], strides = [1, 1]} : vector<8x160xf32> to vector<8x32xf32>
    %100 = arith.negf %99 : vector<8x32xf32>
    %101 = math.exp %100 : vector<8x32xf32>
    %cst_34 = arith.constant 1.000000e+00 : f32
    %102 = vector.broadcast %cst_34 : f32 to vector<8x32xf32>
    %103 = arith.addf %102, %101 : vector<8x32xf32>
    %104 = arith.divf %102, %103 : vector<8x32xf32>
    %105 = vector.extract_strided_slice %91 {offsets = [0, 32], sizes = [8, 32], strides = [1, 1]} : vector<8x160xf32> to vector<8x32xf32>
    %106 = arith.negf %105 : vector<8x32xf32>
    %107 = math.exp %106 : vector<8x32xf32>
    %cst_35 = arith.constant 1.000000e+00 : f32
    %108 = vector.broadcast %cst_35 : f32 to vector<8x32xf32>
    %109 = arith.addf %108, %107 : vector<8x32xf32>
    %110 = arith.divf %108, %109 : vector<8x32xf32>
    %111 = vector.extract_strided_slice %91 {offsets = [0, 64], sizes = [8, 32], strides = [1, 1]} : vector<8x160xf32> to vector<8x32xf32>
    %112 = arith.negf %111 : vector<8x32xf32>
    %113 = math.exp %112 : vector<8x32xf32>
    %cst_36 = arith.constant 1.000000e+00 : f32
    %114 = vector.broadcast %cst_36 : f32 to vector<8x32xf32>
    %115 = arith.addf %114, %113 : vector<8x32xf32>
    %116 = arith.divf %114, %115 : vector<8x32xf32>
    %117 = vector.extract_strided_slice %91 {offsets = [0, 96], sizes = [8, 32], strides = [1, 1]} : vector<8x160xf32> to vector<8x32xf32>
    %118 = math.tanh %117 : vector<8x32xf32>
    %119 = arith.mulf %104, %98 : vector<8x32xf32>
    %120 = arith.mulf %110, %118 : vector<8x32xf32>
    %121 = arith.addf %119, %120 : vector<8x32xf32>
    %122 = math.tanh %121 : vector<8x32xf32>
    %123 = arith.mulf %116, %122 : vector<8x32xf32>
    %c16_37 = arith.constant 16 : index
    %c0_38 = arith.constant 0 : index
    %124 = vector.load %arg5[%c16_37, %c0_38] : memref<64x32xf32, #tpu.memory_space<vmem>>, vector<8x32xf32>
    tpu.vector_store %arg5[%c16_37, %c0_38], %123 {strides = array<i32>} : memref<64x32xf32, #tpu.memory_space<vmem>>, vector<8x32xf32>,
    %c24 = arith.constant 24 : index
    %c0_39 = arith.constant 0 : index
    %125 = vector.load %arg4[%c24, %c0_39] : memref<64x160xf32, #tpu.memory_space<vmem>>, vector<8x160xf32>
    %126 = tpu.concatenate %123, %121 in 1 : vector<8x32xf32>, vector<8x32xf32> -> vector<8x64xf32>
    %cst_40 = arith.constant dense<0.000000e+00> : vector<8x160xf32>
    %127 = tpu.matmul %126, %11, %cst_40 {dimension_numbers = #tpu.dot_dimension_numbers<[1], [0], [0], [1], [0, 0, 1, 1], [], []>} : vector<8x64xf32>, vector<64x160xf32>, vector<8x160xf32> -> vector<8x160xf32>
    %128 = arith.addf %125, %127 : vector<8x160xf32>
    %129 = vector.extract_strided_slice %128 {offsets = [0, 128], sizes = [8, 32], strides = [1, 1]} : vector<8x160xf32> to vector<8x32xf32>
    %130 = arith.negf %129 : vector<8x32xf32>
    %131 = math.exp %130 : vector<8x32xf32>
    %cst_41 = arith.constant 1.000000e+00 : f32
    %132 = vector.broadcast %cst_41 : f32 to vector<8x32xf32>
    %133 = arith.addf %132, %131 : vector<8x32xf32>
    %134 = arith.divf %132, %133 : vector<8x32xf32>
    %135 = arith.subf %121, %134 : vector<8x32xf32>
    %136 = vector.extract_strided_slice %128 {offsets = [0, 0], sizes = [8, 32], strides = [1, 1]} : vector<8x160xf32> to vector<8x32xf32>
    %137 = arith.negf %136 : vector<8x32xf32>
    %138 = math.exp %137 : vector<8x32xf32>
    %cst_42 = arith.constant 1.000000e+00 : f32
    %139 = vector.broadcast %cst_42 : f32 to vector<8x32xf32>
    %140 = arith.addf %139, %138 : vector<8x32xf32>
    %141 = arith.divf %139, %140 : vector<8x32xf32>
    %142 = vector.extract_strided_slice %128 {offsets = [0, 32], sizes = [8, 32], strides = [1, 1]} : vector<8x160xf32> to vector<8x32xf32>
    %143 = arith.negf %142 : vector<8x32xf32>
    %144 = math.exp %143 : vector<8x32xf32>
    %cst_43 = arith.constant 1.000000e+00 : f32
    %145 = vector.broadcast %cst_43 : f32 to vector<8x32xf32>
    %146 = arith.addf %145, %144 : vector<8x32xf32>
    %147 = arith.divf %145, %146 : vector<8x32xf32>
    %148 = vector.extract_strided_slice %128 {offsets = [0, 64], sizes = [8, 32], strides = [1, 1]} : vector<8x160xf32> to vector<8x32xf32>
    %149 = arith.negf %148 : vector<8x32xf32>
    %150 = math.exp %149 : vector<8x32xf32>
    %cst_44 = arith.constant 1.000000e+00 : f32
    %151 = vector.broadcast %cst_44 : f32 to vector<8x32xf32>
    %152 = arith.addf %151, %150 : vector<8x32xf32>
    %153 = arith.divf %151, %152 : vector<8x32xf32>
    %154 = vector.extract_strided_slice %128 {offsets = [0, 96], sizes = [8, 32], strides = [1, 1]} : vector<8x160xf32> to vector<8x32xf32>
    %155 = math.tanh %154 : vector<8x32xf32>
    %156 = arith.mulf %141, %135 : vector<8x32xf32>
    %157 = arith.mulf %147, %155 : vector<8x32xf32>
    %158 = arith.addf %156, %157 : vector<8x32xf32>
    %159 = math.tanh %158 : vector<8x32xf32>
    %160 = arith.mulf %153, %159 : vector<8x32xf32>
    %c24_45 = arith.constant 24 : index
    %c0_46 = arith.constant 0 : index
    %161 = vector.load %arg5[%c24_45, %c0_46] : memref<64x32xf32, #tpu.memory_space<vmem>>, vector<8x32xf32>
    tpu.vector_store %arg5[%c24_45, %c0_46], %160 {strides = array<i32>} : memref<64x32xf32, #tpu.memory_space<vmem>>, vector<8x32xf32>,
    %c32_47 = arith.constant 32 : index
    %c0_48 = arith.constant 0 : index
    %162 = vector.load %arg4[%c32_47, %c0_48] : memref<64x160xf32, #tpu.memory_space<vmem>>, vector<8x160xf32>
    %163 = tpu.concatenate %160, %158 in 1 : vector<8x32xf32>, vector<8x32xf32> -> vector<8x64xf32>
    %cst_49 = arith.constant dense<0.000000e+00> : vector<8x160xf32>
    %164 = tpu.matmul %163, %11, %cst_49 {dimension_numbers = #tpu.dot_dimension_numbers<[1], [0], [0], [1], [0, 0, 1, 1], [], []>} : vector<8x64xf32>, vector<64x160xf32>, vector<8x160xf32> -> vector<8x160xf32>
    %165 = arith.addf %162, %164 : vector<8x160xf32>
    %166 = vector.extract_strided_slice %165 {offsets = [0, 128], sizes = [8, 32], strides = [1, 1]} : vector<8x160xf32> to vector<8x32xf32>
    %167 = arith.negf %166 : vector<8x32xf32>
    %168 = math.exp %167 : vector<8x32xf32>
    %cst_50 = arith.constant 1.000000e+00 : f32
    %169 = vector.broadcast %cst_50 : f32 to vector<8x32xf32>
    %170 = arith.addf %169, %168 : vector<8x32xf32>
    %171 = arith.divf %169, %170 : vector<8x32xf32>
    %172 = arith.subf %158, %171 : vector<8x32xf32>
    %173 = vector.extract_strided_slice %165 {offsets = [0, 0], sizes = [8, 32], strides = [1, 1]} : vector<8x160xf32> to vector<8x32xf32>
    %174 = arith.negf %173 : vector<8x32xf32>
    %175 = math.exp %174 : vector<8x32xf32>
    %cst_51 = arith.constant 1.000000e+00 : f32
    %176 = vector.broadcast %cst_51 : f32 to vector<8x32xf32>
    %177 = arith.addf %176, %175 : vector<8x32xf32>
    %178 = arith.divf %176, %177 : vector<8x32xf32>
    %179 = vector.extract_strided_slice %165 {offsets = [0, 32], sizes = [8, 32], strides = [1, 1]} : vector<8x160xf32> to vector<8x32xf32>
    %180 = arith.negf %179 : vector<8x32xf32>
    %181 = math.exp %180 : vector<8x32xf32>
    %cst_52 = arith.constant 1.000000e+00 : f32
    %182 = vector.broadcast %cst_52 : f32 to vector<8x32xf32>
    %183 = arith.addf %182, %181 : vector<8x32xf32>
    %184 = arith.divf %182, %183 : vector<8x32xf32>
    %185 = vector.extract_strided_slice %165 {offsets = [0, 64], sizes = [8, 32], strides = [1, 1]} : vector<8x160xf32> to vector<8x32xf32>
    %186 = arith.negf %185 : vector<8x32xf32>
    %187 = math.exp %186 : vector<8x32xf32>
    %cst_53 = arith.constant 1.000000e+00 : f32
    %188 = vector.broadcast %cst_53 : f32 to vector<8x32xf32>
    %189 = arith.addf %188, %187 : vector<8x32xf32>
    %190 = arith.divf %188, %189 : vector<8x32xf32>
    %191 = vector.extract_strided_slice %165 {offsets = [0, 96], sizes = [8, 32], strides = [1, 1]} : vector<8x160xf32> to vector<8x32xf32>
    %192 = math.tanh %191 : vector<8x32xf32>
    %193 = arith.mulf %178, %172 : vector<8x32xf32>
    %194 = arith.mulf %184, %192 : vector<8x32xf32>
    %195 = arith.addf %193, %194 : vector<8x32xf32>
    %196 = math.tanh %195 : vector<8x32xf32>
    %197 = arith.mulf %190, %196 : vector<8x32xf32>
    %c32_54 = arith.constant 32 : index
    %c0_55 = arith.constant 0 : index
    %198 = vector.load %arg5[%c32_54, %c0_55] : memref<64x32xf32, #tpu.memory_space<vmem>>, vector<8x32xf32>
    tpu.vector_store %arg5[%c32_54, %c0_55], %197 {strides = array<i32>} : memref<64x32xf32, #tpu.memory_space<vmem>>, vector<8x32xf32>,
    %c40 = arith.constant 40 : index
    %c0_56 = arith.constant 0 : index
    %199 = vector.load %arg4[%c40, %c0_56] : memref<64x160xf32, #tpu.memory_space<vmem>>, vector<8x160xf32>
    %200 = tpu.concatenate %197, %195 in 1 : vector<8x32xf32>, vector<8x32xf32> -> vector<8x64xf32>
    %cst_57 = arith.constant dense<0.000000e+00> : vector<8x160xf32>
    %201 = tpu.matmul %200, %11, %cst_57 {dimension_numbers = #tpu.dot_dimension_numbers<[1], [0], [0], [1], [0, 0, 1, 1], [], []>} : vector<8x64xf32>, vector<64x160xf32>, vector<8x160xf32> -> vector<8x160xf32>
    %202 = arith.addf %199, %201 : vector<8x160xf32>
    %203 = vector.extract_strided_slice %202 {offsets = [0, 128], sizes = [8, 32], strides = [1, 1]} : vector<8x160xf32> to vector<8x32xf32>
    %204 = arith.negf %203 : vector<8x32xf32>
    %205 = math.exp %204 : vector<8x32xf32>
    %cst_58 = arith.constant 1.000000e+00 : f32
    %206 = vector.broadcast %cst_58 : f32 to vector<8x32xf32>
    %207 = arith.addf %206, %205 : vector<8x32xf32>
    %208 = arith.divf %206, %207 : vector<8x32xf32>
    %209 = arith.subf %195, %208 : vector<8x32xf32>
    %210 = vector.extract_strided_slice %202 {offsets = [0, 0], sizes = [8, 32], strides = [1, 1]} : vector<8x160xf32> to vector<8x32xf32>
    %211 = arith.negf %210 : vector<8x32xf32>
    %212 = math.exp %211 : vector<8x32xf32>
    %cst_59 = arith.constant 1.000000e+00 : f32
    %213 = vector.broadcast %cst_59 : f32 to vector<8x32xf32>
    %214 = arith.addf %213, %212 : vector<8x32xf32>
    %215 = arith.divf %213, %214 : vector<8x32xf32>
    %216 = vector.extract_strided_slice %202 {offsets = [0, 32], sizes = [8, 32], strides = [1, 1]} : vector<8x160xf32> to vector<8x32xf32>
    %217 = arith.negf %216 : vector<8x32xf32>
    %218 = math.exp %217 : vector<8x32xf32>
    %cst_60 = arith.constant 1.000000e+00 : f32
    %219 = vector.broadcast %cst_60 : f32 to vector<8x32xf32>
    %220 = arith.addf %219, %218 : vector<8x32xf32>
    %221 = arith.divf %219, %220 : vector<8x32xf32>
    %222 = vector.extract_strided_slice %202 {offsets = [0, 64], sizes = [8, 32], strides = [1, 1]} : vector<8x160xf32> to vector<8x32xf32>
    %223 = arith.negf %222 : vector<8x32xf32>
    %224 = math.exp %223 : vector<8x32xf32>
    %cst_61 = arith.constant 1.000000e+00 : f32
    %225 = vector.broadcast %cst_61 : f32 to vector<8x32xf32>
    %226 = arith.addf %225, %224 : vector<8x32xf32>
    %227 = arith.divf %225, %226 : vector<8x32xf32>
    %228 = vector.extract_strided_slice %202 {offsets = [0, 96], sizes = [8, 32], strides = [1, 1]} : vector<8x160xf32> to vector<8x32xf32>
    %229 = math.tanh %228 : vector<8x32xf32>
    %230 = arith.mulf %215, %209 : vector<8x32xf32>
    %231 = arith.mulf %221, %229 : vector<8x32xf32>
    %232 = arith.addf %230, %231 : vector<8x32xf32>
    %233 = math.tanh %232 : vector<8x32xf32>
    %234 = arith.mulf %227, %233 : vector<8x32xf32>
    %c40_62 = arith.constant 40 : index
    %c0_63 = arith.constant 0 : index
    %235 = vector.load %arg5[%c40_62, %c0_63] : memref<64x32xf32, #tpu.memory_space<vmem>>, vector<8x32xf32>
    tpu.vector_store %arg5[%c40_62, %c0_63], %234 {strides = array<i32>} : memref<64x32xf32, #tpu.memory_space<vmem>>, vector<8x32xf32>,
    %c48 = arith.constant 48 : index
    %c0_64 = arith.constant 0 : index
    %236 = vector.load %arg4[%c48, %c0_64] : memref<64x160xf32, #tpu.memory_space<vmem>>, vector<8x160xf32>
    %237 = tpu.concatenate %234, %232 in 1 : vector<8x32xf32>, vector<8x32xf32> -> vector<8x64xf32>
    %cst_65 = arith.constant dense<0.000000e+00> : vector<8x160xf32>
    %238 = tpu.matmul %237, %11, %cst_65 {dimension_numbers = #tpu.dot_dimension_numbers<[1], [0], [0], [1], [0, 0, 1, 1], [], []>} : vector<8x64xf32>, vector<64x160xf32>, vector<8x160xf32> -> vector<8x160xf32>
    %239 = arith.addf %236, %238 : vector<8x160xf32>
    %240 = vector.extract_strided_slice %239 {offsets = [0, 128], sizes = [8, 32], strides = [1, 1]} : vector<8x160xf32> to vector<8x32xf32>
    %241 = arith.negf %240 : vector<8x32xf32>
    %242 = math.exp %241 : vector<8x32xf32>
    %cst_66 = arith.constant 1.000000e+00 : f32
    %243 = vector.broadcast %cst_66 : f32 to vector<8x32xf32>
    %244 = arith.addf %243, %242 : vector<8x32xf32>
    %245 = arith.divf %243, %244 : vector<8x32xf32>
    %246 = arith.subf %232, %245 : vector<8x32xf32>
    %247 = vector.extract_strided_slice %239 {offsets = [0, 0], sizes = [8, 32], strides = [1, 1]} : vector<8x160xf32> to vector<8x32xf32>
    %248 = arith.negf %247 : vector<8x32xf32>
    %249 = math.exp %248 : vector<8x32xf32>
    %cst_67 = arith.constant 1.000000e+00 : f32
    %250 = vector.broadcast %cst_67 : f32 to vector<8x32xf32>
    %251 = arith.addf %250, %249 : vector<8x32xf32>
    %252 = arith.divf %250, %251 : vector<8x32xf32>
    %253 = vector.extract_strided_slice %239 {offsets = [0, 32], sizes = [8, 32], strides = [1, 1]} : vector<8x160xf32> to vector<8x32xf32>
    %254 = arith.negf %253 : vector<8x32xf32>
    %255 = math.exp %254 : vector<8x32xf32>
    %cst_68 = arith.constant 1.000000e+00 : f32
    %256 = vector.broadcast %cst_68 : f32 to vector<8x32xf32>
    %257 = arith.addf %256, %255 : vector<8x32xf32>
    %258 = arith.divf %256, %257 : vector<8x32xf32>
    %259 = vector.extract_strided_slice %239 {offsets = [0, 64], sizes = [8, 32], strides = [1, 1]} : vector<8x160xf32> to vector<8x32xf32>
    %260 = arith.negf %259 : vector<8x32xf32>
    %261 = math.exp %260 : vector<8x32xf32>
    %cst_69 = arith.constant 1.000000e+00 : f32
    %262 = vector.broadcast %cst_69 : f32 to vector<8x32xf32>
    %263 = arith.addf %262, %261 : vector<8x32xf32>
    %264 = arith.divf %262, %263 : vector<8x32xf32>
    %265 = vector.extract_strided_slice %239 {offsets = [0, 96], sizes = [8, 32], strides = [1, 1]} : vector<8x160xf32> to vector<8x32xf32>
    %266 = math.tanh %265 : vector<8x32xf32>
    %267 = arith.mulf %252, %246 : vector<8x32xf32>
    %268 = arith.mulf %258, %266 : vector<8x32xf32>
    %269 = arith.addf %267, %268 : vector<8x32xf32>
    %270 = math.tanh %269 : vector<8x32xf32>
    %271 = arith.mulf %264, %270 : vector<8x32xf32>
    %c48_70 = arith.constant 48 : index
    %c0_71 = arith.constant 0 : index
    %272 = vector.load %arg5[%c48_70, %c0_71] : memref<64x32xf32, #tpu.memory_space<vmem>>, vector<8x32xf32>
    tpu.vector_store %arg5[%c48_70, %c0_71], %271 {strides = array<i32>} : memref<64x32xf32, #tpu.memory_space<vmem>>, vector<8x32xf32>,
    %c56 = arith.constant 56 : index
    %c0_72 = arith.constant 0 : index
    %273 = vector.load %arg4[%c56, %c0_72] : memref<64x160xf32, #tpu.memory_space<vmem>>, vector<8x160xf32>
    %274 = tpu.concatenate %271, %269 in 1 : vector<8x32xf32>, vector<8x32xf32> -> vector<8x64xf32>
    %cst_73 = arith.constant dense<0.000000e+00> : vector<8x160xf32>
    %275 = tpu.matmul %274, %11, %cst_73 {dimension_numbers = #tpu.dot_dimension_numbers<[1], [0], [0], [1], [0, 0, 1, 1], [], []>} : vector<8x64xf32>, vector<64x160xf32>, vector<8x160xf32> -> vector<8x160xf32>
    %276 = arith.addf %273, %275 : vector<8x160xf32>
    %277 = vector.extract_strided_slice %276 {offsets = [0, 128], sizes = [8, 32], strides = [1, 1]} : vector<8x160xf32> to vector<8x32xf32>
    %278 = arith.negf %277 : vector<8x32xf32>
    %279 = math.exp %278 : vector<8x32xf32>
    %cst_74 = arith.constant 1.000000e+00 : f32
    %280 = vector.broadcast %cst_74 : f32 to vector<8x32xf32>
    %281 = arith.addf %280, %279 : vector<8x32xf32>
    %282 = arith.divf %280, %281 : vector<8x32xf32>
    %283 = arith.subf %269, %282 : vector<8x32xf32>
    %284 = vector.extract_strided_slice %276 {offsets = [0, 0], sizes = [8, 32], strides = [1, 1]} : vector<8x160xf32> to vector<8x32xf32>
    %285 = arith.negf %284 : vector<8x32xf32>
    %286 = math.exp %285 : vector<8x32xf32>
    %cst_75 = arith.constant 1.000000e+00 : f32
    %287 = vector.broadcast %cst_75 : f32 to vector<8x32xf32>
    %288 = arith.addf %287, %286 : vector<8x32xf32>
    %289 = arith.divf %287, %288 : vector<8x32xf32>
    %290 = vector.extract_strided_slice %276 {offsets = [0, 32], sizes = [8, 32], strides = [1, 1]} : vector<8x160xf32> to vector<8x32xf32>
    %291 = arith.negf %290 : vector<8x32xf32>
    %292 = math.exp %291 : vector<8x32xf32>
    %cst_76 = arith.constant 1.000000e+00 : f32
    %293 = vector.broadcast %cst_76 : f32 to vector<8x32xf32>
    %294 = arith.addf %293, %292 : vector<8x32xf32>
    %295 = arith.divf %293, %294 : vector<8x32xf32>
    %296 = vector.extract_strided_slice %276 {offsets = [0, 64], sizes = [8, 32], strides = [1, 1]} : vector<8x160xf32> to vector<8x32xf32>
    %297 = arith.negf %296 : vector<8x32xf32>
    %298 = math.exp %297 : vector<8x32xf32>
    %cst_77 = arith.constant 1.000000e+00 : f32
    %299 = vector.broadcast %cst_77 : f32 to vector<8x32xf32>
    %300 = arith.addf %299, %298 : vector<8x32xf32>
    %301 = arith.divf %299, %300 : vector<8x32xf32>
    %302 = vector.extract_strided_slice %276 {offsets = [0, 96], sizes = [8, 32], strides = [1, 1]} : vector<8x160xf32> to vector<8x32xf32>
    %303 = math.tanh %302 : vector<8x32xf32>
    %304 = arith.mulf %289, %283 : vector<8x32xf32>
    %305 = arith.mulf %295, %303 : vector<8x32xf32>
    %306 = arith.addf %304, %305 : vector<8x32xf32>
    %307 = math.tanh %306 : vector<8x32xf32>
    %308 = arith.mulf %301, %307 : vector<8x32xf32>
    %c56_78 = arith.constant 56 : index
    %c0_79 = arith.constant 0 : index
    %309 = vector.load %arg5[%c56_78, %c0_79] : memref<64x32xf32, #tpu.memory_space<vmem>>, vector<8x32xf32>
    tpu.vector_store %arg5[%c56_78, %c0_79], %308 {strides = array<i32>} : memref<64x32xf32, #tpu.memory_space<vmem>>, vector<8x32xf32>,
    %c88 = arith.constant 88 : index
    %c0_80 = arith.constant 0 : index
    %310 = vector.load %arg2[%c88, %c0_80] : memref<240x256xf32, #tpu.memory_space<vmem>>, vector<32x128xf32>
    %c120 = arith.constant 120 : index
    %c0_81 = arith.constant 0 : index
    %311 = vector.load %arg2[%c120, %c0_81] : memref<240x256xf32, #tpu.memory_space<vmem>>, vector<1x128xf32>
    %c192 = arith.constant 192 : index
    %c0_82 = arith.constant 0 : index
    %312 = vector.load %arg2[%c192, %c0_82] : memref<240x256xf32, #tpu.memory_space<vmem>>, vector<1x32xf32>
    %c0_83 = arith.constant 0 : index
    %c0_84 = arith.constant 0 : index
    %313 = vector.load %arg5[%c0_83, %c0_84] : memref<64x32xf32, #tpu.memory_space<vmem>>, vector<64x32xf32>
    %cst_85 = arith.constant dense<0.000000e+00> : vector<64x128xf32>
    %314 = tpu.matmul %313, %310, %cst_85 {dimension_numbers = #tpu.dot_dimension_numbers<[1], [0], [0], [1], [0, 0, 1, 1], [], []>} : vector<64x32xf32>, vector<32x128xf32>, vector<64x128xf32> -> vector<64x128xf32>
    %315 = vector.broadcast %311 : vector<1x128xf32> to vector<64x128xf32>
    %316 = arith.addf %314, %315 : vector<64x128xf32>
    %c0_86 = arith.constant 0 : index
    %c0_87 = arith.constant 0 : index
    %317 = vector.load %arg6[%c0_86, %c0_87] : memref<64x160xf32, #tpu.memory_space<vmem>>, vector<64x128xf32>
    tpu.vector_store %arg6[%c0_86, %c0_87], %316 {strides = array<i32>} : memref<64x160xf32, #tpu.memory_space<vmem>>, vector<64x128xf32>,
    %318 = vector.shape_cast %312 : vector<1x32xf32> to vector<1x32xf32>
    %319 = vector.broadcast %318 : vector<1x32xf32> to vector<64x32xf32>
    %c0_88 = arith.constant 0 : index
    %c128_89 = arith.constant 128 : index
    %320 = vector.load %arg6[%c0_88, %c128_89] : memref<64x160xf32, #tpu.memory_space<vmem>>, vector<64x32xf32>
    tpu.vector_store %arg6[%c0_88, %c128_89], %319 {strides = array<i32>} : memref<64x160xf32, #tpu.memory_space<vmem>>, vector<64x32xf32>,
    %c128_90 = arith.constant 128 : index
    %c0_91 = arith.constant 0 : index
    %321 = vector.load %arg2[%c128_90, %c0_91] : memref<240x256xf32, #tpu.memory_space<vmem>>, vector<64x160xf32>
    %cst_92 = arith.constant 0.000000e+00 : f32
    %322 = vector.broadcast %cst_92 : f32 to vector<8x32xf32>
    %c0_93 = arith.constant 0 : index
    %c0_94 = arith.constant 0 : index
    %323 = vector.load %arg6[%c0_93, %c0_94] : memref<64x160xf32, #tpu.memory_space<vmem>>, vector<8x160xf32>
    %324 = tpu.concatenate %322, %322 in 1 : vector<8x32xf32>, vector<8x32xf32> -> vector<8x64xf32>
    %cst_95 = arith.constant dense<0.000000e+00> : vector<8x160xf32>
    %325 = tpu.matmul %324, %321, %cst_95 {dimension_numbers = #tpu.dot_dimension_numbers<[1], [0], [0], [1], [0, 0, 1, 1], [], []>} : vector<8x64xf32>, vector<64x160xf32>, vector<8x160xf32> -> vector<8x160xf32>
    %326 = arith.addf %323, %325 : vector<8x160xf32>
    %327 = vector.extract_strided_slice %326 {offsets = [0, 128], sizes = [8, 32], strides = [1, 1]} : vector<8x160xf32> to vector<8x32xf32>
    %328 = arith.negf %327 : vector<8x32xf32>
    %329 = math.exp %328 : vector<8x32xf32>
    %cst_96 = arith.constant 1.000000e+00 : f32
    %330 = vector.broadcast %cst_96 : f32 to vector<8x32xf32>
    %331 = arith.addf %330, %329 : vector<8x32xf32>
    %332 = arith.divf %330, %331 : vector<8x32xf32>
    %333 = arith.subf %322, %332 : vector<8x32xf32>
    %334 = vector.extract_strided_slice %326 {offsets = [0, 0], sizes = [8, 32], strides = [1, 1]} : vector<8x160xf32> to vector<8x32xf32>
    %335 = arith.negf %334 : vector<8x32xf32>
    %336 = math.exp %335 : vector<8x32xf32>
    %cst_97 = arith.constant 1.000000e+00 : f32
    %337 = vector.broadcast %cst_97 : f32 to vector<8x32xf32>
    %338 = arith.addf %337, %336 : vector<8x32xf32>
    %339 = arith.divf %337, %338 : vector<8x32xf32>
    %340 = vector.extract_strided_slice %326 {offsets = [0, 32], sizes = [8, 32], strides = [1, 1]} : vector<8x160xf32> to vector<8x32xf32>
    %341 = arith.negf %340 : vector<8x32xf32>
    %342 = math.exp %341 : vector<8x32xf32>
    %cst_98 = arith.constant 1.000000e+00 : f32
    %343 = vector.broadcast %cst_98 : f32 to vector<8x32xf32>
    %344 = arith.addf %343, %342 : vector<8x32xf32>
    %345 = arith.divf %343, %344 : vector<8x32xf32>
    %346 = vector.extract_strided_slice %326 {offsets = [0, 64], sizes = [8, 32], strides = [1, 1]} : vector<8x160xf32> to vector<8x32xf32>
    %347 = arith.negf %346 : vector<8x32xf32>
    %348 = math.exp %347 : vector<8x32xf32>
    %cst_99 = arith.constant 1.000000e+00 : f32
    %349 = vector.broadcast %cst_99 : f32 to vector<8x32xf32>
    %350 = arith.addf %349, %348 : vector<8x32xf32>
    %351 = arith.divf %349, %350 : vector<8x32xf32>
    %352 = vector.extract_strided_slice %326 {offsets = [0, 96], sizes = [8, 32], strides = [1, 1]} : vector<8x160xf32> to vector<8x32xf32>
    %353 = math.tanh %352 : vector<8x32xf32>
    %354 = arith.mulf %339, %333 : vector<8x32xf32>
    %355 = arith.mulf %345, %353 : vector<8x32xf32>
    %356 = arith.addf %354, %355 : vector<8x32xf32>
    %357 = math.tanh %356 : vector<8x32xf32>
    %358 = arith.mulf %351, %357 : vector<8x32xf32>
    %c0_100 = arith.constant 0 : index
    %c0_101 = arith.constant 0 : index
    %359 = vector.load %arg7[%c0_100, %c0_101] : memref<64x32xf32, #tpu.memory_space<vmem>>, vector<8x32xf32>
    tpu.vector_store %arg7[%c0_100, %c0_101], %358 {strides = array<i32>} : memref<64x32xf32, #tpu.memory_space<vmem>>, vector<8x32xf32>,
    %c8_102 = arith.constant 8 : index
    %c0_103 = arith.constant 0 : index
    %360 = vector.load %arg6[%c8_102, %c0_103] : memref<64x160xf32, #tpu.memory_space<vmem>>, vector<8x160xf32>
    %361 = tpu.concatenate %358, %356 in 1 : vector<8x32xf32>, vector<8x32xf32> -> vector<8x64xf32>
    %cst_104 = arith.constant dense<0.000000e+00> : vector<8x160xf32>
    %362 = tpu.matmul %361, %321, %cst_104 {dimension_numbers = #tpu.dot_dimension_numbers<[1], [0], [0], [1], [0, 0, 1, 1], [], []>} : vector<8x64xf32>, vector<64x160xf32>, vector<8x160xf32> -> vector<8x160xf32>
    %363 = arith.addf %360, %362 : vector<8x160xf32>
    %364 = vector.extract_strided_slice %363 {offsets = [0, 128], sizes = [8, 32], strides = [1, 1]} : vector<8x160xf32> to vector<8x32xf32>
    %365 = arith.negf %364 : vector<8x32xf32>
    %366 = math.exp %365 : vector<8x32xf32>
    %cst_105 = arith.constant 1.000000e+00 : f32
    %367 = vector.broadcast %cst_105 : f32 to vector<8x32xf32>
    %368 = arith.addf %367, %366 : vector<8x32xf32>
    %369 = arith.divf %367, %368 : vector<8x32xf32>
    %370 = arith.subf %356, %369 : vector<8x32xf32>
    %371 = vector.extract_strided_slice %363 {offsets = [0, 0], sizes = [8, 32], strides = [1, 1]} : vector<8x160xf32> to vector<8x32xf32>
    %372 = arith.negf %371 : vector<8x32xf32>
    %373 = math.exp %372 : vector<8x32xf32>
    %cst_106 = arith.constant 1.000000e+00 : f32
    %374 = vector.broadcast %cst_106 : f32 to vector<8x32xf32>
    %375 = arith.addf %374, %373 : vector<8x32xf32>
    %376 = arith.divf %374, %375 : vector<8x32xf32>
    %377 = vector.extract_strided_slice %363 {offsets = [0, 32], sizes = [8, 32], strides = [1, 1]} : vector<8x160xf32> to vector<8x32xf32>
    %378 = arith.negf %377 : vector<8x32xf32>
    %379 = math.exp %378 : vector<8x32xf32>
    %cst_107 = arith.constant 1.000000e+00 : f32
    %380 = vector.broadcast %cst_107 : f32 to vector<8x32xf32>
    %381 = arith.addf %380, %379 : vector<8x32xf32>
    %382 = arith.divf %380, %381 : vector<8x32xf32>
    %383 = vector.extract_strided_slice %363 {offsets = [0, 64], sizes = [8, 32], strides = [1, 1]} : vector<8x160xf32> to vector<8x32xf32>
    %384 = arith.negf %383 : vector<8x32xf32>
    %385 = math.exp %384 : vector<8x32xf32>
    %cst_108 = arith.constant 1.000000e+00 : f32
    %386 = vector.broadcast %cst_108 : f32 to vector<8x32xf32>
    %387 = arith.addf %386, %385 : vector<8x32xf32>
    %388 = arith.divf %386, %387 : vector<8x32xf32>
    %389 = vector.extract_strided_slice %363 {offsets = [0, 96], sizes = [8, 32], strides = [1, 1]} : vector<8x160xf32> to vector<8x32xf32>
    %390 = math.tanh %389 : vector<8x32xf32>
    %391 = arith.mulf %376, %370 : vector<8x32xf32>
    %392 = arith.mulf %382, %390 : vector<8x32xf32>
    %393 = arith.addf %391, %392 : vector<8x32xf32>
    %394 = math.tanh %393 : vector<8x32xf32>
    %395 = arith.mulf %388, %394 : vector<8x32xf32>
    %c8_109 = arith.constant 8 : index
    %c0_110 = arith.constant 0 : index
    %396 = vector.load %arg7[%c8_109, %c0_110] : memref<64x32xf32, #tpu.memory_space<vmem>>, vector<8x32xf32>
    tpu.vector_store %arg7[%c8_109, %c0_110], %395 {strides = array<i32>} : memref<64x32xf32, #tpu.memory_space<vmem>>, vector<8x32xf32>,
    %c16_111 = arith.constant 16 : index
    %c0_112 = arith.constant 0 : index
    %397 = vector.load %arg6[%c16_111, %c0_112] : memref<64x160xf32, #tpu.memory_space<vmem>>, vector<8x160xf32>
    %398 = tpu.concatenate %395, %393 in 1 : vector<8x32xf32>, vector<8x32xf32> -> vector<8x64xf32>
    %cst_113 = arith.constant dense<0.000000e+00> : vector<8x160xf32>
    %399 = tpu.matmul %398, %321, %cst_113 {dimension_numbers = #tpu.dot_dimension_numbers<[1], [0], [0], [1], [0, 0, 1, 1], [], []>} : vector<8x64xf32>, vector<64x160xf32>, vector<8x160xf32> -> vector<8x160xf32>
    %400 = arith.addf %397, %399 : vector<8x160xf32>
    %401 = vector.extract_strided_slice %400 {offsets = [0, 128], sizes = [8, 32], strides = [1, 1]} : vector<8x160xf32> to vector<8x32xf32>
    %402 = arith.negf %401 : vector<8x32xf32>
    %403 = math.exp %402 : vector<8x32xf32>
    %cst_114 = arith.constant 1.000000e+00 : f32
    %404 = vector.broadcast %cst_114 : f32 to vector<8x32xf32>
    %405 = arith.addf %404, %403 : vector<8x32xf32>
    %406 = arith.divf %404, %405 : vector<8x32xf32>
    %407 = arith.subf %393, %406 : vector<8x32xf32>
    %408 = vector.extract_strided_slice %400 {offsets = [0, 0], sizes = [8, 32], strides = [1, 1]} : vector<8x160xf32> to vector<8x32xf32>
    %409 = arith.negf %408 : vector<8x32xf32>
    %410 = math.exp %409 : vector<8x32xf32>
    %cst_115 = arith.constant 1.000000e+00 : f32
    %411 = vector.broadcast %cst_115 : f32 to vector<8x32xf32>
    %412 = arith.addf %411, %410 : vector<8x32xf32>
    %413 = arith.divf %411, %412 : vector<8x32xf32>
    %414 = vector.extract_strided_slice %400 {offsets = [0, 32], sizes = [8, 32], strides = [1, 1]} : vector<8x160xf32> to vector<8x32xf32>
    %415 = arith.negf %414 : vector<8x32xf32>
    %416 = math.exp %415 : vector<8x32xf32>
    %cst_116 = arith.constant 1.000000e+00 : f32
    %417 = vector.broadcast %cst_116 : f32 to vector<8x32xf32>
    %418 = arith.addf %417, %416 : vector<8x32xf32>
    %419 = arith.divf %417, %418 : vector<8x32xf32>
    %420 = vector.extract_strided_slice %400 {offsets = [0, 64], sizes = [8, 32], strides = [1, 1]} : vector<8x160xf32> to vector<8x32xf32>
    %421 = arith.negf %420 : vector<8x32xf32>
    %422 = math.exp %421 : vector<8x32xf32>
    %cst_117 = arith.constant 1.000000e+00 : f32
    %423 = vector.broadcast %cst_117 : f32 to vector<8x32xf32>
    %424 = arith.addf %423, %422 : vector<8x32xf32>
    %425 = arith.divf %423, %424 : vector<8x32xf32>
    %426 = vector.extract_strided_slice %400 {offsets = [0, 96], sizes = [8, 32], strides = [1, 1]} : vector<8x160xf32> to vector<8x32xf32>
    %427 = math.tanh %426 : vector<8x32xf32>
    %428 = arith.mulf %413, %407 : vector<8x32xf32>
    %429 = arith.mulf %419, %427 : vector<8x32xf32>
    %430 = arith.addf %428, %429 : vector<8x32xf32>
    %431 = math.tanh %430 : vector<8x32xf32>
    %432 = arith.mulf %425, %431 : vector<8x32xf32>
    %c16_118 = arith.constant 16 : index
    %c0_119 = arith.constant 0 : index
    %433 = vector.load %arg7[%c16_118, %c0_119] : memref<64x32xf32, #tpu.memory_space<vmem>>, vector<8x32xf32>
    tpu.vector_store %arg7[%c16_118, %c0_119], %432 {strides = array<i32>} : memref<64x32xf32, #tpu.memory_space<vmem>>, vector<8x32xf32>,
    %c24_120 = arith.constant 24 : index
    %c0_121 = arith.constant 0 : index
    %434 = vector.load %arg6[%c24_120, %c0_121] : memref<64x160xf32, #tpu.memory_space<vmem>>, vector<8x160xf32>
    %435 = tpu.concatenate %432, %430 in 1 : vector<8x32xf32>, vector<8x32xf32> -> vector<8x64xf32>
    %cst_122 = arith.constant dense<0.000000e+00> : vector<8x160xf32>
    %436 = tpu.matmul %435, %321, %cst_122 {dimension_numbers = #tpu.dot_dimension_numbers<[1], [0], [0], [1], [0, 0, 1, 1], [], []>} : vector<8x64xf32>, vector<64x160xf32>, vector<8x160xf32> -> vector<8x160xf32>
    %437 = arith.addf %434, %436 : vector<8x160xf32>
    %438 = vector.extract_strided_slice %437 {offsets = [0, 128], sizes = [8, 32], strides = [1, 1]} : vector<8x160xf32> to vector<8x32xf32>
    %439 = arith.negf %438 : vector<8x32xf32>
    %440 = math.exp %439 : vector<8x32xf32>
    %cst_123 = arith.constant 1.000000e+00 : f32
    %441 = vector.broadcast %cst_123 : f32 to vector<8x32xf32>
    %442 = arith.addf %441, %440 : vector<8x32xf32>
    %443 = arith.divf %441, %442 : vector<8x32xf32>
    %444 = arith.subf %430, %443 : vector<8x32xf32>
    %445 = vector.extract_strided_slice %437 {offsets = [0, 0], sizes = [8, 32], strides = [1, 1]} : vector<8x160xf32> to vector<8x32xf32>
    %446 = arith.negf %445 : vector<8x32xf32>
    %447 = math.exp %446 : vector<8x32xf32>
    %cst_124 = arith.constant 1.000000e+00 : f32
    %448 = vector.broadcast %cst_124 : f32 to vector<8x32xf32>
    %449 = arith.addf %448, %447 : vector<8x32xf32>
    %450 = arith.divf %448, %449 : vector<8x32xf32>
    %451 = vector.extract_strided_slice %437 {offsets = [0, 32], sizes = [8, 32], strides = [1, 1]} : vector<8x160xf32> to vector<8x32xf32>
    %452 = arith.negf %451 : vector<8x32xf32>
    %453 = math.exp %452 : vector<8x32xf32>
    %cst_125 = arith.constant 1.000000e+00 : f32
    %454 = vector.broadcast %cst_125 : f32 to vector<8x32xf32>
    %455 = arith.addf %454, %453 : vector<8x32xf32>
    %456 = arith.divf %454, %455 : vector<8x32xf32>
    %457 = vector.extract_strided_slice %437 {offsets = [0, 64], sizes = [8, 32], strides = [1, 1]} : vector<8x160xf32> to vector<8x32xf32>
    %458 = arith.negf %457 : vector<8x32xf32>
    %459 = math.exp %458 : vector<8x32xf32>
    %cst_126 = arith.constant 1.000000e+00 : f32
    %460 = vector.broadcast %cst_126 : f32 to vector<8x32xf32>
    %461 = arith.addf %460, %459 : vector<8x32xf32>
    %462 = arith.divf %460, %461 : vector<8x32xf32>
    %463 = vector.extract_strided_slice %437 {offsets = [0, 96], sizes = [8, 32], strides = [1, 1]} : vector<8x160xf32> to vector<8x32xf32>
    %464 = math.tanh %463 : vector<8x32xf32>
    %465 = arith.mulf %450, %444 : vector<8x32xf32>
    %466 = arith.mulf %456, %464 : vector<8x32xf32>
    %467 = arith.addf %465, %466 : vector<8x32xf32>
    %468 = math.tanh %467 : vector<8x32xf32>
    %469 = arith.mulf %462, %468 : vector<8x32xf32>
    %c24_127 = arith.constant 24 : index
    %c0_128 = arith.constant 0 : index
    %470 = vector.load %arg7[%c24_127, %c0_128] : memref<64x32xf32, #tpu.memory_space<vmem>>, vector<8x32xf32>
    tpu.vector_store %arg7[%c24_127, %c0_128], %469 {strides = array<i32>} : memref<64x32xf32, #tpu.memory_space<vmem>>, vector<8x32xf32>,
    %c32_129 = arith.constant 32 : index
    %c0_130 = arith.constant 0 : index
    %471 = vector.load %arg6[%c32_129, %c0_130] : memref<64x160xf32, #tpu.memory_space<vmem>>, vector<8x160xf32>
    %472 = tpu.concatenate %469, %467 in 1 : vector<8x32xf32>, vector<8x32xf32> -> vector<8x64xf32>
    %cst_131 = arith.constant dense<0.000000e+00> : vector<8x160xf32>
    %473 = tpu.matmul %472, %321, %cst_131 {dimension_numbers = #tpu.dot_dimension_numbers<[1], [0], [0], [1], [0, 0, 1, 1], [], []>} : vector<8x64xf32>, vector<64x160xf32>, vector<8x160xf32> -> vector<8x160xf32>
    %474 = arith.addf %471, %473 : vector<8x160xf32>
    %475 = vector.extract_strided_slice %474 {offsets = [0, 128], sizes = [8, 32], strides = [1, 1]} : vector<8x160xf32> to vector<8x32xf32>
    %476 = arith.negf %475 : vector<8x32xf32>
    %477 = math.exp %476 : vector<8x32xf32>
    %cst_132 = arith.constant 1.000000e+00 : f32
    %478 = vector.broadcast %cst_132 : f32 to vector<8x32xf32>
    %479 = arith.addf %478, %477 : vector<8x32xf32>
    %480 = arith.divf %478, %479 : vector<8x32xf32>
    %481 = arith.subf %467, %480 : vector<8x32xf32>
    %482 = vector.extract_strided_slice %474 {offsets = [0, 0], sizes = [8, 32], strides = [1, 1]} : vector<8x160xf32> to vector<8x32xf32>
    %483 = arith.negf %482 : vector<8x32xf32>
    %484 = math.exp %483 : vector<8x32xf32>
    %cst_133 = arith.constant 1.000000e+00 : f32
    %485 = vector.broadcast %cst_133 : f32 to vector<8x32xf32>
    %486 = arith.addf %485, %484 : vector<8x32xf32>
    %487 = arith.divf %485, %486 : vector<8x32xf32>
    %488 = vector.extract_strided_slice %474 {offsets = [0, 32], sizes = [8, 32], strides = [1, 1]} : vector<8x160xf32> to vector<8x32xf32>
    %489 = arith.negf %488 : vector<8x32xf32>
    %490 = math.exp %489 : vector<8x32xf32>
    %cst_134 = arith.constant 1.000000e+00 : f32
    %491 = vector.broadcast %cst_134 : f32 to vector<8x32xf32>
    %492 = arith.addf %491, %490 : vector<8x32xf32>
    %493 = arith.divf %491, %492 : vector<8x32xf32>
    %494 = vector.extract_strided_slice %474 {offsets = [0, 64], sizes = [8, 32], strides = [1, 1]} : vector<8x160xf32> to vector<8x32xf32>
    %495 = arith.negf %494 : vector<8x32xf32>
    %496 = math.exp %495 : vector<8x32xf32>
    %cst_135 = arith.constant 1.000000e+00 : f32
    %497 = vector.broadcast %cst_135 : f32 to vector<8x32xf32>
    %498 = arith.addf %497, %496 : vector<8x32xf32>
    %499 = arith.divf %497, %498 : vector<8x32xf32>
    %500 = vector.extract_strided_slice %474 {offsets = [0, 96], sizes = [8, 32], strides = [1, 1]} : vector<8x160xf32> to vector<8x32xf32>
    %501 = math.tanh %500 : vector<8x32xf32>
    %502 = arith.mulf %487, %481 : vector<8x32xf32>
    %503 = arith.mulf %493, %501 : vector<8x32xf32>
    %504 = arith.addf %502, %503 : vector<8x32xf32>
    %505 = math.tanh %504 : vector<8x32xf32>
    %506 = arith.mulf %499, %505 : vector<8x32xf32>
    %c32_136 = arith.constant 32 : index
    %c0_137 = arith.constant 0 : index
    %507 = vector.load %arg7[%c32_136, %c0_137] : memref<64x32xf32, #tpu.memory_space<vmem>>, vector<8x32xf32>
    tpu.vector_store %arg7[%c32_136, %c0_137], %506 {strides = array<i32>} : memref<64x32xf32, #tpu.memory_space<vmem>>, vector<8x32xf32>,
    %c40_138 = arith.constant 40 : index
    %c0_139 = arith.constant 0 : index
    %508 = vector.load %arg6[%c40_138, %c0_139] : memref<64x160xf32, #tpu.memory_space<vmem>>, vector<8x160xf32>
    %509 = tpu.concatenate %506, %504 in 1 : vector<8x32xf32>, vector<8x32xf32> -> vector<8x64xf32>
    %cst_140 = arith.constant dense<0.000000e+00> : vector<8x160xf32>
    %510 = tpu.matmul %509, %321, %cst_140 {dimension_numbers = #tpu.dot_dimension_numbers<[1], [0], [0], [1], [0, 0, 1, 1], [], []>} : vector<8x64xf32>, vector<64x160xf32>, vector<8x160xf32> -> vector<8x160xf32>
    %511 = arith.addf %508, %510 : vector<8x160xf32>
    %512 = vector.extract_strided_slice %511 {offsets = [0, 128], sizes = [8, 32], strides = [1, 1]} : vector<8x160xf32> to vector<8x32xf32>
    %513 = arith.negf %512 : vector<8x32xf32>
    %514 = math.exp %513 : vector<8x32xf32>
    %cst_141 = arith.constant 1.000000e+00 : f32
    %515 = vector.broadcast %cst_141 : f32 to vector<8x32xf32>
    %516 = arith.addf %515, %514 : vector<8x32xf32>
    %517 = arith.divf %515, %516 : vector<8x32xf32>
    %518 = arith.subf %504, %517 : vector<8x32xf32>
    %519 = vector.extract_strided_slice %511 {offsets = [0, 0], sizes = [8, 32], strides = [1, 1]} : vector<8x160xf32> to vector<8x32xf32>
    %520 = arith.negf %519 : vector<8x32xf32>
    %521 = math.exp %520 : vector<8x32xf32>
    %cst_142 = arith.constant 1.000000e+00 : f32
    %522 = vector.broadcast %cst_142 : f32 to vector<8x32xf32>
    %523 = arith.addf %522, %521 : vector<8x32xf32>
    %524 = arith.divf %522, %523 : vector<8x32xf32>
    %525 = vector.extract_strided_slice %511 {offsets = [0, 32], sizes = [8, 32], strides = [1, 1]} : vector<8x160xf32> to vector<8x32xf32>
    %526 = arith.negf %525 : vector<8x32xf32>
    %527 = math.exp %526 : vector<8x32xf32>
    %cst_143 = arith.constant 1.000000e+00 : f32
    %528 = vector.broadcast %cst_143 : f32 to vector<8x32xf32>
    %529 = arith.addf %528, %527 : vector<8x32xf32>
    %530 = arith.divf %528, %529 : vector<8x32xf32>
    %531 = vector.extract_strided_slice %511 {offsets = [0, 64], sizes = [8, 32], strides = [1, 1]} : vector<8x160xf32> to vector<8x32xf32>
    %532 = arith.negf %531 : vector<8x32xf32>
    %533 = math.exp %532 : vector<8x32xf32>
    %cst_144 = arith.constant 1.000000e+00 : f32
    %534 = vector.broadcast %cst_144 : f32 to vector<8x32xf32>
    %535 = arith.addf %534, %533 : vector<8x32xf32>
    %536 = arith.divf %534, %535 : vector<8x32xf32>
    %537 = vector.extract_strided_slice %511 {offsets = [0, 96], sizes = [8, 32], strides = [1, 1]} : vector<8x160xf32> to vector<8x32xf32>
    %538 = math.tanh %537 : vector<8x32xf32>
    %539 = arith.mulf %524, %518 : vector<8x32xf32>
    %540 = arith.mulf %530, %538 : vector<8x32xf32>
    %541 = arith.addf %539, %540 : vector<8x32xf32>
    %542 = math.tanh %541 : vector<8x32xf32>
    %543 = arith.mulf %536, %542 : vector<8x32xf32>
    %c40_145 = arith.constant 40 : index
    %c0_146 = arith.constant 0 : index
    %544 = vector.load %arg7[%c40_145, %c0_146] : memref<64x32xf32, #tpu.memory_space<vmem>>, vector<8x32xf32>
    tpu.vector_store %arg7[%c40_145, %c0_146], %543 {strides = array<i32>} : memref<64x32xf32, #tpu.memory_space<vmem>>, vector<8x32xf32>,
    %c48_147 = arith.constant 48 : index
    %c0_148 = arith.constant 0 : index
    %545 = vector.load %arg6[%c48_147, %c0_148] : memref<64x160xf32, #tpu.memory_space<vmem>>, vector<8x160xf32>
    %546 = tpu.concatenate %543, %541 in 1 : vector<8x32xf32>, vector<8x32xf32> -> vector<8x64xf32>
    %cst_149 = arith.constant dense<0.000000e+00> : vector<8x160xf32>
    %547 = tpu.matmul %546, %321, %cst_149 {dimension_numbers = #tpu.dot_dimension_numbers<[1], [0], [0], [1], [0, 0, 1, 1], [], []>} : vector<8x64xf32>, vector<64x160xf32>, vector<8x160xf32> -> vector<8x160xf32>
    %548 = arith.addf %545, %547 : vector<8x160xf32>
    %549 = vector.extract_strided_slice %548 {offsets = [0, 128], sizes = [8, 32], strides = [1, 1]} : vector<8x160xf32> to vector<8x32xf32>
    %550 = arith.negf %549 : vector<8x32xf32>
    %551 = math.exp %550 : vector<8x32xf32>
    %cst_150 = arith.constant 1.000000e+00 : f32
    %552 = vector.broadcast %cst_150 : f32 to vector<8x32xf32>
    %553 = arith.addf %552, %551 : vector<8x32xf32>
    %554 = arith.divf %552, %553 : vector<8x32xf32>
    %555 = arith.subf %541, %554 : vector<8x32xf32>
    %556 = vector.extract_strided_slice %548 {offsets = [0, 0], sizes = [8, 32], strides = [1, 1]} : vector<8x160xf32> to vector<8x32xf32>
    %557 = arith.negf %556 : vector<8x32xf32>
    %558 = math.exp %557 : vector<8x32xf32>
    %cst_151 = arith.constant 1.000000e+00 : f32
    %559 = vector.broadcast %cst_151 : f32 to vector<8x32xf32>
    %560 = arith.addf %559, %558 : vector<8x32xf32>
    %561 = arith.divf %559, %560 : vector<8x32xf32>
    %562 = vector.extract_strided_slice %548 {offsets = [0, 32], sizes = [8, 32], strides = [1, 1]} : vector<8x160xf32> to vector<8x32xf32>
    %563 = arith.negf %562 : vector<8x32xf32>
    %564 = math.exp %563 : vector<8x32xf32>
    %cst_152 = arith.constant 1.000000e+00 : f32
    %565 = vector.broadcast %cst_152 : f32 to vector<8x32xf32>
    %566 = arith.addf %565, %564 : vector<8x32xf32>
    %567 = arith.divf %565, %566 : vector<8x32xf32>
    %568 = vector.extract_strided_slice %548 {offsets = [0, 64], sizes = [8, 32], strides = [1, 1]} : vector<8x160xf32> to vector<8x32xf32>
    %569 = arith.negf %568 : vector<8x32xf32>
    %570 = math.exp %569 : vector<8x32xf32>
    %cst_153 = arith.constant 1.000000e+00 : f32
    %571 = vector.broadcast %cst_153 : f32 to vector<8x32xf32>
    %572 = arith.addf %571, %570 : vector<8x32xf32>
    %573 = arith.divf %571, %572 : vector<8x32xf32>
    %574 = vector.extract_strided_slice %548 {offsets = [0, 96], sizes = [8, 32], strides = [1, 1]} : vector<8x160xf32> to vector<8x32xf32>
    %575 = math.tanh %574 : vector<8x32xf32>
    %576 = arith.mulf %561, %555 : vector<8x32xf32>
    %577 = arith.mulf %567, %575 : vector<8x32xf32>
    %578 = arith.addf %576, %577 : vector<8x32xf32>
    %579 = math.tanh %578 : vector<8x32xf32>
    %580 = arith.mulf %573, %579 : vector<8x32xf32>
    %c48_154 = arith.constant 48 : index
    %c0_155 = arith.constant 0 : index
    %581 = vector.load %arg7[%c48_154, %c0_155] : memref<64x32xf32, #tpu.memory_space<vmem>>, vector<8x32xf32>
    tpu.vector_store %arg7[%c48_154, %c0_155], %580 {strides = array<i32>} : memref<64x32xf32, #tpu.memory_space<vmem>>, vector<8x32xf32>,
    %c56_156 = arith.constant 56 : index
    %c0_157 = arith.constant 0 : index
    %582 = vector.load %arg6[%c56_156, %c0_157] : memref<64x160xf32, #tpu.memory_space<vmem>>, vector<8x160xf32>
    %583 = tpu.concatenate %580, %578 in 1 : vector<8x32xf32>, vector<8x32xf32> -> vector<8x64xf32>
    %cst_158 = arith.constant dense<0.000000e+00> : vector<8x160xf32>
    %584 = tpu.matmul %583, %321, %cst_158 {dimension_numbers = #tpu.dot_dimension_numbers<[1], [0], [0], [1], [0, 0, 1, 1], [], []>} : vector<8x64xf32>, vector<64x160xf32>, vector<8x160xf32> -> vector<8x160xf32>
    %585 = arith.addf %582, %584 : vector<8x160xf32>
    %586 = vector.extract_strided_slice %585 {offsets = [0, 128], sizes = [8, 32], strides = [1, 1]} : vector<8x160xf32> to vector<8x32xf32>
    %587 = arith.negf %586 : vector<8x32xf32>
    %588 = math.exp %587 : vector<8x32xf32>
    %cst_159 = arith.constant 1.000000e+00 : f32
    %589 = vector.broadcast %cst_159 : f32 to vector<8x32xf32>
    %590 = arith.addf %589, %588 : vector<8x32xf32>
    %591 = arith.divf %589, %590 : vector<8x32xf32>
    %592 = arith.subf %578, %591 : vector<8x32xf32>
    %593 = vector.extract_strided_slice %585 {offsets = [0, 0], sizes = [8, 32], strides = [1, 1]} : vector<8x160xf32> to vector<8x32xf32>
    %594 = arith.negf %593 : vector<8x32xf32>
    %595 = math.exp %594 : vector<8x32xf32>
    %cst_160 = arith.constant 1.000000e+00 : f32
    %596 = vector.broadcast %cst_160 : f32 to vector<8x32xf32>
    %597 = arith.addf %596, %595 : vector<8x32xf32>
    %598 = arith.divf %596, %597 : vector<8x32xf32>
    %599 = vector.extract_strided_slice %585 {offsets = [0, 32], sizes = [8, 32], strides = [1, 1]} : vector<8x160xf32> to vector<8x32xf32>
    %600 = arith.negf %599 : vector<8x32xf32>
    %601 = math.exp %600 : vector<8x32xf32>
    %cst_161 = arith.constant 1.000000e+00 : f32
    %602 = vector.broadcast %cst_161 : f32 to vector<8x32xf32>
    %603 = arith.addf %602, %601 : vector<8x32xf32>
    %604 = arith.divf %602, %603 : vector<8x32xf32>
    %605 = vector.extract_strided_slice %585 {offsets = [0, 64], sizes = [8, 32], strides = [1, 1]} : vector<8x160xf32> to vector<8x32xf32>
    %606 = arith.negf %605 : vector<8x32xf32>
    %607 = math.exp %606 : vector<8x32xf32>
    %cst_162 = arith.constant 1.000000e+00 : f32
    %608 = vector.broadcast %cst_162 : f32 to vector<8x32xf32>
    %609 = arith.addf %608, %607 : vector<8x32xf32>
    %610 = arith.divf %608, %609 : vector<8x32xf32>
    %611 = vector.extract_strided_slice %585 {offsets = [0, 96], sizes = [8, 32], strides = [1, 1]} : vector<8x160xf32> to vector<8x32xf32>
    %612 = math.tanh %611 : vector<8x32xf32>
    %613 = arith.mulf %598, %592 : vector<8x32xf32>
    %614 = arith.mulf %604, %612 : vector<8x32xf32>
    %615 = arith.addf %613, %614 : vector<8x32xf32>
    %616 = math.tanh %615 : vector<8x32xf32>
    %617 = arith.mulf %610, %616 : vector<8x32xf32>
    %c56_163 = arith.constant 56 : index
    %c0_164 = arith.constant 0 : index
    %618 = vector.load %arg7[%c56_163, %c0_164] : memref<64x32xf32, #tpu.memory_space<vmem>>, vector<8x32xf32>
    tpu.vector_store %arg7[%c56_163, %c0_164], %617 {strides = array<i32>} : memref<64x32xf32, #tpu.memory_space<vmem>>, vector<8x32xf32>,
    %c200 = arith.constant 200 : index
    %c0_165 = arith.constant 0 : index
    %619 = vector.load %arg2[%c200, %c0_165] : memref<240x256xf32, #tpu.memory_space<vmem>>, vector<32x128xf32>
    %c232 = arith.constant 232 : index
    %c0_166 = arith.constant 0 : index
    %620 = vector.load %arg2[%c232, %c0_166] : memref<240x256xf32, #tpu.memory_space<vmem>>, vector<1x128xf32>
    %c0_167 = arith.constant 0 : index
    %c0_168 = arith.constant 0 : index
    %621 = vector.load %arg7[%c0_167, %c0_168] : memref<64x32xf32, #tpu.memory_space<vmem>>, vector<64x32xf32>
    %cst_169 = arith.constant dense<0.000000e+00> : vector<64x128xf32>
    %622 = tpu.matmul %621, %619, %cst_169 {dimension_numbers = #tpu.dot_dimension_numbers<[1], [0], [0], [1], [0, 0, 1, 1], [], []>} : vector<64x32xf32>, vector<32x128xf32>, vector<64x128xf32> -> vector<64x128xf32>
    %623 = vector.broadcast %620 : vector<1x128xf32> to vector<64x128xf32>
    %624 = arith.addf %622, %623 : vector<64x128xf32>
    %c0_170 = arith.constant 0 : index
    %c0_171 = arith.constant 0 : index
    %625 = vector.load %arg3[%c0_170, %c0_171] : memref<64x128xf32, #tpu.memory_space<vmem>>, vector<64x128xf32>
    tpu.vector_store %arg3[%c0_170, %c0_171], %624 {strides = array<i32>} : memref<64x128xf32, #tpu.memory_space<vmem>>, vector<64x128xf32>,
    return
  }
}

</mosaic_0001>

<llo_original>
// kernel: tpu_custom_call.1
$region0: #{tpu_custom_call.1}
  #allocation0 [shape = 'u32[]', space=smem, size = 0x4, offset = 0x4, fixed_abs, tag = 'smem constant byte address 0x4 - core index']
  #allocation1 [shape = 'u32[72,128]{1,0:T(1,128)}', space=vmem, size = 0x9000, scoped, tag = 'internal scratch']
  #allocation2 [shape = 'f32[64,160]{1,0:T(8,128)}', space=vmem, size = 0x10000, scoped, tag = 'scratch operand']
  #allocation3 [shape = 'f32[64,32]{1,0:T(8,128)}', space=vmem, size = 0x8000, scoped, tag = 'scratch operand']
  #allocation4 [shape = 'f32[64,160]{1,0:T(8,128)}', space=vmem, size = 0x10000, scoped, tag = 'scratch operand']
  #allocation5 [shape = 'f32[64,32]{1,0:T(8,128)}', space=vmem, size = 0x8000, scoped, tag = 'scratch operand']
  %s0 = inlined_call_operand.vmem [shape: f32[64,4], index: 0, kind: input, shape index: {}]
  %s1 = inlined_call_operand.vmem [shape: f32[8,64], index: 1, kind: input, shape index: {}]
  %s2 = inlined_call_operand.hbm [shape: f32[240,256], index: 2, kind: input, shape index: {}]
  %s3 = inlined_call_operand.hbm [shape: f32[64,128], index: 3, kind: output, shape index: {}]
  %s4 = sld [smem:[#allocation0]]
  $region26: #{tpu_custom_call.1} parent=0
    _
  %s6 = ssub.s32 1, %s4
  %s7 = scalar_select 0, %s6, %s4
  $region1: #{tpu_custom_call.1} parent=0
    #allocation6 [shape = 'u8[245760]{0}', space=vmem, size = 0x3c000, scoped, tag = 'input window, operand 2, single buffered']
    #allocation7 [shape = 's32[1]{0}', space=sflag, size = 0x4, scoped, tag = 'scoped memory for tpu_custom_call.1']
    #allocation8 [shape = 's32[1]{0}', space=sflag, size = 0x4, scoped, tag = 'scoped memory for tpu_custom_call.1']
    #allocation9 [shape = 'u8[32768]{0}', space=vmem, size = 0x8000, scoped, tag = 'output window, operand 0, single buffered']
    %8 = vsyncpa [#allocation7], 0
    %9 = vsyncpa [#allocation8], 0
    // Predicated region
    $region2: #{tpu_custom_call.1} parent=1 // pred_check
      _
    $region3: #{tpu_custom_call.1} parent=1 // pred_check_branch
      %11 = sbr.rel (0) target = $region5
    $region4: #{tpu_custom_call.1} parent=1 // pred_region
      _
    $region5: #{tpu_custom_call.1} parent=1 // pred_fallthru
      _
    // Predicated region
    $region6: #{tpu_custom_call.1} parent=1 // pred_check
      _
    $region7: #{tpu_custom_call.1} parent=1 // pred_check_branch
      %13 = sbr.rel (0) target = $region9
    $region8: #{tpu_custom_call.1} parent=1 // pred_region
      _
    $region9: #{tpu_custom_call.1} parent=1 // pred_fallthru
      _
    // Predicated region
    $region10: #{tpu_custom_call.1} parent=1 // pred_check
      _
    $region11: #{tpu_custom_call.1} parent=1 // pred_check_branch
      %15 = sbr.rel (0) target = $region13
    $region12: #{tpu_custom_call.1} parent=1 // pred_region
      %17 = vsyncadd [#allocation7], 0
      %s18 = sshll.u32 %s2, 4
      %s19 = int_to_ptr.hbm [resolvable:$true] %s18
      %s20 = sshll.u32 [#allocation6], 4
      %s21 = int_to_ptr.vmem [resolvable:$true] %s20
      %26 = dma.hbm_to_vmem [thread:$0]  %s19, 7680, %s21, [#allocation7], 256, 256, 16
    $region13: #{tpu_custom_call.1} parent=1 // pred_fallthru
      _
    // Predicated region
    $region14: #{tpu_custom_call.1} parent=1 // pred_check
      _
    $region15: #{tpu_custom_call.1} parent=1 // pred_check_branch
      %28 = sbr.rel (0) target = $region17
    $region16: #{tpu_custom_call.1} parent=1 // pred_region
      %30 = dma.done [#allocation7], 7680
    $region17: #{tpu_custom_call.1} parent=1 // pred_fallthru
      _
    %v31 = vld [vmem:[#allocation6] sm:$0xf]
    %v32 = vld [vmem:[#allocation6 + $0x10] ss:$0 sm:$0xff]
    %v33 = vld [vmem:[#allocation6 + $0xa0] ss:$0 sm:$0xff]
    %v34 = vld [vmem:[%s0] sm:$0xff]
    %v35 = vld [vmem:[%s0 + $0x8] sm:$0xff]
    %v36 = vld [vmem:[%s0 + $0x10] sm:$0xff]
    %v37 = vld [vmem:[%s0 + $0x18] sm:$0xff]
    %v38 = vld [vmem:[%s0 + $0x20] sm:$0xff]
    %v39 = vld [vmem:[%s0 + $0x28] sm:$0xff]
    %v40 = vld [vmem:[%s0 + $0x30] sm:$0xff]
    %v41 = vld [vmem:[%s0 + $0x38] sm:$0xff]
    %vm42 = vcmask 31744
    %v44 = vsel %vm42, %v34, 0
    %v47 = vsel %vm42, %v35, 0
    %v50 = vsel %vm42, %v36, 0
    %v53 = vsel %vm42, %v37, 0
    %v56 = vsel %vm42, %v38, 0
    %v59 = vsel %vm42, %v39, 0
    %v62 = vsel %vm42, %v40, 0
    %v65 = vsel %vm42, %v41, 0
    %vm67 = vcmask 1043456
    %v69 = vsel %vm67, %v31, 0
    %71 = vmatpush.msra.mxu0 0.0
    %72 = vmatpush.msra.mxu0 0.0
    %73 = vmatpush.msra.mxu0 0.0
    %74 = vmatpush.msra.mxu0 0.0
    %75 = vmatpush.msra.mxu0 0.0
    %76 = vmatpush.msra.mxu0 0.0
    %77 = vmatpush.msra.mxu0 0.0
    %78 = vmatpush.msra.mxu0 0.0
    %79 = vmatpush.msra.mxu0 0.0
    %80 = vmatpush.msra.mxu0 0.0
    %81 = vmatpush.msra.mxu0 0.0
    %82 = vmatpush.msra.mxu0 0.0
    %83 = vmatpush.msra.mxu0 0.0
    %84 = vmatpush.msra.mxu0 0.0
    %85 = vmatpush.msra.mxu0 0.0
    %86 = vmatpush.msra.mxu0 %v69
    %87 = vmatmul.f32.gmra.mxu0 %v44
    %v88 = vpop.f32.mrf.mxu0
    %v89 = vadd.f32 %v32, %v88
    %90 = vmatmul.f32.gmra.mxu0 %v47
    %v91 = vpop.f32.mrf.mxu0
    %v92 = vadd.f32 %v32, %v91
    %93 = vmatmul.f32.gmra.mxu0 %v50
    %v94 = vpop.f32.mrf.mxu0
    %v95 = vadd.f32 %v32, %v94
    %96 = vmatmul.f32.gmra.mxu0 %v53
    %v97 = vpop.f32.mrf.mxu0
    %v98 = vadd.f32 %v32, %v97
    %99 = vmatmul.f32.gmra.mxu0 %v56
    %v100 = vpop.f32.mrf.mxu0
    %v101 = vadd.f32 %v32, %v100
    %102 = vmatmul.f32.gmra.mxu0 %v59
    %v103 = vpop.f32.mrf.mxu0
    %v104 = vadd.f32 %v32, %v103
    %105 = vmatmul.f32.gmra.mxu0 %v62
    %v106 = vpop.f32.mrf.mxu0
    %v107 = vadd.f32 %v32, %v106
    %108 = vmatmul.f32.gmra.mxu0 %v65
    %v109 = vpop.f32.mrf.mxu0
    %v110 = vadd.f32 %v32, %v109
    %111 = vdwg.mxu0
    %112 = vst [vmem:[#allocation2] sm:$0xff] %v89
    %113 = vst [vmem:[#allocation2 + $0x10] sm:$0xff] %v92
    %114 = vst [vmem:[#allocation2 + $0x20] sm:$0xff] %v95
    %115 = vst [vmem:[#allocation2 + $0x30] sm:$0xff] %v98
    %116 = vst [vmem:[#allocation2 + $0x40] sm:$0xff] %v101
    %117 = vst [vmem:[#allocation2 + $0x50] sm:$0xff] %v104
    %118 = vst [vmem:[#allocation2 + $0x60] sm:$0xff] %v107
    %119 = vst [vmem:[#allocation2 + $0x70] sm:$0xff] %v110
    %vm120 = vcmask 261120
    %121 = vst.msk [vmem:[#allocation2 + $0x8] sm:$0xff] %vm120, %v33
    %122 = vst.msk [vmem:[#allocation2 + $0x18] sm:$0xff] %vm120, %v33
    %123 = vst.msk [vmem:[#allocation2 + $0x28] sm:$0xff] %vm120, %v33
    %124 = vst.msk [vmem:[#allocation2 + $0x38] sm:$0xff] %vm120, %v33
    %125 = vst.msk [vmem:[#allocation2 + $0x48] sm:$0xff] %vm120, %v33
    %126 = vst.msk [vmem:[#allocation2 + $0x58] sm:$0xff] %vm120, %v33
    %127 = vst.msk [vmem:[#allocation2 + $0x68] sm:$0xff] %vm120, %v33
    %128 = vst.msk [vmem:[#allocation2 + $0x78] sm:$0xff] %vm120, %v33
    %v129 = vld [vmem:[#allocation6 + $0x20] sm:$0xff]
    %v130 = vld [vmem:[#allocation6 + $0x28] sm:$0xff]
    %v131 = vld [vmem:[#allocation6 + $0x30] sm:$0xff]
    %v132 = vld [vmem:[#allocation6 + $0x38] sm:$0xff]
    %v133 = vld [vmem:[#allocation6 + $0x40] sm:$0xff]
    %v134 = vld [vmem:[#allocation6 + $0x48] sm:$0xff]
    %v135 = vld [vmem:[#allocation6 + $0x50] sm:$0xff]
    %v136 = vld [vmem:[#allocation6 + $0x58] sm:$0xff]
    %v137 = vld [vmem:[#allocation6 + $0x60] sm:$0xff]
    %v138 = vld [vmem:[#allocation6 + $0x68] sm:$0xff]
    %v139 = vld [vmem:[#allocation6 + $0x70] sm:$0xff]
    %v140 = vld [vmem:[#allocation6 + $0x78] sm:$0xff]
    %v141 = vld [vmem:[#allocation6 + $0x80] sm:$0xff]
    %v142 = vld [vmem:[#allocation6 + $0x88] sm:$0xff]
    %v143 = vld [vmem:[#allocation6 + $0x90] sm:$0xff]
    %v144 = vld [vmem:[#allocation6 + $0x98] sm:$0xff]
    %v145 = vld [vmem:[%s1] sm:$0xff]
    %v146 = vld [vmem:[#allocation2] sm:$0xff]
    %v147 = vld [vmem:[#allocation2 + $0x8] sm:$0xff]
    %vm148 = vcmask 523264
    %v150 = vsel %vm148, %v145, 0
    %152 = vmatpush.msra.mxu0 0.0
    %153 = vmatpush.msra.mxu0 0.0
    %154 = vmatpush.msra.mxu0 0.0
    %155 = vmatpush.msra.mxu0 0.0
    %156 = vmatpush.msra.mxu0 0.0
    %157 = vmatpush.msra.mxu0 0.0
    %158 = vmatpush.msra.mxu0 0.0
    %159 = vmatpush.msra.mxu0 0.0
    %160 = vmatpush.msra.mxu0 %v143
    %161 = vmatpush.msra.mxu0 %v141
    %162 = vmatpush.msra.mxu0 %v139
    %163 = vmatpush.msra.mxu0 %v137
    %164 = vmatpush.msra.mxu0 %v135
    %165 = vmatpush.msra.mxu0 %v133
    %166 = vmatpush.msra.mxu0 %v131
    %167 = vmatpush.msra.mxu0 %v129
    %168 = vmatmul.f32.gmra.mxu0 %v150
    %v169 = vpop.f32.mrf.mxu0
    %v170 = vadd.f32 0.0, %v169
    %171 = vdwg.mxu0
    %172 = vmatpush.msra.mxu0 0.0
    %173 = vmatpush.msra.mxu0 0.0
    %174 = vmatpush.msra.mxu0 0.0
    %175 = vmatpush.msra.mxu0 0.0
    %176 = vmatpush.msra.mxu0 0.0
    %177 = vmatpush.msra.mxu0 0.0
    %178 = vmatpush.msra.mxu0 0.0
    %179 = vmatpush.msra.mxu0 0.0
    %180 = vmatpush.msra.mxu0 %v144
    %181 = vmatpush.msra.mxu0 %v142
    %182 = vmatpush.msra.mxu0 %v140
    %183 = vmatpush.msra.mxu0 %v138
    %184 = vmatpush.msra.mxu0 %v136
    %185 = vmatpush.msra.mxu0 %v134
    %186 = vmatpush.msra.mxu0 %v132
    %187 = vmatpush.msra.mxu0 %v130
    %188 = vmatmul.f32.gmra.mxu0 %v150
    %v189 = vpop.f32.mrf.mxu0
    %v190 = vadd.f32 0.0, %v189
    %191 = vdwg.mxu0
    %v192 = vadd.f32 %v146, %v170
    %v193 = vadd.f32 %v147, %v190
    %v194 = vxor.u32 %v193, 2147483648
    %v195 = vmul.f32 %v194, 1.442695
    %v196 = vpow.pop %v195
    %v197 = vadd.f32 %v196, 1.0
    %v198 = vrcp.pop %v197
    %v199 = vmul.f32 %v197, %v198
    %v200 = vsub.f32 1.0, %v199
    %v201 = vmul.f32 %v198, %v200
    %v202 = vadd.f32 %v198, %v201
    %vm203 = vweird.f32 %v197
    %vm204 = vweird.f32 %v198
    %vm205 = vmor %vm203, %vm204
    %v206 = vsel %vm205, %v198, %v202
    %v207 = vand.u32 2147483647, %v197
    %vm208 = vcmp.eq.f32.partialorder %v207, 8.507059e+37
    %v209 = vand.u32 %v197, 2147483648
    %v210 = vor.u32 1.1754944e-38, %v209
    %v211 = vsel %vm208, %v210, %v206
    %v212 = vmul.f32 1.0, %v211
    %214 = vrot.lane.b32.xlu0 %v212, 32
    %v215 = vpop.permute.xlu0 %214
    %v217 = vsub.f32 %v145, %v215
    %v218 = vxor.u32 %v192, 2147483648
    %v219 = vmul.f32 %v218, 1.442695
    %v220 = vpow.pop %v219
    %v221 = vadd.f32 %v220, 1.0
    %v222 = vrcp.pop %v221
    %v223 = vmul.f32 %v221, %v222
    %v224 = vsub.f32 1.0, %v223
    %v225 = vmul.f32 %v222, %v224
    %v226 = vadd.f32 %v222, %v225
    %vm227 = vweird.f32 %v221
    %vm228 = vweird.f32 %v222
    %vm229 = vmor %vm227, %vm228
    %v230 = vsel %vm229, %v222, %v226
    %v231 = vand.u32 2147483647, %v221
    %vm232 = vcmp.eq.f32.partialorder %v231, 8.507059e+37
    %v233 = vand.u32 %v221, 2147483648
    %v234 = vor.u32 1.1754944e-38, %v233
    %v235 = vsel %vm232, %v234, %v230
    %v236 = vmul.f32 1.0, %v235
    %v237 = vtanh.pop %v192
    %239 = vrot.lane.b32.xlu0 %v217, 96
    %v240 = vpop.permute.xlu0 %239
    %v242 = vmul.f32 %v236, %v240
    %244 = vrot.lane.b32.xlu0 %v237, 64
    %v245 = vpop.permute.xlu0 %244
    %v247 = vmul.f32 %v236, %v245
    %249 = vrot.lane.b32.xlu0 %v247, 96
    %v250 = vpop.permute.xlu0 %249
    %v252 = vadd.f32 %v242, %v250
    %v253 = vtanh.pop %v252
    %255 = vrot.lane.b32.xlu0 %v253, 64
    %v256 = vpop.permute.xlu0 %255
    %v258 = vmul.f32 %v236, %v256
    %260 = vrot.lane.b32.xlu0 %v258, 64
    %v261 = vpop.permute.xlu0 %260
    %263 = vst.msk [vmem:[#allocation3] sm:$0xff] %vm120, %v261
    %v264 = vld [vmem:[#allocation2 + $0x10] sm:$0xff]
    %v265 = vld [vmem:[#allocation2 + $0x18] sm:$0xff]
    %267 = vrot.lane.b32.xlu0 %v252, 32
    %v268 = vpop.permute.xlu0 %267
    %v270 = vsel %vm120, %v261, %v268
    %v272 = vsel %vm148, %v270, 0
    %274 = vmatpush.msra.mxu0 0.0
    %275 = vmatpush.msra.mxu0 0.0
    %276 = vmatpush.msra.mxu0 0.0
    %277 = vmatpush.msra.mxu0 0.0
    %278 = vmatpush.msra.mxu0 0.0
    %279 = vmatpush.msra.mxu0 0.0
    %280 = vmatpush.msra.mxu0 0.0
    %281 = vmatpush.msra.mxu0 0.0
    %282 = vmatpush.msra.mxu0 %v143
    %283 = vmatpush.msra.mxu0 %v141
    %284 = vmatpush.msra.mxu0 %v139
    %285 = vmatpush.msra.mxu0 %v137
    %286 = vmatpush.msra.mxu0 %v135
    %287 = vmatpush.msra.mxu0 %v133
    %288 = vmatpush.msra.mxu0 %v131
    %289 = vmatpush.msra.mxu0 %v129
    %290 = vmatmul.f32.gmra.mxu0 %v272
    %v291 = vpop.f32.mrf.mxu0
    %v292 = vadd.f32 0.0, %v291
    %293 = vdwg.mxu0
    %294 = vmatpush.msra.mxu0 0.0
    %295 = vmatpush.msra.mxu0 0.0
    %296 = vmatpush.msra.mxu0 0.0
    %297 = vmatpush.msra.mxu0 0.0
    %298 = vmatpush.msra.mxu0 0.0
    %299 = vmatpush.msra.mxu0 0.0
    %300 = vmatpush.msra.mxu0 0.0
    %301 = vmatpush.msra.mxu0 0.0
    %302 = vmatpush.msra.mxu0 %v144
    %303 = vmatpush.msra.mxu0 %v142
    %304 = vmatpush.msra.mxu0 %v140
    %305 = vmatpush.msra.mxu0 %v138
    %306 = vmatpush.msra.mxu0 %v136
    %307 = vmatpush.msra.mxu0 %v134
    %308 = vmatpush.msra.mxu0 %v132
    %309 = vmatpush.msra.mxu0 %v130
    %310 = vmatmul.f32.gmra.mxu0 %v272
    %v311 = vpop.f32.mrf.mxu0
    %v312 = vadd.f32 0.0, %v311
    %313 = vdwg.mxu0
    %v314 = vadd.f32 %v264, %v292
    %v315 = vadd.f32 %v265, %v312
    %v316 = vxor.u32 %v315, 2147483648
    %v317 = vmul.f32 %v316, 1.442695
    %v318 = vpow.pop %v317
    %v319 = vadd.f32 %v318, 1.0
    %v320 = vrcp.pop %v319
    %v321 = vmul.f32 %v319, %v320
    %v322 = vsub.f32 1.0, %v321
    %v323 = vmul.f32 %v320, %v322
    %v324 = vadd.f32 %v320, %v323
    %vm325 = vweird.f32 %v319
    %vm326 = vweird.f32 %v320
    %vm327 = vmor %vm325, %vm326
    %v328 = vsel %vm327, %v320, %v324
    %v329 = vand.u32 2147483647, %v319
    %vm330 = vcmp.eq.f32.partialorder %v329, 8.507059e+37
    %v331 = vand.u32 %v319, 2147483648
    %v332 = vor.u32 1.1754944e-38, %v331
    %v333 = vsel %vm330, %v332, %v328
    %v334 = vmul.f32 1.0, %v333
    %v335 = vsub.f32 %v252, %v334
    %v336 = vxor.u32 %v314, 2147483648
    %v337 = vmul.f32 %v336, 1.442695
    %v338 = vpow.pop %v337
    %v339 = vadd.f32 %v338, 1.0
    %v340 = vrcp.pop %v339
    %v341 = vmul.f32 %v339, %v340
    %v342 = vsub.f32 1.0, %v341
    %v343 = vmul.f32 %v340, %v342
    %v344 = vadd.f32 %v340, %v343
    %vm345 = vweird.f32 %v339
    %vm346 = vweird.f32 %v340
    %vm347 = vmor %vm345, %vm346
    %v348 = vsel %vm347, %v340, %v344
    %v349 = vand.u32 2147483647, %v339
    %vm350 = vcmp.eq.f32.partialorder %v349, 8.507059e+37
    %v351 = vand.u32 %v339, 2147483648
    %v352 = vor.u32 1.1754944e-38, %v351
    %v353 = vsel %vm350, %v352, %v348
    %v354 = vmul.f32 1.0, %v353
    %v355 = vtanh.pop %v314
    %v356 = vmul.f32 %v354, %v335
    %358 = vrot.lane.b32.xlu0 %v355, 64
    %v359 = vpop.permute.xlu0 %358
    %v361 = vmul.f32 %v354, %v359
    %363 = vrot.lane.b32.xlu0 %v361, 96
    %v364 = vpop.permute.xlu0 %363
    %v366 = vadd.f32 %v356, %v364
    %v367 = vtanh.pop %v366
    %369 = vrot.lane.b32.xlu0 %v367, 64
    %v370 = vpop.permute.xlu0 %369
    %v372 = vmul.f32 %v354, %v370
    %374 = vrot.lane.b32.xlu0 %v372, 64
    %v375 = vpop.permute.xlu0 %374
    %377 = vst.msk [vmem:[#allocation3 + $0x8] sm:$0xff] %vm120, %v375
    %v378 = vld [vmem:[#allocation2 + $0x20] sm:$0xff]
    %v379 = vld [vmem:[#allocation2 + $0x28] sm:$0xff]
    %381 = vrot.lane.b32.xlu0 %v366, 32
    %v382 = vpop.permute.xlu0 %381
    %v384 = vsel %vm120, %v375, %v382
    %v386 = vsel %vm148, %v384, 0
    %388 = vmatpush.msra.mxu0 0.0
    %389 = vmatpush.msra.mxu0 0.0
    %390 = vmatpush.msra.mxu0 0.0
    %391 = vmatpush.msra.mxu0 0.0
    %392 = vmatpush.msra.mxu0 0.0
    %393 = vmatpush.msra.mxu0 0.0
    %394 = vmatpush.msra.mxu0 0.0
    %395 = vmatpush.msra.mxu0 0.0
    %396 = vmatpush.msra.mxu0 %v143
    %397 = vmatpush.msra.mxu0 %v141
    %398 = vmatpush.msra.mxu0 %v139
    %399 = vmatpush.msra.mxu0 %v137
    %400 = vmatpush.msra.mxu0 %v135
    %401 = vmatpush.msra.mxu0 %v133
    %402 = vmatpush.msra.mxu0 %v131
    %403 = vmatpush.msra.mxu0 %v129
    %404 = vmatmul.f32.gmra.mxu0 %v386
    %v405 = vpop.f32.mrf.mxu0
    %v406 = vadd.f32 0.0, %v405
    %407 = vdwg.mxu0
    %408 = vmatpush.msra.mxu0 0.0
    %409 = vmatpush.msra.mxu0 0.0
    %410 = vmatpush.msra.mxu0 0.0
    %411 = vmatpush.msra.mxu0 0.0
    %412 = vmatpush.msra.mxu0 0.0
    %413 = vmatpush.msra.mxu0 0.0
    %414 = vmatpush.msra.mxu0 0.0
    %415 = vmatpush.msra.mxu0 0.0
    %416 = vmatpush.msra.mxu0 %v144
    %417 = vmatpush.msra.mxu0 %v142
    %418 = vmatpush.msra.mxu0 %v140
    %419 = vmatpush.msra.mxu0 %v138
    %420 = vmatpush.msra.mxu0 %v136
    %421 = vmatpush.msra.mxu0 %v134
    %422 = vmatpush.msra.mxu0 %v132
    %423 = vmatpush.msra.mxu0 %v130
    %424 = vmatmul.f32.gmra.mxu0 %v386
    %v425 = vpop.f32.mrf.mxu0
    %v426 = vadd.f32 0.0, %v425
    %427 = vdwg.mxu0
    %v428 = vadd.f32 %v378, %v406
    %v429 = vadd.f32 %v379, %v426
    %v430 = vxor.u32 %v429, 2147483648
    %v431 = vmul.f32 %v430, 1.442695
    %v432 = vpow.pop %v431
    %v433 = vadd.f32 %v432, 1.0
    %v434 = vrcp.pop %v433
    %v435 = vmul.f32 %v433, %v434
    %v436 = vsub.f32 1.0, %v435
    %v437 = vmul.f32 %v434, %v436
    %v438 = vadd.f32 %v434, %v437
    %vm439 = vweird.f32 %v433
    %vm440 = vweird.f32 %v434
    %vm441 = vmor %vm439, %vm440
    %v442 = vsel %vm441, %v434, %v438
    %v443 = vand.u32 2147483647, %v433
    %vm444 = vcmp.eq.f32.partialorder %v443, 8.507059e+37
    %v445 = vand.u32 %v433, 2147483648
    %v446 = vor.u32 1.1754944e-38, %v445
    %v447 = vsel %vm444, %v446, %v442
    %v448 = vmul.f32 1.0, %v447
    %v449 = vsub.f32 %v366, %v448
    %v450 = vxor.u32 %v428, 2147483648
    %v451 = vmul.f32 %v450, 1.442695
    %v452 = vpow.pop %v451
    %v453 = vadd.f32 %v452, 1.0
    %v454 = vrcp.pop %v453
    %v455 = vmul.f32 %v453, %v454
    %v456 = vsub.f32 1.0, %v455
    %v457 = vmul.f32 %v454, %v456
    %v458 = vadd.f32 %v454, %v457
    %vm459 = vweird.f32 %v453
    %vm460 = vweird.f32 %v454
    %vm461 = vmor %vm459, %vm460
    %v462 = vsel %vm461, %v454, %v458
    %v463 = vand.u32 2147483647, %v453
    %vm464 = vcmp.eq.f32.partialorder %v463, 8.507059e+37
    %v465 = vand.u32 %v453, 2147483648
    %v466 = vor.u32 1.1754944e-38, %v465
    %v467 = vsel %vm464, %v466, %v462
    %v468 = vmul.f32 1.0, %v467
    %v469 = vtanh.pop %v428
    %v470 = vmul.f32 %v468, %v449
    %472 = vrot.lane.b32.xlu0 %v469, 64
    %v473 = vpop.permute.xlu0 %472
    %v475 = vmul.f32 %v468, %v473
    %477 = vrot.lane.b32.xlu0 %v475, 96
    %v478 = vpop.permute.xlu0 %477
    %v480 = vadd.f32 %v470, %v478
    %v481 = vtanh.pop %v480
    %483 = vrot.lane.b32.xlu0 %v481, 64
    %v484 = vpop.permute.xlu0 %483
    %v486 = vmul.f32 %v468, %v484
    %488 = vrot.lane.b32.xlu0 %v486, 64
    %v489 = vpop.permute.xlu0 %488
    %491 = vst.msk [vmem:[#allocation3 + $0x10] sm:$0xff] %vm120, %v489
    %v492 = vld [vmem:[#allocation2 + $0x30] sm:$0xff]
    %v493 = vld [vmem:[#allocation2 + $0x38] sm:$0xff]
    %495 = vrot.lane.b32.xlu0 %v480, 32
    %v496 = vpop.permute.xlu0 %495
    %v498 = vsel %vm120, %v489, %v496
    %v500 = vsel %vm148, %v498, 0
    %502 = vmatpush.msra.mxu0 0.0
    %503 = vmatpush.msra.mxu0 0.0
    %504 = vmatpush.msra.mxu0 0.0
    %505 = vmatpush.msra.mxu0 0.0
    %506 = vmatpush.msra.mxu0 0.0
    %507 = vmatpush.msra.mxu0 0.0
    %508 = vmatpush.msra.mxu0 0.0
    %509 = vmatpush.msra.mxu0 0.0
    %510 = vmatpush.msra.mxu0 %v143
    %511 = vmatpush.msra.mxu0 %v141
    %512 = vmatpush.msra.mxu0 %v139
    %513 = vmatpush.msra.mxu0 %v137
    %514 = vmatpush.msra.mxu0 %v135
    %515 = vmatpush.msra.mxu0 %v133
    %516 = vmatpush.msra.mxu0 %v131
    %517 = vmatpush.msra.mxu0 %v129
    %518 = vmatmul.f32.gmra.mxu0 %v500
    %v519 = vpop.f32.mrf.mxu0
    %v520 = vadd.f32 0.0, %v519
    %521 = vdwg.mxu0
    %522 = vmatpush.msra.mxu0 0.0
    %523 = vmatpush.msra.mxu0 0.0
    %524 = vmatpush.msra.mxu0 0.0
    %525 = vmatpush.msra.mxu0 0.0
    %526 = vmatpush.msra.mxu0 0.0
    %527 = vmatpush.msra.mxu0 0.0
    %528 = vmatpush.msra.mxu0 0.0
    %529 = vmatpush.msra.mxu0 0.0
    %530 = vmatpush.msra.mxu0 %v144
    %531 = vmatpush.msra.mxu0 %v142
    %532 = vmatpush.msra.mxu0 %v140
    %533 = vmatpush.msra.mxu0 %v138
    %534 = vmatpush.msra.mxu0 %v136
    %535 = vmatpush.msra.mxu0 %v134
    %536 = vmatpush.msra.mxu0 %v132
    %537 = vmatpush.msra.mxu0 %v130
    %538 = vmatmul.f32.gmra.mxu0 %v500
    %v539 = vpop.f32.mrf.mxu0
    %v540 = vadd.f32 0.0, %v539
    %541 = vdwg.mxu0
    %v542 = vadd.f32 %v492, %v520
    %v543 = vadd.f32 %v493, %v540
    %v544 = vxor.u32 %v543, 2147483648
    %v545 = vmul.f32 %v544, 1.442695
    %v546 = vpow.pop %v545
    %v547 = vadd.f32 %v546, 1.0
    %v548 = vrcp.pop %v547
    %v549 = vmul.f32 %v547, %v548
    %v550 = vsub.f32 1.0, %v549
    %v551 = vmul.f32 %v548, %v550
    %v552 = vadd.f32 %v548, %v551
    %vm553 = vweird.f32 %v547
    %vm554 = vweird.f32 %v548
    %vm555 = vmor %vm553, %vm554
    %v556 = vsel %vm555, %v548, %v552
    %v557 = vand.u32 2147483647, %v547
    %vm558 = vcmp.eq.f32.partialorder %v557, 8.507059e+37
    %v559 = vand.u32 %v547, 2147483648
    %v560 = vor.u32 1.1754944e-38, %v559
    %v561 = vsel %vm558, %v560, %v556
    %v562 = vmul.f32 1.0, %v561
    %v563 = vsub.f32 %v480, %v562
    %v564 = vxor.u32 %v542, 2147483648
    %v565 = vmul.f32 %v564, 1.442695
    %v566 = vpow.pop %v565
    %v567 = vadd.f32 %v566, 1.0
    %v568 = vrcp.pop %v567
    %v569 = vmul.f32 %v567, %v568
    %v570 = vsub.f32 1.0, %v569
    %v571 = vmul.f32 %v568, %v570
    %v572 = vadd.f32 %v568, %v571
    %vm573 = vweird.f32 %v567
    %vm574 = vweird.f32 %v568
    %vm575 = vmor %vm573, %vm574
    %v576 = vsel %vm575, %v568, %v572
    %v577 = vand.u32 2147483647, %v567
    %vm578 = vcmp.eq.f32.partialorder %v577, 8.507059e+37
    %v579 = vand.u32 %v567, 2147483648
    %v580 = vor.u32 1.1754944e-38, %v579
    %v581 = vsel %vm578, %v580, %v576
    %v582 = vmul.f32 1.0, %v581
    %v583 = vtanh.pop %v542
    %v584 = vmul.f32 %v582, %v563
    %586 = vrot.lane.b32.xlu0 %v583, 64
    %v587 = vpop.permute.xlu0 %586
    %v589 = vmul.f32 %v582, %v587
    %591 = vrot.lane.b32.xlu0 %v589, 96
    %v592 = vpop.permute.xlu0 %591
    %v594 = vadd.f32 %v584, %v592
    %v595 = vtanh.pop %v594
    %597 = vrot.lane.b32.xlu0 %v595, 64
    %v598 = vpop.permute.xlu0 %597
    %v600 = vmul.f32 %v582, %v598
    %602 = vrot.lane.b32.xlu0 %v600, 64
    %v603 = vpop.permute.xlu0 %602
    %605 = vst.msk [vmem:[#allocation3 + $0x18] sm:$0xff] %vm120, %v603
    %v606 = vld [vmem:[#allocation2 + $0x40] sm:$0xff]
    %v607 = vld [vmem:[#allocation2 + $0x48] sm:$0xff]
    %609 = vrot.lane.b32.xlu0 %v594, 32
    %v610 = vpop.permute.xlu0 %609
    %v612 = vsel %vm120, %v603, %v610
    %v614 = vsel %vm148, %v612, 0
    %616 = vmatpush.msra.mxu0 0.0
    %617 = vmatpush.msra.mxu0 0.0
    %618 = vmatpush.msra.mxu0 0.0
    %619 = vmatpush.msra.mxu0 0.0
    %620 = vmatpush.msra.mxu0 0.0
    %621 = vmatpush.msra.mxu0 0.0
    %622 = vmatpush.msra.mxu0 0.0
    %623 = vmatpush.msra.mxu0 0.0
    %624 = vmatpush.msra.mxu0 %v143
    %625 = vmatpush.msra.mxu0 %v141
    %626 = vmatpush.msra.mxu0 %v139
    %627 = vmatpush.msra.mxu0 %v137
    %628 = vmatpush.msra.mxu0 %v135
    %629 = vmatpush.msra.mxu0 %v133
    %630 = vmatpush.msra.mxu0 %v131
    %631 = vmatpush.msra.mxu0 %v129
    %632 = vmatmul.f32.gmra.mxu0 %v614
    %v633 = vpop.f32.mrf.mxu0
    %v634 = vadd.f32 0.0, %v633
    %635 = vdwg.mxu0
    %636 = vmatpush.msra.mxu0 0.0
    %637 = vmatpush.msra.mxu0 0.0
    %638 = vmatpush.msra.mxu0 0.0
    %639 = vmatpush.msra.mxu0 0.0
    %640 = vmatpush.msra.mxu0 0.0
    %641 = vmatpush.msra.mxu0 0.0
    %642 = vmatpush.msra.mxu0 0.0
    %643 = vmatpush.msra.mxu0 0.0
    %644 = vmatpush.msra.mxu0 %v144
    %645 = vmatpush.msra.mxu0 %v142
    %646 = vmatpush.msra.mxu0 %v140
    %647 = vmatpush.msra.mxu0 %v138
    %648 = vmatpush.msra.mxu0 %v136
    %649 = vmatpush.msra.mxu0 %v134
    %650 = vmatpush.msra.mxu0 %v132
    %651 = vmatpush.msra.mxu0 %v130
    %652 = vmatmul.f32.gmra.mxu0 %v614
    %v653 = vpop.f32.mrf.mxu0
    %v654 = vadd.f32 0.0, %v653
    %655 = vdwg.mxu0
    %v656 = vadd.f32 %v606, %v634
    %v657 = vadd.f32 %v607, %v654
    %v658 = vxor.u32 %v657, 2147483648
    %v659 = vmul.f32 %v658, 1.442695
    %v660 = vpow.pop %v659
    %v661 = vadd.f32 %v660, 1.0
    %v662 = vrcp.pop %v661
    %v663 = vmul.f32 %v661, %v662
    %v664 = vsub.f32 1.0, %v663
    %v665 = vmul.f32 %v662, %v664
    %v666 = vadd.f32 %v662, %v665
    %vm667 = vweird.f32 %v661
    %vm668 = vweird.f32 %v662
    %vm669 = vmor %vm667, %vm668
    %v670 = vsel %vm669, %v662, %v666
    %v671 = vand.u32 2147483647, %v661
    %vm672 = vcmp.eq.f32.partialorder %v671, 8.507059e+37
    %v673 = vand.u32 %v661, 2147483648
    %v674 = vor.u32 1.1754944e-38, %v673
    %v675 = vsel %vm672, %v674, %v670
    %v676 = vmul.f32 1.0, %v675
    %v677 = vsub.f32 %v594, %v676
    %v678 = vxor.u32 %v656, 2147483648
    %v679 = vmul.f32 %v678, 1.442695
    %v680 = vpow.pop %v679
    %v681 = vadd.f32 %v680, 1.0
    %v682 = vrcp.pop %v681
    %v683 = vmul.f32 %v681, %v682
    %v684 = vsub.f32 1.0, %v683
    %v685 = vmul.f32 %v682, %v684
    %v686 = vadd.f32 %v682, %v685
    %vm687 = vweird.f32 %v681
    %vm688 = vweird.f32 %v682
    %vm689 = vmor %vm687, %vm688
    %v690 = vsel %vm689, %v682, %v686
    %v691 = vand.u32 2147483647, %v681
    %vm692 = vcmp.eq.f32.partialorder %v691, 8.507059e+37
    %v693 = vand.u32 %v681, 2147483648
    %v694 = vor.u32 1.1754944e-38, %v693
    %v695 = vsel %vm692, %v694, %v690
    %v696 = vmul.f32 1.0, %v695
    %v697 = vtanh.pop %v656
    %v698 = vmul.f32 %v696, %v677
    %700 = vrot.lane.b32.xlu0 %v697, 64
    %v701 = vpop.permute.xlu0 %700
    %v703 = vmul.f32 %v696, %v701
    %705 = vrot.lane.b32.xlu0 %v703, 96
    %v706 = vpop.permute.xlu0 %705
    %v708 = vadd.f32 %v698, %v706
    %v709 = vtanh.pop %v708
    %711 = vrot.lane.b32.xlu0 %v709, 64
    %v712 = vpop.permute.xlu0 %711
    %v714 = vmul.f32 %v696, %v712
    %716 = vrot.lane.b32.xlu0 %v714, 64
    %v717 = vpop.permute.xlu0 %716
    %719 = vst.msk [vmem:[#allocation3 + $0x20] sm:$0xff] %vm120, %v717
    %v720 = vld [vmem:[#allocation2 + $0x50] sm:$0xff]
    %v721 = vld [vmem:[#allocation2 + $0x58] sm:$0xff]
    %723 = vrot.lane.b32.xlu0 %v708, 32
    %v724 = vpop.permute.xlu0 %723
    %v726 = vsel %vm120, %v717, %v724
    %v728 = vsel %vm148, %v726, 0
    %730 = vmatpush.msra.mxu0 0.0
    %731 = vmatpush.msra.mxu0 0.0
    %732 = vmatpush.msra.mxu0 0.0
    %733 = vmatpush.msra.mxu0 0.0
    %734 = vmatpush.msra.mxu0 0.0
    %735 = vmatpush.msra.mxu0 0.0
    %736 = vmatpush.msra.mxu0 0.0
    %737 = vmatpush.msra.mxu0 0.0
    %738 = vmatpush.msra.mxu0 %v143
    %739 = vmatpush.msra.mxu0 %v141
    %740 = vmatpush.msra.mxu0 %v139
    %741 = vmatpush.msra.mxu0 %v137
    %742 = vmatpush.msra.mxu0 %v135
    %743 = vmatpush.msra.mxu0 %v133
    %744 = vmatpush.msra.mxu0 %v131
    %745 = vmatpush.msra.mxu0 %v129
    %746 = vmatmul.f32.gmra.mxu0 %v728
    %v747 = vpop.f32.mrf.mxu0
    %v748 = vadd.f32 0.0, %v747
    %749 = vdwg.mxu0
    %750 = vmatpush.msra.mxu0 0.0
    %751 = vmatpush.msra.mxu0 0.0
    %752 = vmatpush.msra.mxu0 0.0
    %753 = vmatpush.msra.mxu0 0.0
    %754 = vmatpush.msra.mxu0 0.0
    %755 = vmatpush.msra.mxu0 0.0
    %756 = vmatpush.msra.mxu0 0.0
    %757 = vmatpush.msra.mxu0 0.0
    %758 = vmatpush.msra.mxu0 %v144
    %759 = vmatpush.msra.mxu0 %v142
    %760 = vmatpush.msra.mxu0 %v140
    %761 = vmatpush.msra.mxu0 %v138
    %762 = vmatpush.msra.mxu0 %v136
    %763 = vmatpush.msra.mxu0 %v134
    %764 = vmatpush.msra.mxu0 %v132
    %765 = vmatpush.msra.mxu0 %v130
    %766 = vmatmul.f32.gmra.mxu0 %v728
    %v767 = vpop.f32.mrf.mxu0
    %v768 = vadd.f32 0.0, %v767
    %769 = vdwg.mxu0
    %v770 = vadd.f32 %v720, %v748
    %v771 = vadd.f32 %v721, %v768
    %v772 = vxor.u32 %v771, 2147483648
    %v773 = vmul.f32 %v772, 1.442695
    %v774 = vpow.pop %v773
    %v775 = vadd.f32 %v774, 1.0
    %v776 = vrcp.pop %v775
    %v777 = vmul.f32 %v775, %v776
    %v778 = vsub.f32 1.0, %v777
    %v779 = vmul.f32 %v776, %v778
    %v780 = vadd.f32 %v776, %v779
    %vm781 = vweird.f32 %v775
    %vm782 = vweird.f32 %v776
    %vm783 = vmor %vm781, %vm782
    %v784 = vsel %vm783, %v776, %v780
    %v785 = vand.u32 2147483647, %v775
    %vm786 = vcmp.eq.f32.partialorder %v785, 8.507059e+37
    %v787 = vand.u32 %v775, 2147483648
    %v788 = vor.u32 1.1754944e-38, %v787
    %v789 = vsel %vm786, %v788, %v784
    %v790 = vmul.f32 1.0, %v789
    %v791 = vsub.f32 %v708, %v790
    %v792 = vxor.u32 %v770, 2147483648
    %v793 = vmul.f32 %v792, 1.442695
    %v794 = vpow.pop %v793
    %v795 = vadd.f32 %v794, 1.0
    %v796 = vrcp.pop %v795
    %v797 = vmul.f32 %v795, %v796
    %v798 = vsub.f32 1.0, %v797
    %v799 = vmul.f32 %v796, %v798
    %v800 = vadd.f32 %v796, %v799
    %vm801 = vweird.f32 %v795
    %vm802 = vweird.f32 %v796
    %vm803 = vmor %vm801, %vm802
    %v804 = vsel %vm803, %v796, %v800
    %v805 = vand.u32 2147483647, %v795
    %vm806 = vcmp.eq.f32.partialorder %v805, 8.507059e+37
    %v807 = vand.u32 %v795, 2147483648
    %v808 = vor.u32 1.1754944e-38, %v807
    %v809 = vsel %vm806, %v808, %v804
    %v810 = vmul.f32 1.0, %v809
    %v811 = vtanh.pop %v770
    %v812 = vmul.f32 %v810, %v791
    %814 = vrot.lane.b32.xlu0 %v811, 64
    %v815 = vpop.permute.xlu0 %814
    %v817 = vmul.f32 %v810, %v815
    %819 = vrot.lane.b32.xlu0 %v817, 96
    %v820 = vpop.permute.xlu0 %819
    %v822 = vadd.f32 %v812, %v820
    %v823 = vtanh.pop %v822
    %825 = vrot.lane.b32.xlu0 %v823, 64
    %v826 = vpop.permute.xlu0 %825
    %v828 = vmul.f32 %v810, %v826
    %830 = vrot.lane.b32.xlu0 %v828, 64
    %v831 = vpop.permute.xlu0 %830
    %833 = vst.msk [vmem:[#allocation3 + $0x28] sm:$0xff] %vm120, %v831
    %v834 = vld [vmem:[#allocation2 + $0x60] sm:$0xff]
    %v835 = vld [vmem:[#allocation2 + $0x68] sm:$0xff]
    %837 = vrot.lane.b32.xlu0 %v822, 32
    %v838 = vpop.permute.xlu0 %837
    %v840 = vsel %vm120, %v831, %v838
    %v842 = vsel %vm148, %v840, 0
    %844 = vmatpush.msra.mxu0 0.0
    %845 = vmatpush.msra.mxu0 0.0
    %846 = vmatpush.msra.mxu0 0.0
    %847 = vmatpush.msra.mxu0 0.0
    %848 = vmatpush.msra.mxu0 0.0
    %849 = vmatpush.msra.mxu0 0.0
    %850 = vmatpush.msra.mxu0 0.0
    %851 = vmatpush.msra.mxu0 0.0
    %852 = vmatpush.msra.mxu0 %v143
    %853 = vmatpush.msra.mxu0 %v141
    %854 = vmatpush.msra.mxu0 %v139
    %855 = vmatpush.msra.mxu0 %v137
    %856 = vmatpush.msra.mxu0 %v135
    %857 = vmatpush.msra.mxu0 %v133
    %858 = vmatpush.msra.mxu0 %v131
    %859 = vmatpush.msra.mxu0 %v129
    %860 = vmatmul.f32.gmra.mxu0 %v842
    %v861 = vpop.f32.mrf.mxu0
    %v862 = vadd.f32 0.0, %v861
    %863 = vdwg.mxu0
    %864 = vmatpush.msra.mxu0 0.0
    %865 = vmatpush.msra.mxu0 0.0
    %866 = vmatpush.msra.mxu0 0.0
    %867 = vmatpush.msra.mxu0 0.0
    %868 = vmatpush.msra.mxu0 0.0
    %869 = vmatpush.msra.mxu0 0.0
    %870 = vmatpush.msra.mxu0 0.0
    %871 = vmatpush.msra.mxu0 0.0
    %872 = vmatpush.msra.mxu0 %v144
    %873 = vmatpush.msra.mxu0 %v142
    %874 = vmatpush.msra.mxu0 %v140
    %875 = vmatpush.msra.mxu0 %v138
    %876 = vmatpush.msra.mxu0 %v136
    %877 = vmatpush.msra.mxu0 %v134
    %878 = vmatpush.msra.mxu0 %v132
    %879 = vmatpush.msra.mxu0 %v130
    %880 = vmatmul.f32.gmra.mxu0 %v842
    %v881 = vpop.f32.mrf.mxu0
    %v882 = vadd.f32 0.0, %v881
    %883 = vdwg.mxu0
    %v884 = vadd.f32 %v834, %v862
    %v885 = vadd.f32 %v835, %v882
    %v886 = vxor.u32 %v885, 2147483648
    %v887 = vmul.f32 %v886, 1.442695
    %v888 = vpow.pop %v887
    %v889 = vadd.f32 %v888, 1.0
    %v890 = vrcp.pop %v889
    %v891 = vmul.f32 %v889, %v890
    %v892 = vsub.f32 1.0, %v891
    %v893 = vmul.f32 %v890, %v892
    %v894 = vadd.f32 %v890, %v893
    %vm895 = vweird.f32 %v889
    %vm896 = vweird.f32 %v890
    %vm897 = vmor %vm895, %vm896
    %v898 = vsel %vm897, %v890, %v894
    %v899 = vand.u32 2147483647, %v889
    %vm900 = vcmp.eq.f32.partialorder %v899, 8.507059e+37
    %v901 = vand.u32 %v889, 2147483648
    %v902 = vor.u32 1.1754944e-38, %v901
    %v903 = vsel %vm900, %v902, %v898
    %v904 = vmul.f32 1.0, %v903
    %v905 = vsub.f32 %v822, %v904
    %v906 = vxor.u32 %v884, 2147483648
    %v907 = vmul.f32 %v906, 1.442695
    %v908 = vpow.pop %v907
    %v909 = vadd.f32 %v908, 1.0
    %v910 = vrcp.pop %v909
    %v911 = vmul.f32 %v909, %v910
    %v912 = vsub.f32 1.0, %v911
    %v913 = vmul.f32 %v910, %v912
    %v914 = vadd.f32 %v910, %v913
    %vm915 = vweird.f32 %v909
    %vm916 = vweird.f32 %v910
    %vm917 = vmor %vm915, %vm916
    %v918 = vsel %vm917, %v910, %v914
    %v919 = vand.u32 2147483647, %v909
    %vm920 = vcmp.eq.f32.partialorder %v919, 8.507059e+37
    %v921 = vand.u32 %v909, 2147483648
    %v922 = vor.u32 1.1754944e-38, %v921
    %v923 = vsel %vm920, %v922, %v918
    %v924 = vmul.f32 1.0, %v923
    %v925 = vtanh.pop %v884
    %v926 = vmul.f32 %v924, %v905
    %928 = vrot.lane.b32.xlu0 %v925, 64
    %v929 = vpop.permute.xlu0 %928
    %v931 = vmul.f32 %v924, %v929
    %933 = vrot.lane.b32.xlu0 %v931, 96
    %v934 = vpop.permute.xlu0 %933
    %v936 = vadd.f32 %v926, %v934
    %v937 = vtanh.pop %v936
    %939 = vrot.lane.b32.xlu0 %v937, 64
    %v940 = vpop.permute.xlu0 %939
    %v942 = vmul.f32 %v924, %v940
    %944 = vrot.lane.b32.xlu0 %v942, 64
    %v945 = vpop.permute.xlu0 %944
    %947 = vst.msk [vmem:[#allocation3 + $0x30] sm:$0xff] %vm120, %v945
    %v948 = vld [vmem:[#allocation2 + $0x70] sm:$0xff]
    %v949 = vld [vmem:[#allocation2 + $0x78] sm:$0xff]
    %951 = vrot.lane.b32.xlu0 %v936, 32
    %v952 = vpop.permute.xlu0 %951
    %v954 = vsel %vm120, %v945, %v952
    %v956 = vsel %vm148, %v954, 0
    %958 = vmatpush.msra.mxu0 0.0
    %959 = vmatpush.msra.mxu0 0.0
    %960 = vmatpush.msra.mxu0 0.0
    %961 = vmatpush.msra.mxu0 0.0
    %962 = vmatpush.msra.mxu0 0.0
    %963 = vmatpush.msra.mxu0 0.0
    %964 = vmatpush.msra.mxu0 0.0
    %965 = vmatpush.msra.mxu0 0.0
    %966 = vmatpush.msra.mxu0 %v143
    %967 = vmatpush.msra.mxu0 %v141
    %968 = vmatpush.msra.mxu0 %v139
    %969 = vmatpush.msra.mxu0 %v137
    %970 = vmatpush.msra.mxu0 %v135
    %971 = vmatpush.msra.mxu0 %v133
    %972 = vmatpush.msra.mxu0 %v131
    %973 = vmatpush.msra.mxu0 %v129
    %974 = vmatmul.f32.gmra.mxu0 %v956
    %v975 = vpop.f32.mrf.mxu0
    %v976 = vadd.f32 0.0, %v975
    %977 = vdwg.mxu0
    %978 = vmatpush.msra.mxu0 0.0
    %979 = vmatpush.msra.mxu0 0.0
    %980 = vmatpush.msra.mxu0 0.0
    %981 = vmatpush.msra.mxu0 0.0
    %982 = vmatpush.msra.mxu0 0.0
    %983 = vmatpush.msra.mxu0 0.0
    %984 = vmatpush.msra.mxu0 0.0
    %985 = vmatpush.msra.mxu0 0.0
    %986 = vmatpush.msra.mxu0 %v144
    %987 = vmatpush.msra.mxu0 %v142
    %988 = vmatpush.msra.mxu0 %v140
    %989 = vmatpush.msra.mxu0 %v138
    %990 = vmatpush.msra.mxu0 %v136
    %991 = vmatpush.msra.mxu0 %v134
    %992 = vmatpush.msra.mxu0 %v132
    %993 = vmatpush.msra.mxu0 %v130
    %994 = vmatmul.f32.gmra.mxu0 %v956
    %v995 = vpop.f32.mrf.mxu0
    %v996 = vadd.f32 0.0, %v995
    %997 = vdwg.mxu0
    %v998 = vadd.f32 %v948, %v976
    %v999 = vadd.f32 %v949, %v996
    %v1000 = vxor.u32 %v999, 2147483648
    %v1001 = vmul.f32 %v1000, 1.442695
    %v1002 = vpow.pop %v1001
    %v1003 = vadd.f32 %v1002, 1.0
    %v1004 = vrcp.pop %v1003
    %v1005 = vmul.f32 %v1003, %v1004
    %v1006 = vsub.f32 1.0, %v1005
    %v1007 = vmul.f32 %v1004, %v1006
    %v1008 = vadd.f32 %v1004, %v1007
    %vm1009 = vweird.f32 %v1003
    %vm1010 = vweird.f32 %v1004
    %vm1011 = vmor %vm1009, %vm1010
    %v1012 = vsel %vm1011, %v1004, %v1008
    %v1013 = vand.u32 2147483647, %v1003
    %vm1014 = vcmp.eq.f32.partialorder %v1013, 8.507059e+37
    %v1015 = vand.u32 %v1003, 2147483648
    %v1016 = vor.u32 1.1754944e-38, %v1015
    %v1017 = vsel %vm1014, %v1016, %v1012
    %v1018 = vmul.f32 1.0, %v1017
    %v1019 = vsub.f32 %v936, %v1018
    %v1020 = vxor.u32 %v998, 2147483648
    %v1021 = vmul.f32 %v1020, 1.442695
    %v1022 = vpow.pop %v1021
    %v1023 = vadd.f32 %v1022, 1.0
    %v1024 = vrcp.pop %v1023
    %v1025 = vmul.f32 %v1023, %v1024
    %v1026 = vsub.f32 1.0, %v1025
    %v1027 = vmul.f32 %v1024, %v1026
    %v1028 = vadd.f32 %v1024, %v1027
    %vm1029 = vweird.f32 %v1023
    %vm1030 = vweird.f32 %v1024
    %vm1031 = vmor %vm1029, %vm1030
    %v1032 = vsel %vm1031, %v1024, %v1028
    %v1033 = vand.u32 2147483647, %v1023
    %vm1034 = vcmp.eq.f32.partialorder %v1033, 8.507059e+37
    %v1035 = vand.u32 %v1023, 2147483648
    %v1036 = vor.u32 1.1754944e-38, %v1035
    %v1037 = vsel %vm1034, %v1036, %v1032
    %v1038 = vmul.f32 1.0, %v1037
    %v1039 = vtanh.pop %v998
    %v1040 = vmul.f32 %v1038, %v1019
    %1042 = vrot.lane.b32.xlu0 %v1039, 64
    %v1043 = vpop.permute.xlu0 %1042
    %v1045 = vmul.f32 %v1038, %v1043
    %1047 = vrot.lane.b32.xlu0 %v1045, 96
    %v1048 = vpop.permute.xlu0 %1047
    %v1050 = vadd.f32 %v1040, %v1048
    %v1051 = vtanh.pop %v1050
    %1053 = vrot.lane.b32.xlu0 %v1051, 64
    %v1054 = vpop.permute.xlu0 %1053
    %v1056 = vmul.f32 %v1038, %v1054
    %1058 = vrot.lane.b32.xlu0 %v1056, 64
    %v1059 = vpop.permute.xlu0 %1058
    %1061 = vst.msk [vmem:[#allocation3 + $0x38] sm:$0xff] %vm120, %v1059
    %v1062 = vld [vmem:[#allocation6 + $0xb0] sm:$0xff]
    %v1063 = vld [vmem:[#allocation6 + $0xc0] sm:$0xff]
    %v1064 = vld [vmem:[#allocation6 + $0xd0] sm:$0xff]
    %v1065 = vld [vmem:[#allocation6 + $0xe0] sm:$0xff]
    %v1066 = vld [vmem:[#allocation6 + $0xf0] ss:$0 sm:$0xff]
    %v1067 = vld [vmem:[#allocation6 + $0x180] ss:$0 sm:$0xff]
    %v1068 = vld [vmem:[#allocation3] sm:$0xff]
    %v1069 = vld [vmem:[#allocation3 + $0x8] sm:$0xff]
    %v1070 = vld [vmem:[#allocation3 + $0x10] sm:$0xff]
    %v1071 = vld [vmem:[#allocation3 + $0x18] sm:$0xff]
    %v1072 = vld [vmem:[#allocation3 + $0x20] sm:$0xff]
    %v1073 = vld [vmem:[#allocation3 + $0x28] sm:$0xff]
    %v1074 = vld [vmem:[#allocation3 + $0x30] sm:$0xff]
    %v1075 = vld [vmem:[#allocation3 + $0x38] sm:$0xff]
    %v1077 = vsel %vm120, %v1068, 0
    %v1080 = vsel %vm120, %v1069, 0
    %v1083 = vsel %vm120, %v1070, 0
    %v1086 = vsel %vm120, %v1071, 0
    %v1089 = vsel %vm120, %v1072, 0
    %v1092 = vsel %vm120, %v1073, 0
    %v1095 = vsel %vm120, %v1074, 0
    %v1098 = vsel %vm120, %v1075, 0
    %1100 = vmatpush.msra.mxu0 0.0
    %1101 = vmatpush.msra.mxu0 0.0
    %1102 = vmatpush.msra.mxu0 0.0
    %1103 = vmatpush.msra.mxu0 0.0
    %1104 = vmatpush.msra.mxu0 0.0
    %1105 = vmatpush.msra.mxu0 0.0
    %1106 = vmatpush.msra.mxu0 0.0
    %1107 = vmatpush.msra.mxu0 0.0
    %1108 = vmatpush.msra.mxu0 0.0
    %1109 = vmatpush.msra.mxu0 0.0
    %1110 = vmatpush.msra.mxu0 0.0
    %1111 = vmatpush.msra.mxu0 0.0
    %1112 = vmatpush.msra.mxu0 %v1065
    %1113 = vmatpush.msra.mxu0 %v1064
    %1114 = vmatpush.msra.mxu0 %v1063
    %1115 = vmatpush.msra.mxu0 %v1062
    %1116 = vmatmul.f32.gmra.mxu0 %v1077
    %v1117 = vpop.f32.mrf.mxu0
    %v1118 = vadd.f32 %v1066, %v1117
    %1119 = vmatmul.f32.gmra.mxu0 %v1080
    %v1120 = vpop.f32.mrf.mxu0
    %v1121 = vadd.f32 %v1066, %v1120
    %1122 = vmatmul.f32.gmra.mxu0 %v1083
    %v1123 = vpop.f32.mrf.mxu0
    %v1124 = vadd.f32 %v1066, %v1123
    %1125 = vmatmul.f32.gmra.mxu0 %v1086
    %v1126 = vpop.f32.mrf.mxu0
    %v1127 = vadd.f32 %v1066, %v1126
    %1128 = vmatmul.f32.gmra.mxu0 %v1089
    %v1129 = vpop.f32.mrf.mxu0
    %v1130 = vadd.f32 %v1066, %v1129
    %1131 = vmatmul.f32.gmra.mxu0 %v1092
    %v1132 = vpop.f32.mrf.mxu0
    %v1133 = vadd.f32 %v1066, %v1132
    %1134 = vmatmul.f32.gmra.mxu0 %v1095
    %v1135 = vpop.f32.mrf.mxu0
    %v1136 = vadd.f32 %v1066, %v1135
    %1137 = vmatmul.f32.gmra.mxu0 %v1098
    %v1138 = vpop.f32.mrf.mxu0
    %v1139 = vadd.f32 %v1066, %v1138
    %1140 = vdwg.mxu0
    %1141 = vst [vmem:[#allocation4] sm:$0xff] %v1118
    %1142 = vst [vmem:[#allocation4 + $0x10] sm:$0xff] %v1121
    %1143 = vst [vmem:[#allocation4 + $0x20] sm:$0xff] %v1124
    %1144 = vst [vmem:[#allocation4 + $0x30] sm:$0xff] %v1127
    %1145 = vst [vmem:[#allocation4 + $0x40] sm:$0xff] %v1130
    %1146 = vst [vmem:[#allocation4 + $0x50] sm:$0xff] %v1133
    %1147 = vst [vmem:[#allocation4 + $0x60] sm:$0xff] %v1136
    %1148 = vst [vmem:[#allocation4 + $0x70] sm:$0xff] %v1139
    %1149 = vst.msk [vmem:[#allocation4 + $0x8] sm:$0xff] %vm120, %v1067
    %1150 = vst.msk [vmem:[#allocation4 + $0x18] sm:$0xff] %vm120, %v1067
    %1151 = vst.msk [vmem:[#allocation4 + $0x28] sm:$0xff] %vm120, %v1067
    %1152 = vst.msk [vmem:[#allocation4 + $0x38] sm:$0xff] %vm120, %v1067
    %1153 = vst.msk [vmem:[#allocation4 + $0x48] sm:$0xff] %vm120, %v1067
    %1154 = vst.msk [vmem:[#allocation4 + $0x58] sm:$0xff] %vm120, %v1067
    %1155 = vst.msk [vmem:[#allocation4 + $0x68] sm:$0xff] %vm120, %v1067
    %1156 = vst.msk [vmem:[#allocation4 + $0x78] sm:$0xff] %vm120, %v1067
    %v1157 = vld [vmem:[#allocation6 + $0x100] sm:$0xff]
    %v1158 = vld [vmem:[#allocation6 + $0x108] sm:$0xff]
    %v1159 = vld [vmem:[#allocation6 + $0x110] sm:$0xff]
    %v1160 = vld [vmem:[#allocation6 + $0x118] sm:$0xff]
    %v1161 = vld [vmem:[#allocation6 + $0x120] sm:$0xff]
    %v1162 = vld [vmem:[#allocation6 + $0x128] sm:$0xff]
    %v1163 = vld [vmem:[#allocation6 + $0x130] sm:$0xff]
    %v1164 = vld [vmem:[#allocation6 + $0x138] sm:$0xff]
    %v1165 = vld [vmem:[#allocation6 + $0x140] sm:$0xff]
    %v1166 = vld [vmem:[#allocation6 + $0x148] sm:$0xff]
    %v1167 = vld [vmem:[#allocation6 + $0x150] sm:$0xff]
    %v1168 = vld [vmem:[#allocation6 + $0x158] sm:$0xff]
    %v1169 = vld [vmem:[#allocation6 + $0x160] sm:$0xff]
    %v1170 = vld [vmem:[#allocation6 + $0x168] sm:$0xff]
    %v1171 = vld [vmem:[#allocation6 + $0x170] sm:$0xff]
    %v1172 = vld [vmem:[#allocation6 + $0x178] sm:$0xff]
    %v1173 = vld [vmem:[#allocation4] sm:$0xff]
    %v1174 = vld [vmem:[#allocation4 + $0x8] sm:$0xff]
    %v1176 = vsel %vm148, 0.0, 0
    %1178 = vmatpush.msra.mxu0 0.0
    %1179 = vmatpush.msra.mxu0 0.0
    %1180 = vmatpush.msra.mxu0 0.0
    %1181 = vmatpush.msra.mxu0 0.0
    %1182 = vmatpush.msra.mxu0 0.0
    %1183 = vmatpush.msra.mxu0 0.0
    %1184 = vmatpush.msra.mxu0 0.0
    %1185 = vmatpush.msra.mxu0 0.0
    %1186 = vmatpush.msra.mxu0 %v1171
    %1187 = vmatpush.msra.mxu0 %v1169
    %1188 = vmatpush.msra.mxu0 %v1167
    %1189 = vmatpush.msra.mxu0 %v1165
    %1190 = vmatpush.msra.mxu0 %v1163
    %1191 = vmatpush.msra.mxu0 %v1161
    %1192 = vmatpush.msra.mxu0 %v1159
    %1193 = vmatpush.msra.mxu0 %v1157
    %1194 = vmatmul.f32.gmra.mxu0 %v1176
    %v1195 = vpop.f32.mrf.mxu0
    %v1196 = vadd.f32 0.0, %v1195
    %1197 = vdwg.mxu0
    %1198 = vmatpush.msra.mxu0 0.0
    %1199 = vmatpush.msra.mxu0 0.0
    %1200 = vmatpush.msra.mxu0 0.0
    %1201 = vmatpush.msra.mxu0 0.0
    %1202 = vmatpush.msra.mxu0 0.0
    %1203 = vmatpush.msra.mxu0 0.0
    %1204 = vmatpush.msra.mxu0 0.0
    %1205 = vmatpush.msra.mxu0 0.0
    %1206 = vmatpush.msra.mxu0 %v1172
    %1207 = vmatpush.msra.mxu0 %v1170
    %1208 = vmatpush.msra.mxu0 %v1168
    %1209 = vmatpush.msra.mxu0 %v1166
    %1210 = vmatpush.msra.mxu0 %v1164
    %1211 = vmatpush.msra.mxu0 %v1162
    %1212 = vmatpush.msra.mxu0 %v1160
    %1213 = vmatpush.msra.mxu0 %v1158
    %1214 = vmatmul.f32.gmra.mxu0 %v1176
    %v1215 = vpop.f32.mrf.mxu0
    %v1216 = vadd.f32 0.0, %v1215
    %1217 = vdwg.mxu0
    %v1218 = vadd.f32 %v1173, %v1196
    %v1219 = vadd.f32 %v1174, %v1216
    %v1220 = vxor.u32 %v1219, 2147483648
    %v1221 = vmul.f32 %v1220, 1.442695
    %v1222 = vpow.pop %v1221
    %v1223 = vadd.f32 %v1222, 1.0
    %v1224 = vrcp.pop %v1223
    %v1225 = vmul.f32 %v1223, %v1224
    %v1226 = vsub.f32 1.0, %v1225
    %v1227 = vmul.f32 %v1224, %v1226
    %v1228 = vadd.f32 %v1224, %v1227
    %vm1229 = vweird.f32 %v1223
    %vm1230 = vweird.f32 %v1224
    %vm1231 = vmor %vm1229, %vm1230
    %v1232 = vsel %vm1231, %v1224, %v1228
    %v1233 = vand.u32 2147483647, %v1223
    %vm1234 = vcmp.eq.f32.partialorder %v1233, 8.507059e+37
    %v1235 = vand.u32 %v1223, 2147483648
    %v1236 = vor.u32 1.1754944e-38, %v1235
    %v1237 = vsel %vm1234, %v1236, %v1232
    %v1238 = vmul.f32 1.0, %v1237
    %v1239 = vsub.f32 0.0, %v1238
    %v1240 = vxor.u32 %v1218, 2147483648
    %v1241 = vmul.f32 %v1240, 1.442695
    %v1242 = vpow.pop %v1241
    %v1243 = vadd.f32 %v1242, 1.0
    %v1244 = vrcp.pop %v1243
    %v1245 = vmul.f32 %v1243, %v1244
    %v1246 = vsub.f32 1.0, %v1245
    %v1247 = vmul.f32 %v1244, %v1246
    %v1248 = vadd.f32 %v1244, %v1247
    %vm1249 = vweird.f32 %v1243
    %vm1250 = vweird.f32 %v1244
    %vm1251 = vmor %vm1249, %vm1250
    %v1252 = vsel %vm1251, %v1244, %v1248
    %v1253 = vand.u32 2147483647, %v1243
    %vm1254 = vcmp.eq.f32.partialorder %v1253, 8.507059e+37
    %v1255 = vand.u32 %v1243, 2147483648
    %v1256 = vor.u32 1.1754944e-38, %v1255
    %v1257 = vsel %vm1254, %v1256, %v1252
    %v1258 = vmul.f32 1.0, %v1257
    %v1259 = vtanh.pop %v1218
    %v1260 = vmul.f32 %v1258, %v1239
    %1262 = vrot.lane.b32.xlu0 %v1259, 64
    %v1263 = vpop.permute.xlu0 %1262
    %v1265 = vmul.f32 %v1258, %v1263
    %1267 = vrot.lane.b32.xlu0 %v1265, 96
    %v1268 = vpop.permute.xlu0 %1267
    %v1270 = vadd.f32 %v1260, %v1268
    %v1271 = vtanh.pop %v1270
    %1273 = vrot.lane.b32.xlu0 %v1271, 64
    %v1274 = vpop.permute.xlu0 %1273
    %v1276 = vmul.f32 %v1258, %v1274
    %1278 = vrot.lane.b32.xlu0 %v1276, 64
    %v1279 = vpop.permute.xlu0 %1278
    %1281 = vst.msk [vmem:[#allocation5] sm:$0xff] %vm120, %v1279
    %v1282 = vld [vmem:[#allocation4 + $0x10] sm:$0xff]
    %v1283 = vld [vmem:[#allocation4 + $0x18] sm:$0xff]
    %1285 = vrot.lane.b32.xlu0 %v1270, 32
    %v1286 = vpop.permute.xlu0 %1285
    %v1288 = vsel %vm120, %v1279, %v1286
    %v1290 = vsel %vm148, %v1288, 0
    %1292 = vmatpush.msra.mxu0 0.0
    %1293 = vmatpush.msra.mxu0 0.0
    %1294 = vmatpush.msra.mxu0 0.0
    %1295 = vmatpush.msra.mxu0 0.0
    %1296 = vmatpush.msra.mxu0 0.0
    %1297 = vmatpush.msra.mxu0 0.0
    %1298 = vmatpush.msra.mxu0 0.0
    %1299 = vmatpush.msra.mxu0 0.0
    %1300 = vmatpush.msra.mxu0 %v1171
    %1301 = vmatpush.msra.mxu0 %v1169
    %1302 = vmatpush.msra.mxu0 %v1167
    %1303 = vmatpush.msra.mxu0 %v1165
    %1304 = vmatpush.msra.mxu0 %v1163
    %1305 = vmatpush.msra.mxu0 %v1161
    %1306 = vmatpush.msra.mxu0 %v1159
    %1307 = vmatpush.msra.mxu0 %v1157
    %1308 = vmatmul.f32.gmra.mxu0 %v1290
    %v1309 = vpop.f32.mrf.mxu0
    %v1310 = vadd.f32 0.0, %v1309
    %1311 = vdwg.mxu0
    %1312 = vmatpush.msra.mxu0 0.0
    %1313 = vmatpush.msra.mxu0 0.0
    %1314 = vmatpush.msra.mxu0 0.0
    %1315 = vmatpush.msra.mxu0 0.0
    %1316 = vmatpush.msra.mxu0 0.0
    %1317 = vmatpush.msra.mxu0 0.0
    %1318 = vmatpush.msra.mxu0 0.0
    %1319 = vmatpush.msra.mxu0 0.0
    %1320 = vmatpush.msra.mxu0 %v1172
    %1321 = vmatpush.msra.mxu0 %v1170
    %1322 = vmatpush.msra.mxu0 %v1168
    %1323 = vmatpush.msra.mxu0 %v1166
    %1324 = vmatpush.msra.mxu0 %v1164
    %1325 = vmatpush.msra.mxu0 %v1162
    %1326 = vmatpush.msra.mxu0 %v1160
    %1327 = vmatpush.msra.mxu0 %v1158
    %1328 = vmatmul.f32.gmra.mxu0 %v1290
    %v1329 = vpop.f32.mrf.mxu0
    %v1330 = vadd.f32 0.0, %v1329
    %1331 = vdwg.mxu0
    %v1332 = vadd.f32 %v1282, %v1310
    %v1333 = vadd.f32 %v1283, %v1330
    %v1334 = vxor.u32 %v1333, 2147483648
    %v1335 = vmul.f32 %v1334, 1.442695
    %v1336 = vpow.pop %v1335
    %v1337 = vadd.f32 %v1336, 1.0
    %v1338 = vrcp.pop %v1337
    %v1339 = vmul.f32 %v1337, %v1338
    %v1340 = vsub.f32 1.0, %v1339
    %v1341 = vmul.f32 %v1338, %v1340
    %v1342 = vadd.f32 %v1338, %v1341
    %vm1343 = vweird.f32 %v1337
    %vm1344 = vweird.f32 %v1338
    %vm1345 = vmor %vm1343, %vm1344
    %v1346 = vsel %vm1345, %v1338, %v1342
    %v1347 = vand.u32 2147483647, %v1337
    %vm1348 = vcmp.eq.f32.partialorder %v1347, 8.507059e+37
    %v1349 = vand.u32 %v1337, 2147483648
    %v1350 = vor.u32 1.1754944e-38, %v1349
    %v1351 = vsel %vm1348, %v1350, %v1346
    %v1352 = vmul.f32 1.0, %v1351
    %v1353 = vsub.f32 %v1270, %v1352
    %v1354 = vxor.u32 %v1332, 2147483648
    %v1355 = vmul.f32 %v1354, 1.442695
    %v1356 = vpow.pop %v1355
    %v1357 = vadd.f32 %v1356, 1.0
    %v1358 = vrcp.pop %v1357
    %v1359 = vmul.f32 %v1357, %v1358
    %v1360 = vsub.f32 1.0, %v1359
    %v1361 = vmul.f32 %v1358, %v1360
    %v1362 = vadd.f32 %v1358, %v1361
    %vm1363 = vweird.f32 %v1357
    %vm1364 = vweird.f32 %v1358
    %vm1365 = vmor %vm1363, %vm1364
    %v1366 = vsel %vm1365, %v1358, %v1362
    %v1367 = vand.u32 2147483647, %v1357
    %vm1368 = vcmp.eq.f32.partialorder %v1367, 8.507059e+37
    %v1369 = vand.u32 %v1357, 2147483648
    %v1370 = vor.u32 1.1754944e-38, %v1369
    %v1371 = vsel %vm1368, %v1370, %v1366
    %v1372 = vmul.f32 1.0, %v1371
    %v1373 = vtanh.pop %v1332
    %v1374 = vmul.f32 %v1372, %v1353
    %1376 = vrot.lane.b32.xlu0 %v1373, 64
    %v1377 = vpop.permute.xlu0 %1376
    %v1379 = vmul.f32 %v1372, %v1377
    %1381 = vrot.lane.b32.xlu0 %v1379, 96
    %v1382 = vpop.permute.xlu0 %1381
    %v1384 = vadd.f32 %v1374, %v1382
    %v1385 = vtanh.pop %v1384
    %1387 = vrot.lane.b32.xlu0 %v1385, 64
    %v1388 = vpop.permute.xlu0 %1387
    %v1390 = vmul.f32 %v1372, %v1388
    %1392 = vrot.lane.b32.xlu0 %v1390, 64
    %v1393 = vpop.permute.xlu0 %1392
    %1395 = vst.msk [vmem:[#allocation5 + $0x8] sm:$0xff] %vm120, %v1393
    %v1396 = vld [vmem:[#allocation4 + $0x20] sm:$0xff]
    %v1397 = vld [vmem:[#allocation4 + $0x28] sm:$0xff]
    %1399 = vrot.lane.b32.xlu0 %v1384, 32
    %v1400 = vpop.permute.xlu0 %1399
    %v1402 = vsel %vm120, %v1393, %v1400
    %v1404 = vsel %vm148, %v1402, 0
    %1406 = vmatpush.msra.mxu0 0.0
    %1407 = vmatpush.msra.mxu0 0.0
    %1408 = vmatpush.msra.mxu0 0.0
    %1409 = vmatpush.msra.mxu0 0.0
    %1410 = vmatpush.msra.mxu0 0.0
    %1411 = vmatpush.msra.mxu0 0.0
    %1412 = vmatpush.msra.mxu0 0.0
    %1413 = vmatpush.msra.mxu0 0.0
    %1414 = vmatpush.msra.mxu0 %v1171
    %1415 = vmatpush.msra.mxu0 %v1169
    %1416 = vmatpush.msra.mxu0 %v1167
    %1417 = vmatpush.msra.mxu0 %v1165
    %1418 = vmatpush.msra.mxu0 %v1163
    %1419 = vmatpush.msra.mxu0 %v1161
    %1420 = vmatpush.msra.mxu0 %v1159
    %1421 = vmatpush.msra.mxu0 %v1157
    %1422 = vmatmul.f32.gmra.mxu0 %v1404
    %v1423 = vpop.f32.mrf.mxu0
    %v1424 = vadd.f32 0.0, %v1423
    %1425 = vdwg.mxu0
    %1426 = vmatpush.msra.mxu0 0.0
    %1427 = vmatpush.msra.mxu0 0.0
    %1428 = vmatpush.msra.mxu0 0.0
    %1429 = vmatpush.msra.mxu0 0.0
    %1430 = vmatpush.msra.mxu0 0.0
    %1431 = vmatpush.msra.mxu0 0.0
    %1432 = vmatpush.msra.mxu0 0.0
    %1433 = vmatpush.msra.mxu0 0.0
    %1434 = vmatpush.msra.mxu0 %v1172
    %1435 = vmatpush.msra.mxu0 %v1170
    %1436 = vmatpush.msra.mxu0 %v1168
    %1437 = vmatpush.msra.mxu0 %v1166
    %1438 = vmatpush.msra.mxu0 %v1164
    %1439 = vmatpush.msra.mxu0 %v1162
    %1440 = vmatpush.msra.mxu0 %v1160
    %1441 = vmatpush.msra.mxu0 %v1158
    %1442 = vmatmul.f32.gmra.mxu0 %v1404
    %v1443 = vpop.f32.mrf.mxu0
    %v1444 = vadd.f32 0.0, %v1443
    %1445 = vdwg.mxu0
    %v1446 = vadd.f32 %v1396, %v1424
    %v1447 = vadd.f32 %v1397, %v1444
    %v1448 = vxor.u32 %v1447, 2147483648
    %v1449 = vmul.f32 %v1448, 1.442695
    %v1450 = vpow.pop %v1449
    %v1451 = vadd.f32 %v1450, 1.0
    %v1452 = vrcp.pop %v1451
    %v1453 = vmul.f32 %v1451, %v1452
    %v1454 = vsub.f32 1.0, %v1453
    %v1455 = vmul.f32 %v1452, %v1454
    %v1456 = vadd.f32 %v1452, %v1455
    %vm1457 = vweird.f32 %v1451
    %vm1458 = vweird.f32 %v1452
    %vm1459 = vmor %vm1457, %vm1458
    %v1460 = vsel %vm1459, %v1452, %v1456
    %v1461 = vand.u32 2147483647, %v1451
    %vm1462 = vcmp.eq.f32.partialorder %v1461, 8.507059e+37
    %v1463 = vand.u32 %v1451, 2147483648
    %v1464 = vor.u32 1.1754944e-38, %v1463
    %v1465 = vsel %vm1462, %v1464, %v1460
    %v1466 = vmul.f32 1.0, %v1465
    %v1467 = vsub.f32 %v1384, %v1466
    %v1468 = vxor.u32 %v1446, 2147483648
    %v1469 = vmul.f32 %v1468, 1.442695
    %v1470 = vpow.pop %v1469
    %v1471 = vadd.f32 %v1470, 1.0
    %v1472 = vrcp.pop %v1471
    %v1473 = vmul.f32 %v1471, %v1472
    %v1474 = vsub.f32 1.0, %v1473
    %v1475 = vmul.f32 %v1472, %v1474
    %v1476 = vadd.f32 %v1472, %v1475
    %vm1477 = vweird.f32 %v1471
    %vm1478 = vweird.f32 %v1472
    %vm1479 = vmor %vm1477, %vm1478
    %v1480 = vsel %vm1479, %v1472, %v1476
    %v1481 = vand.u32 2147483647, %v1471
    %vm1482 = vcmp.eq.f32.partialorder %v1481, 8.507059e+37
    %v1483 = vand.u32 %v1471, 2147483648
    %v1484 = vor.u32 1.1754944e-38, %v1483
    %v1485 = vsel %vm1482, %v1484, %v1480
    %v1486 = vmul.f32 1.0, %v1485
    %v1487 = vtanh.pop %v1446
    %v1488 = vmul.f32 %v1486, %v1467
    %1490 = vrot.lane.b32.xlu0 %v1487, 64
    %v1491 = vpop.permute.xlu0 %1490
    %v1493 = vmul.f32 %v1486, %v1491
    %1495 = vrot.lane.b32.xlu0 %v1493, 96
    %v1496 = vpop.permute.xlu0 %1495
    %v1498 = vadd.f32 %v1488, %v1496
    %v1499 = vtanh.pop %v1498
    %1501 = vrot.lane.b32.xlu0 %v1499, 64
    %v1502 = vpop.permute.xlu0 %1501
    %v1504 = vmul.f32 %v1486, %v1502
    %1506 = vrot.lane.b32.xlu0 %v1504, 64
    %v1507 = vpop.permute.xlu0 %1506
    %1509 = vst.msk [vmem:[#allocation5 + $0x10] sm:$0xff] %vm120, %v1507
    %v1510 = vld [vmem:[#allocation4 + $0x30] sm:$0xff]
    %v1511 = vld [vmem:[#allocation4 + $0x38] sm:$0xff]
    %1513 = vrot.lane.b32.xlu0 %v1498, 32
    %v1514 = vpop.permute.xlu0 %1513
    %v1516 = vsel %vm120, %v1507, %v1514
    %v1518 = vsel %vm148, %v1516, 0
    %1520 = vmatpush.msra.mxu0 0.0
    %1521 = vmatpush.msra.mxu0 0.0
    %1522 = vmatpush.msra.mxu0 0.0
    %1523 = vmatpush.msra.mxu0 0.0
    %1524 = vmatpush.msra.mxu0 0.0
    %1525 = vmatpush.msra.mxu0 0.0
    %1526 = vmatpush.msra.mxu0 0.0
    %1527 = vmatpush.msra.mxu0 0.0
    %1528 = vmatpush.msra.mxu0 %v1171
    %1529 = vmatpush.msra.mxu0 %v1169
    %1530 = vmatpush.msra.mxu0 %v1167
    %1531 = vmatpush.msra.mxu0 %v1165
    %1532 = vmatpush.msra.mxu0 %v1163
    %1533 = vmatpush.msra.mxu0 %v1161
    %1534 = vmatpush.msra.mxu0 %v1159
    %1535 = vmatpush.msra.mxu0 %v1157
    %1536 = vmatmul.f32.gmra.mxu0 %v1518
    %v1537 = vpop.f32.mrf.mxu0
    %v1538 = vadd.f32 0.0, %v1537
    %1539 = vdwg.mxu0
    %1540 = vmatpush.msra.mxu0 0.0
    %1541 = vmatpush.msra.mxu0 0.0
    %1542 = vmatpush.msra.mxu0 0.0
    %1543 = vmatpush.msra.mxu0 0.0
    %1544 = vmatpush.msra.mxu0 0.0
    %1545 = vmatpush.msra.mxu0 0.0
    %1546 = vmatpush.msra.mxu0 0.0
    %1547 = vmatpush.msra.mxu0 0.0
    %1548 = vmatpush.msra.mxu0 %v1172
    %1549 = vmatpush.msra.mxu0 %v1170
    %1550 = vmatpush.msra.mxu0 %v1168
    %1551 = vmatpush.msra.mxu0 %v1166
    %1552 = vmatpush.msra.mxu0 %v1164
    %1553 = vmatpush.msra.mxu0 %v1162
    %1554 = vmatpush.msra.mxu0 %v1160
    %1555 = vmatpush.msra.mxu0 %v1158
    %1556 = vmatmul.f32.gmra.mxu0 %v1518
    %v1557 = vpop.f32.mrf.mxu0
    %v1558 = vadd.f32 0.0, %v1557
    %1559 = vdwg.mxu0
    %v1560 = vadd.f32 %v1510, %v1538
    %v1561 = vadd.f32 %v1511, %v1558
    %v1562 = vxor.u32 %v1561, 2147483648
    %v1563 = vmul.f32 %v1562, 1.442695
    %v1564 = vpow.pop %v1563
    %v1565 = vadd.f32 %v1564, 1.0
    %v1566 = vrcp.pop %v1565
    %v1567 = vmul.f32 %v1565, %v1566
    %v1568 = vsub.f32 1.0, %v1567
    %v1569 = vmul.f32 %v1566, %v1568
    %v1570 = vadd.f32 %v1566, %v1569
    %vm1571 = vweird.f32 %v1565
    %vm1572 = vweird.f32 %v1566
    %vm1573 = vmor %vm1571, %vm1572
    %v1574 = vsel %vm1573, %v1566, %v1570
    %v1575 = vand.u32 2147483647, %v1565
    %vm1576 = vcmp.eq.f32.partialorder %v1575, 8.507059e+37
    %v1577 = vand.u32 %v1565, 2147483648
    %v1578 = vor.u32 1.1754944e-38, %v1577
    %v1579 = vsel %vm1576, %v1578, %v1574
    %v1580 = vmul.f32 1.0, %v1579
    %v1581 = vsub.f32 %v1498, %v1580
    %v1582 = vxor.u32 %v1560, 2147483648
    %v1583 = vmul.f32 %v1582, 1.442695
    %v1584 = vpow.pop %v1583
    %v1585 = vadd.f32 %v1584, 1.0
    %v1586 = vrcp.pop %v1585
    %v1587 = vmul.f32 %v1585, %v1586
    %v1588 = vsub.f32 1.0, %v1587
    %v1589 = vmul.f32 %v1586, %v1588
    %v1590 = vadd.f32 %v1586, %v1589
    %vm1591 = vweird.f32 %v1585
    %vm1592 = vweird.f32 %v1586
    %vm1593 = vmor %vm1591, %vm1592
    %v1594 = vsel %vm1593, %v1586, %v1590
    %v1595 = vand.u32 2147483647, %v1585
    %vm1596 = vcmp.eq.f32.partialorder %v1595, 8.507059e+37
    %v1597 = vand.u32 %v1585, 2147483648
    %v1598 = vor.u32 1.1754944e-38, %v1597
    %v1599 = vsel %vm1596, %v1598, %v1594
    %v1600 = vmul.f32 1.0, %v1599
    %v1601 = vtanh.pop %v1560
    %v1602 = vmul.f32 %v1600, %v1581
    %1604 = vrot.lane.b32.xlu0 %v1601, 64
    %v1605 = vpop.permute.xlu0 %1604
    %v1607 = vmul.f32 %v1600, %v1605
    %1609 = vrot.lane.b32.xlu0 %v1607, 96
    %v1610 = vpop.permute.xlu0 %1609
    %v1612 = vadd.f32 %v1602, %v1610
    %v1613 = vtanh.pop %v1612
    %1615 = vrot.lane.b32.xlu0 %v1613, 64
    %v1616 = vpop.permute.xlu0 %1615
    %v1618 = vmul.f32 %v1600, %v1616
    %1620 = vrot.lane.b32.xlu0 %v1618, 64
    %v1621 = vpop.permute.xlu0 %1620
    %1623 = vst.msk [vmem:[#allocation5 + $0x18] sm:$0xff] %vm120, %v1621
    %v1624 = vld [vmem:[#allocation4 + $0x40] sm:$0xff]
    %v1625 = vld [vmem:[#allocation4 + $0x48] sm:$0xff]
    %1627 = vrot.lane.b32.xlu0 %v1612, 32
    %v1628 = vpop.permute.xlu0 %1627
    %v1630 = vsel %vm120, %v1621, %v1628
    %v1632 = vsel %vm148, %v1630, 0
    %1634 = vmatpush.msra.mxu0 0.0
    %1635 = vmatpush.msra.mxu0 0.0
    %1636 = vmatpush.msra.mxu0 0.0
    %1637 = vmatpush.msra.mxu0 0.0
    %1638 = vmatpush.msra.mxu0 0.0
    %1639 = vmatpush.msra.mxu0 0.0
    %1640 = vmatpush.msra.mxu0 0.0
    %1641 = vmatpush.msra.mxu0 0.0
    %1642 = vmatpush.msra.mxu0 %v1171
    %1643 = vmatpush.msra.mxu0 %v1169
    %1644 = vmatpush.msra.mxu0 %v1167
    %1645 = vmatpush.msra.mxu0 %v1165
    %1646 = vmatpush.msra.mxu0 %v1163
    %1647 = vmatpush.msra.mxu0 %v1161
    %1648 = vmatpush.msra.mxu0 %v1159
    %1649 = vmatpush.msra.mxu0 %v1157
    %1650 = vmatmul.f32.gmra.mxu0 %v1632
    %v1651 = vpop.f32.mrf.mxu0
    %v1652 = vadd.f32 0.0, %v1651
    %1653 = vdwg.mxu0
    %1654 = vmatpush.msra.mxu0 0.0
    %1655 = vmatpush.msra.mxu0 0.0
    %1656 = vmatpush.msra.mxu0 0.0
    %1657 = vmatpush.msra.mxu0 0.0
    %1658 = vmatpush.msra.mxu0 0.0
    %1659 = vmatpush.msra.mxu0 0.0
    %1660 = vmatpush.msra.mxu0 0.0
    %1661 = vmatpush.msra.mxu0 0.0
    %1662 = vmatpush.msra.mxu0 %v1172
    %1663 = vmatpush.msra.mxu0 %v1170
    %1664 = vmatpush.msra.mxu0 %v1168
    %1665 = vmatpush.msra.mxu0 %v1166
    %1666 = vmatpush.msra.mxu0 %v1164
    %1667 = vmatpush.msra.mxu0 %v1162
    %1668 = vmatpush.msra.mxu0 %v1160
    %1669 = vmatpush.msra.mxu0 %v1158
    %1670 = vmatmul.f32.gmra.mxu0 %v1632
    %v1671 = vpop.f32.mrf.mxu0
    %v1672 = vadd.f32 0.0, %v1671
    %1673 = vdwg.mxu0
    %v1674 = vadd.f32 %v1624, %v1652
    %v1675 = vadd.f32 %v1625, %v1672
    %v1676 = vxor.u32 %v1675, 2147483648
    %v1677 = vmul.f32 %v1676, 1.442695
    %v1678 = vpow.pop %v1677
    %v1679 = vadd.f32 %v1678, 1.0
    %v1680 = vrcp.pop %v1679
    %v1681 = vmul.f32 %v1679, %v1680
    %v1682 = vsub.f32 1.0, %v1681
    %v1683 = vmul.f32 %v1680, %v1682
    %v1684 = vadd.f32 %v1680, %v1683
    %vm1685 = vweird.f32 %v1679
    %vm1686 = vweird.f32 %v1680
    %vm1687 = vmor %vm1685, %vm1686
    %v1688 = vsel %vm1687, %v1680, %v1684
    %v1689 = vand.u32 2147483647, %v1679
    %vm1690 = vcmp.eq.f32.partialorder %v1689, 8.507059e+37
    %v1691 = vand.u32 %v1679, 2147483648
    %v1692 = vor.u32 1.1754944e-38, %v1691
    %v1693 = vsel %vm1690, %v1692, %v1688
    %v1694 = vmul.f32 1.0, %v1693
    %v1695 = vsub.f32 %v1612, %v1694
    %v1696 = vxor.u32 %v1674, 2147483648
    %v1697 = vmul.f32 %v1696, 1.442695
    %v1698 = vpow.pop %v1697
    %v1699 = vadd.f32 %v1698, 1.0
    %v1700 = vrcp.pop %v1699
    %v1701 = vmul.f32 %v1699, %v1700
    %v1702 = vsub.f32 1.0, %v1701
    %v1703 = vmul.f32 %v1700, %v1702
    %v1704 = vadd.f32 %v1700, %v1703
    %vm1705 = vweird.f32 %v1699
    %vm1706 = vweird.f32 %v1700
    %vm1707 = vmor %vm1705, %vm1706
    %v1708 = vsel %vm1707, %v1700, %v1704
    %v1709 = vand.u32 2147483647, %v1699
    %vm1710 = vcmp.eq.f32.partialorder %v1709, 8.507059e+37
    %v1711 = vand.u32 %v1699, 2147483648
    %v1712 = vor.u32 1.1754944e-38, %v1711
    %v1713 = vsel %vm1710, %v1712, %v1708
    %v1714 = vmul.f32 1.0, %v1713
    %v1715 = vtanh.pop %v1674
    %v1716 = vmul.f32 %v1714, %v1695
    %1718 = vrot.lane.b32.xlu0 %v1715, 64
    %v1719 = vpop.permute.xlu0 %1718
    %v1721 = vmul.f32 %v1714, %v1719
    %1723 = vrot.lane.b32.xlu0 %v1721, 96
    %v1724 = vpop.permute.xlu0 %1723
    %v1726 = vadd.f32 %v1716, %v1724
    %v1727 = vtanh.pop %v1726
    %1729 = vrot.lane.b32.xlu0 %v1727, 64
    %v1730 = vpop.permute.xlu0 %1729
    %v1732 = vmul.f32 %v1714, %v1730
    %1734 = vrot.lane.b32.xlu0 %v1732, 64
    %v1735 = vpop.permute.xlu0 %1734
    %1737 = vst.msk [vmem:[#allocation5 + $0x20] sm:$0xff] %vm120, %v1735
    %v1738 = vld [vmem:[#allocation4 + $0x50] sm:$0xff]
    %v1739 = vld [vmem:[#allocation4 + $0x58] sm:$0xff]
    %1741 = vrot.lane.b32.xlu0 %v1726, 32
    %v1742 = vpop.permute.xlu0 %1741
    %v1744 = vsel %vm120, %v1735, %v1742
    %v1746 = vsel %vm148, %v1744, 0
    %1748 = vmatpush.msra.mxu0 0.0
    %1749 = vmatpush.msra.mxu0 0.0
    %1750 = vmatpush.msra.mxu0 0.0
    %1751 = vmatpush.msra.mxu0 0.0
    %1752 = vmatpush.msra.mxu0 0.0
    %1753 = vmatpush.msra.mxu0 0.0
    %1754 = vmatpush.msra.mxu0 0.0
    %1755 = vmatpush.msra.mxu0 0.0
    %1756 = vmatpush.msra.mxu0 %v1171
    %1757 = vmatpush.msra.mxu0 %v1169
    %1758 = vmatpush.msra.mxu0 %v1167
    %1759 = vmatpush.msra.mxu0 %v1165
    %1760 = vmatpush.msra.mxu0 %v1163
    %1761 = vmatpush.msra.mxu0 %v1161
    %1762 = vmatpush.msra.mxu0 %v1159
    %1763 = vmatpush.msra.mxu0 %v1157
    %1764 = vmatmul.f32.gmra.mxu0 %v1746
    %v1765 = vpop.f32.mrf.mxu0
    %v1766 = vadd.f32 0.0, %v1765
    %1767 = vdwg.mxu0
    %1768 = vmatpush.msra.mxu0 0.0
    %1769 = vmatpush.msra.mxu0 0.0
    %1770 = vmatpush.msra.mxu0 0.0
    %1771 = vmatpush.msra.mxu0 0.0
    %1772 = vmatpush.msra.mxu0 0.0
    %1773 = vmatpush.msra.mxu0 0.0
    %1774 = vmatpush.msra.mxu0 0.0
    %1775 = vmatpush.msra.mxu0 0.0
    %1776 = vmatpush.msra.mxu0 %v1172
    %1777 = vmatpush.msra.mxu0 %v1170
    %1778 = vmatpush.msra.mxu0 %v1168
    %1779 = vmatpush.msra.mxu0 %v1166
    %1780 = vmatpush.msra.mxu0 %v1164
    %1781 = vmatpush.msra.mxu0 %v1162
    %1782 = vmatpush.msra.mxu0 %v1160
    %1783 = vmatpush.msra.mxu0 %v1158
    %1784 = vmatmul.f32.gmra.mxu0 %v1746
    %v1785 = vpop.f32.mrf.mxu0
    %v1786 = vadd.f32 0.0, %v1785
    %1787 = vdwg.mxu0
    %v1788 = vadd.f32 %v1738, %v1766
    %v1789 = vadd.f32 %v1739, %v1786
    %v1790 = vxor.u32 %v1789, 2147483648
    %v1791 = vmul.f32 %v1790, 1.442695
    %v1792 = vpow.pop %v1791
    %v1793 = vadd.f32 %v1792, 1.0
    %v1794 = vrcp.pop %v1793
    %v1795 = vmul.f32 %v1793, %v1794
    %v1796 = vsub.f32 1.0, %v1795
    %v1797 = vmul.f32 %v1794, %v1796
    %v1798 = vadd.f32 %v1794, %v1797
    %vm1799 = vweird.f32 %v1793
    %vm1800 = vweird.f32 %v1794
    %vm1801 = vmor %vm1799, %vm1800
    %v1802 = vsel %vm1801, %v1794, %v1798
    %v1803 = vand.u32 2147483647, %v1793
    %vm1804 = vcmp.eq.f32.partialorder %v1803, 8.507059e+37
    %v1805 = vand.u32 %v1793, 2147483648
    %v1806 = vor.u32 1.1754944e-38, %v1805
    %v1807 = vsel %vm1804, %v1806, %v1802
    %v1808 = vmul.f32 1.0, %v1807
    %v1809 = vsub.f32 %v1726, %v1808
    %v1810 = vxor.u32 %v1788, 2147483648
    %v1811 = vmul.f32 %v1810, 1.442695
    %v1812 = vpow.pop %v1811
    %v1813 = vadd.f32 %v1812, 1.0
    %v1814 = vrcp.pop %v1813
    %v1815 = vmul.f32 %v1813, %v1814
    %v1816 = vsub.f32 1.0, %v1815
    %v1817 = vmul.f32 %v1814, %v1816
    %v1818 = vadd.f32 %v1814, %v1817
    %vm1819 = vweird.f32 %v1813
    %vm1820 = vweird.f32 %v1814
    %vm1821 = vmor %vm1819, %vm1820
    %v1822 = vsel %vm1821, %v1814, %v1818
    %v1823 = vand.u32 2147483647, %v1813
    %vm1824 = vcmp.eq.f32.partialorder %v1823, 8.507059e+37
    %v1825 = vand.u32 %v1813, 2147483648
    %v1826 = vor.u32 1.1754944e-38, %v1825
    %v1827 = vsel %vm1824, %v1826, %v1822
    %v1828 = vmul.f32 1.0, %v1827
    %v1829 = vtanh.pop %v1788
    %v1830 = vmul.f32 %v1828, %v1809
    %1832 = vrot.lane.b32.xlu0 %v1829, 64
    %v1833 = vpop.permute.xlu0 %1832
    %v1835 = vmul.f32 %v1828, %v1833
    %1837 = vrot.lane.b32.xlu0 %v1835, 96
    %v1838 = vpop.permute.xlu0 %1837
    %v1840 = vadd.f32 %v1830, %v1838
    %v1841 = vtanh.pop %v1840
    %1843 = vrot.lane.b32.xlu0 %v1841, 64
    %v1844 = vpop.permute.xlu0 %1843
    %v1846 = vmul.f32 %v1828, %v1844
    %1848 = vrot.lane.b32.xlu0 %v1846, 64
    %v1849 = vpop.permute.xlu0 %1848
    %1851 = vst.msk [vmem:[#allocation5 + $0x28] sm:$0xff] %vm120, %v1849
    %v1852 = vld [vmem:[#allocation4 + $0x60] sm:$0xff]
    %v1853 = vld [vmem:[#allocation4 + $0x68] sm:$0xff]
    %1855 = vrot.lane.b32.xlu0 %v1840, 32
    %v1856 = vpop.permute.xlu0 %1855
    %v1858 = vsel %vm120, %v1849, %v1856
    %v1860 = vsel %vm148, %v1858, 0
    %1862 = vmatpush.msra.mxu0 0.0
    %1863 = vmatpush.msra.mxu0 0.0
    %1864 = vmatpush.msra.mxu0 0.0
    %1865 = vmatpush.msra.mxu0 0.0
    %1866 = vmatpush.msra.mxu0 0.0
    %1867 = vmatpush.msra.mxu0 0.0
    %1868 = vmatpush.msra.mxu0 0.0
    %1869 = vmatpush.msra.mxu0 0.0
    %1870 = vmatpush.msra.mxu0 %v1171
    %1871 = vmatpush.msra.mxu0 %v1169
    %1872 = vmatpush.msra.mxu0 %v1167
    %1873 = vmatpush.msra.mxu0 %v1165
    %1874 = vmatpush.msra.mxu0 %v1163
    %1875 = vmatpush.msra.mxu0 %v1161
    %1876 = vmatpush.msra.mxu0 %v1159
    %1877 = vmatpush.msra.mxu0 %v1157
    %1878 = vmatmul.f32.gmra.mxu0 %v1860
    %v1879 = vpop.f32.mrf.mxu0
    %v1880 = vadd.f32 0.0, %v1879
    %1881 = vdwg.mxu0
    %1882 = vmatpush.msra.mxu0 0.0
    %1883 = vmatpush.msra.mxu0 0.0
    %1884 = vmatpush.msra.mxu0 0.0
    %1885 = vmatpush.msra.mxu0 0.0
    %1886 = vmatpush.msra.mxu0 0.0
    %1887 = vmatpush.msra.mxu0 0.0
    %1888 = vmatpush.msra.mxu0 0.0
    %1889 = vmatpush.msra.mxu0 0.0
    %1890 = vmatpush.msra.mxu0 %v1172
    %1891 = vmatpush.msra.mxu0 %v1170
    %1892 = vmatpush.msra.mxu0 %v1168
    %1893 = vmatpush.msra.mxu0 %v1166
    %1894 = vmatpush.msra.mxu0 %v1164
    %1895 = vmatpush.msra.mxu0 %v1162
    %1896 = vmatpush.msra.mxu0 %v1160
    %1897 = vmatpush.msra.mxu0 %v1158
    %1898 = vmatmul.f32.gmra.mxu0 %v1860
    %v1899 = vpop.f32.mrf.mxu0
    %v1900 = vadd.f32 0.0, %v1899
    %1901 = vdwg.mxu0
    %v1902 = vadd.f32 %v1852, %v1880
    %v1903 = vadd.f32 %v1853, %v1900
    %v1904 = vxor.u32 %v1903, 2147483648
    %v1905 = vmul.f32 %v1904, 1.442695
    %v1906 = vpow.pop %v1905
    %v1907 = vadd.f32 %v1906, 1.0
    %v1908 = vrcp.pop %v1907
    %v1909 = vmul.f32 %v1907, %v1908
    %v1910 = vsub.f32 1.0, %v1909
    %v1911 = vmul.f32 %v1908, %v1910
    %v1912 = vadd.f32 %v1908, %v1911
    %vm1913 = vweird.f32 %v1907
    %vm1914 = vweird.f32 %v1908
    %vm1915 = vmor %vm1913, %vm1914
    %v1916 = vsel %vm1915, %v1908, %v1912
    %v1917 = vand.u32 2147483647, %v1907
    %vm1918 = vcmp.eq.f32.partialorder %v1917, 8.507059e+37
    %v1919 = vand.u32 %v1907, 2147483648
    %v1920 = vor.u32 1.1754944e-38, %v1919
    %v1921 = vsel %vm1918, %v1920, %v1916
    %v1922 = vmul.f32 1.0, %v1921
    %v1923 = vsub.f32 %v1840, %v1922
    %v1924 = vxor.u32 %v1902, 2147483648
    %v1925 = vmul.f32 %v1924, 1.442695
    %v1926 = vpow.pop %v1925
    %v1927 = vadd.f32 %v1926, 1.0
    %v1928 = vrcp.pop %v1927
    %v1929 = vmul.f32 %v1927, %v1928
    %v1930 = vsub.f32 1.0, %v1929
    %v1931 = vmul.f32 %v1928, %v1930
    %v1932 = vadd.f32 %v1928, %v1931
    %vm1933 = vweird.f32 %v1927
    %vm1934 = vweird.f32 %v1928
    %vm1935 = vmor %vm1933, %vm1934
    %v1936 = vsel %vm1935, %v1928, %v1932
    %v1937 = vand.u32 2147483647, %v1927
    %vm1938 = vcmp.eq.f32.partialorder %v1937, 8.507059e+37
    %v1939 = vand.u32 %v1927, 2147483648
    %v1940 = vor.u32 1.1754944e-38, %v1939
    %v1941 = vsel %vm1938, %v1940, %v1936
    %v1942 = vmul.f32 1.0, %v1941
    %v1943 = vtanh.pop %v1902
    %v1944 = vmul.f32 %v1942, %v1923
    %1946 = vrot.lane.b32.xlu0 %v1943, 64
    %v1947 = vpop.permute.xlu0 %1946
    %v1949 = vmul.f32 %v1942, %v1947
    %1951 = vrot.lane.b32.xlu0 %v1949, 96
    %v1952 = vpop.permute.xlu0 %1951
    %v1954 = vadd.f32 %v1944, %v1952
    %v1955 = vtanh.pop %v1954
    %1957 = vrot.lane.b32.xlu0 %v1955, 64
    %v1958 = vpop.permute.xlu0 %1957
    %v1960 = vmul.f32 %v1942, %v1958
    %1962 = vrot.lane.b32.xlu0 %v1960, 64
    %v1963 = vpop.permute.xlu0 %1962
    %1965 = vst.msk [vmem:[#allocation5 + $0x30] sm:$0xff] %vm120, %v1963
    %v1966 = vld [vmem:[#allocation4 + $0x70] sm:$0xff]
    %v1967 = vld [vmem:[#allocation4 + $0x78] sm:$0xff]
    %1969 = vrot.lane.b32.xlu0 %v1954, 32
    %v1970 = vpop.permute.xlu0 %1969
    %v1972 = vsel %vm120, %v1963, %v1970
    %v1974 = vsel %vm148, %v1972, 0
    %1976 = vmatpush.msra.mxu0 0.0
    %1977 = vmatpush.msra.mxu0 0.0
    %1978 = vmatpush.msra.mxu0 0.0
    %1979 = vmatpush.msra.mxu0 0.0
    %1980 = vmatpush.msra.mxu0 0.0
    %1981 = vmatpush.msra.mxu0 0.0
    %1982 = vmatpush.msra.mxu0 0.0
    %1983 = vmatpush.msra.mxu0 0.0
    %1984 = vmatpush.msra.mxu0 %v1171
    %1985 = vmatpush.msra.mxu0 %v1169
    %1986 = vmatpush.msra.mxu0 %v1167
    %1987 = vmatpush.msra.mxu0 %v1165
    %1988 = vmatpush.msra.mxu0 %v1163
    %1989 = vmatpush.msra.mxu0 %v1161
    %1990 = vmatpush.msra.mxu0 %v1159
    %1991 = vmatpush.msra.mxu0 %v1157
    %1992 = vmatmul.f32.gmra.mxu0 %v1974
    %v1993 = vpop.f32.mrf.mxu0
    %v1994 = vadd.f32 0.0, %v1993
    %1995 = vdwg.mxu0
    %1996 = vmatpush.msra.mxu0 0.0
    %1997 = vmatpush.msra.mxu0 0.0
    %1998 = vmatpush.msra.mxu0 0.0
    %1999 = vmatpush.msra.mxu0 0.0
    %2000 = vmatpush.msra.mxu0 0.0
    %2001 = vmatpush.msra.mxu0 0.0
    %2002 = vmatpush.msra.mxu0 0.0
    %2003 = vmatpush.msra.mxu0 0.0
    %2004 = vmatpush.msra.mxu0 %v1172
    %2005 = vmatpush.msra.mxu0 %v1170
    %2006 = vmatpush.msra.mxu0 %v1168
    %2007 = vmatpush.msra.mxu0 %v1166
    %2008 = vmatpush.msra.mxu0 %v1164
    %2009 = vmatpush.msra.mxu0 %v1162
    %2010 = vmatpush.msra.mxu0 %v1160
    %2011 = vmatpush.msra.mxu0 %v1158
    %2012 = vmatmul.f32.gmra.mxu0 %v1974
    %v2013 = vpop.f32.mrf.mxu0
    %v2014 = vadd.f32 0.0, %v2013
    %2015 = vdwg.mxu0
    %v2016 = vadd.f32 %v1966, %v1994
    %v2017 = vadd.f32 %v1967, %v2014
    %v2018 = vxor.u32 %v2017, 2147483648
    %v2019 = vmul.f32 %v2018, 1.442695
    %v2020 = vpow.pop %v2019
    %v2021 = vadd.f32 %v2020, 1.0
    %v2022 = vrcp.pop %v2021
    %v2023 = vmul.f32 %v2021, %v2022
    %v2024 = vsub.f32 1.0, %v2023
    %v2025 = vmul.f32 %v2022, %v2024
    %v2026 = vadd.f32 %v2022, %v2025
    %vm2027 = vweird.f32 %v2021
    %vm2028 = vweird.f32 %v2022
    %vm2029 = vmor %vm2027, %vm2028
    %v2030 = vsel %vm2029, %v2022, %v2026
    %v2031 = vand.u32 2147483647, %v2021
    %vm2032 = vcmp.eq.f32.partialorder %v2031, 8.507059e+37
    %v2033 = vand.u32 %v2021, 2147483648
    %v2034 = vor.u32 1.1754944e-38, %v2033
    %v2035 = vsel %vm2032, %v2034, %v2030
    %v2036 = vmul.f32 1.0, %v2035
    %v2037 = vsub.f32 %v1954, %v2036
    %v2038 = vxor.u32 %v2016, 2147483648
    %v2039 = vmul.f32 %v2038, 1.442695
    %v2040 = vpow.pop %v2039
    %v2041 = vadd.f32 %v2040, 1.0
    %v2042 = vrcp.pop %v2041
    %v2043 = vmul.f32 %v2041, %v2042
    %v2044 = vsub.f32 1.0, %v2043
    %v2045 = vmul.f32 %v2042, %v2044
    %v2046 = vadd.f32 %v2042, %v2045
    %vm2047 = vweird.f32 %v2041
    %vm2048 = vweird.f32 %v2042
    %vm2049 = vmor %vm2047, %vm2048
    %v2050 = vsel %vm2049, %v2042, %v2046
    %v2051 = vand.u32 2147483647, %v2041
    %vm2052 = vcmp.eq.f32.partialorder %v2051, 8.507059e+37
    %v2053 = vand.u32 %v2041, 2147483648
    %v2054 = vor.u32 1.1754944e-38, %v2053
    %v2055 = vsel %vm2052, %v2054, %v2050
    %v2056 = vmul.f32 1.0, %v2055
    %v2057 = vtanh.pop %v2016
    %v2058 = vmul.f32 %v2056, %v2037
    %2060 = vrot.lane.b32.xlu0 %v2057, 64
    %v2061 = vpop.permute.xlu0 %2060
    %v2063 = vmul.f32 %v2056, %v2061
    %2065 = vrot.lane.b32.xlu0 %v2063, 96
    %v2066 = vpop.permute.xlu0 %2065
    %v2068 = vadd.f32 %v2058, %v2066
    %v2069 = vtanh.pop %v2068
    %2071 = vrot.lane.b32.xlu0 %v2069, 64
    %v2072 = vpop.permute.xlu0 %2071
    %v2074 = vmul.f32 %v2056, %v2072
    %2076 = vrot.lane.b32.xlu0 %v2074, 64
    %v2077 = vpop.permute.xlu0 %2076
    %2079 = vst.msk [vmem:[#allocation5 + $0x38] sm:$0xff] %vm120, %v2077
    %v2080 = vld [vmem:[#allocation6 + $0x190] sm:$0xff]
    %v2081 = vld [vmem:[#allocation6 + $0x1a0] sm:$0xff]
    %v2082 = vld [vmem:[#allocation6 + $0x1b0] sm:$0xff]
    %v2083 = vld [vmem:[#allocation6 + $0x1c0] sm:$0xff]
    %v2084 = vld [vmem:[#allocation6 + $0x1d0] ss:$0 sm:$0xff]
    %v2085 = vld [vmem:[#allocation5] sm:$0xff]
    %v2086 = vld [vmem:[#allocation5 + $0x8] sm:$0xff]
    %v2087 = vld [vmem:[#allocation5 + $0x10] sm:$0xff]
    %v2088 = vld [vmem:[#allocation5 + $0x18] sm:$0xff]
    %v2089 = vld [vmem:[#allocation5 + $0x20] sm:$0xff]
    %v2090 = vld [vmem:[#allocation5 + $0x28] sm:$0xff]
    %v2091 = vld [vmem:[#allocation5 + $0x30] sm:$0xff]
    %v2092 = vld [vmem:[#allocation5 + $0x38] sm:$0xff]
    %v2094 = vsel %vm120, %v2085, 0
    %v2097 = vsel %vm120, %v2086, 0
    %v2100 = vsel %vm120, %v2087, 0
    %v2103 = vsel %vm120, %v2088, 0
    %v2106 = vsel %vm120, %v2089, 0
    %v2109 = vsel %vm120, %v2090, 0
    %v2112 = vsel %vm120, %v2091, 0
    %v2115 = vsel %vm120, %v2092, 0
    %2117 = vmatpush.msra.mxu0 0.0
    %2118 = vmatpush.msra.mxu0 0.0
    %2119 = vmatpush.msra.mxu0 0.0
    %2120 = vmatpush.msra.mxu0 0.0
    %2121 = vmatpush.msra.mxu0 0.0
    %2122 = vmatpush.msra.mxu0 0.0
    %2123 = vmatpush.msra.mxu0 0.0
    %2124 = vmatpush.msra.mxu0 0.0
    %2125 = vmatpush.msra.mxu0 0.0
    %2126 = vmatpush.msra.mxu0 0.0
    %2127 = vmatpush.msra.mxu0 0.0
    %2128 = vmatpush.msra.mxu0 0.0
    %2129 = vmatpush.msra.mxu0 %v2083
    %2130 = vmatpush.msra.mxu0 %v2082
    %2131 = vmatpush.msra.mxu0 %v2081
    %2132 = vmatpush.msra.mxu0 %v2080
    %2133 = vmatmul.f32.gmra.mxu0 %v2094
    %v2134 = vpop.f32.mrf.mxu0
    %v2135 = vadd.f32 %v2084, %v2134
    %2136 = vmatmul.f32.gmra.mxu0 %v2097
    %v2137 = vpop.f32.mrf.mxu0
    %v2138 = vadd.f32 %v2084, %v2137
    %2139 = vmatmul.f32.gmra.mxu0 %v2100
    %v2140 = vpop.f32.mrf.mxu0
    %v2141 = vadd.f32 %v2084, %v2140
    %2142 = vmatmul.f32.gmra.mxu0 %v2103
    %v2143 = vpop.f32.mrf.mxu0
    %v2144 = vadd.f32 %v2084, %v2143
    %2145 = vmatmul.f32.gmra.mxu0 %v2106
    %v2146 = vpop.f32.mrf.mxu0
    %v2147 = vadd.f32 %v2084, %v2146
    %2148 = vmatmul.f32.gmra.mxu0 %v2109
    %v2149 = vpop.f32.mrf.mxu0
    %v2150 = vadd.f32 %v2084, %v2149
    %2151 = vmatmul.f32.gmra.mxu0 %v2112
    %v2152 = vpop.f32.mrf.mxu0
    %v2153 = vadd.f32 %v2084, %v2152
    %2154 = vmatmul.f32.gmra.mxu0 %v2115
    %v2155 = vpop.f32.mrf.mxu0
    %v2156 = vadd.f32 %v2084, %v2155
    %2157 = vdwg.mxu0
    %2158 = vst [vmem:[#allocation9] sm:$0xff] %v2135
    %2159 = vst [vmem:[#allocation9 + $0x8] sm:$0xff] %v2138
    %2160 = vst [vmem:[#allocation9 + $0x10] sm:$0xff] %v2141
    %2161 = vst [vmem:[#allocation9 + $0x18] sm:$0xff] %v2144
    %2162 = vst [vmem:[#allocation9 + $0x20] sm:$0xff] %v2147
    %2163 = vst [vmem:[#allocation9 + $0x28] sm:$0xff] %v2150
    %2164 = vst [vmem:[#allocation9 + $0x30] sm:$0xff] %v2153
    %2165 = vst [vmem:[#allocation9 + $0x38] sm:$0xff] %v2156
    // Predicated region
    $region18: #{tpu_custom_call.1} parent=1 // pred_check
      _
    $region19: #{tpu_custom_call.1} parent=1 // pred_check_branch
      %2167 = sbr.rel (0) target = $region21
    $region20: #{tpu_custom_call.1} parent=1 // pred_region
      %2169 = vsyncadd [#allocation8], 0
      %s2170 = sshll.u32 [#allocation9], 4
      %s2171 = int_to_ptr.vmem [resolvable:$true] %s2170
      %s2172 = sshll.u32 %s3, 4
      %s2173 = int_to_ptr.hbm [resolvable:$true] %s2172
      %2178 = dma.vmem_to_hbm [thread:$0]  %s2171, 1024, %s2173, [#allocation8], 128, 128, 8
    $region21: #{tpu_custom_call.1} parent=1 // pred_fallthru
      _
    // Predicated region
    $region22: #{tpu_custom_call.1} parent=1 // pred_check
      _
    $region23: #{tpu_custom_call.1} parent=1 // pred_check_branch
      %2180 = sbr.rel (0) target = $region25
    $region24: #{tpu_custom_call.1} parent=1 // pred_region
      %2182 = dma.done [#allocation8], 1024
    $region25: #{tpu_custom_call.1} parent=1 // pred_fallthru
      _
    %2183 = vsyncpa [#allocation7], 1
    %2184 = vsyncpa [#allocation8], 1

</llo_original>
